<compile_context>
chip_gen: v6e
topology: v6e:2x2x1
jax: 0.10.0
libtpu: 0.0.40
codegen_flags: <defaults>
</compile_context>

<pallas_src>
import functools
from math import floor

import numpy as np
import jax
import jax.numpy as jnp
from jax.experimental import pallas as pl
from jax.experimental.pallas import tpu as pltpu


NEG_SLOPE = 0.1

MODEL_DICT = [
    {'mult': 1, 'kernel': 3, 'stride': 1, 'padding': 1},
    {'mult': 1, 'kernel': 4, 'stride': 2, 'padding': 1},
    {'mult': 2, 'kernel': 3, 'stride': 1, 'padding': 1},
    {'mult': 2, 'kernel': 3, 'stride': 1, 'padding': 1},
    {'mult': 2, 'kernel': 4, 'stride': 2, 'padding': 1},
    {'mult': 4, 'kernel': 3, 'stride': 1, 'padding': 1},
    {'mult': 4, 'kernel': 4, 'stride': 2, 'padding': 1},
    {'mult': 8, 'kernel': 3, 'stride': 1, 'padding': 1},
]


# ----------------------------------------------------------------------------
# The fused kernel: all 8 conv layers + final linear, one image per grid step.
# ----------------------------------------------------------------------------
def _fused_convnet_kernel(*refs, meta, n_layers, ncls_pad, neg_slope):
    """refs = (x, w_0..w_{L-1}, b_0..b_{L-1}, wlin, blin, o_ref, s_0..s_{L-2}).

    x:      (Hp0, Wp0*Cin0)        bf16  padded input slab of this image
    w_l:    (kh_l, K_l, N_l)       bf16  per-row width-folded conv weights
    b_l:    (1, N_l)               f32   width-tiled bias (zero on pad cols)
    wlin:   (H7, W7*Cout7, NCLSP)  bf16  linear weight, flatten order folded in
    blin:   (1, NCLSP)             f32
    o_ref:  (1, NCLSP)             f32   logits (lane-dense store)
    s_l:    (Hp_{l+1}, K_{l+1})    bf16  VMEM scratch = input slab of layer l+1
    """
    L = n_layers
    x_ref = refs[0]
    w_refs = refs[1:1 + L]
    b_refs = refs[1 + L:1 + 2 * L]
    wlin_ref = refs[1 + 2 * L]
    blin_ref = refs[2 + 2 * L]
    o_ref = refs[3 + 2 * L]
    scratch = refs[4 + 2 * L:]

    # Zero the scratch slabs (their untouched borders are the conv zero-padding).
    # Done every grid step: with megacore each core owns its scratch instance.
    for s_ref in scratch:
        s_ref[...] = jnp.zeros(s_ref.shape, s_ref.dtype)

    cur = x_ref            # input slab ref of the current layer
    y_last = None          # final conv layer output value (Ho7, W7*Cout7)
    for l in range(L):
        m = meta[l]
        kh, s, Ho, p_next, N = m['kh'], m['s'], m['Ho'], m['p_next'], m['N']
        # For stride s we matmul a contiguous row window of s*(Ho-1)+1 rows and
        # compact afterwards (no strided/unaligned reads anywhere).
        nrows = s * (Ho - 1) + 1

        acc = None
        for di in range(kh):
            rows = cur[pl.ds(di, nrows), :]                  # full lane extent
            part = jnp.dot(rows, w_refs[l][di],
                           preferred_element_type=jnp.float32)
            acc = part if acc is None else acc + part        # f32 accumulation

        # Epilogue (f32): bias (column-wise, valid on all rows) + LeakyReLU.
        y = acc + b_refs[l][...]
        y = jnp.where(y >= 0.0, y, neg_slope * y)
        y = y.astype(jnp.bfloat16)

        if s != 1:
            # Exact row compaction: 0/1 selection matmul picks rows 0, s, 2s,...
            ri = jax.lax.broadcasted_iota(jnp.int32, (Ho, nrows), 0)
            ci = jax.lax.broadcasted_iota(jnp.int32, (Ho, nrows), 1)
            sel = (ci == s * ri).astype(jnp.bfloat16)
            y = jnp.dot(sel, y,
                        preferred_element_type=jnp.float32).astype(jnp.bfloat16)

        if l + 1 < L:
            # Store into the interior rows of the next layer's padded slab.
            # Full lane extent (width padding is already baked into N).
            scratch[l][pl.ds(p_next, Ho), :] = y
            cur = scratch[l]
        else:
            y_last = y                                        # (Ho7, W7*Cout7)

    # Fused SNLinear epilogue: logits = flatten(y_last) @ Wlin + b, done as one
    # small matmul per output row of the last feature map (no in-kernel reshape).
    H7 = y_last.shape[0]
    logits = None
    for r in range(H7):
        part = jnp.dot(y_last[r:r + 1, :], wlin_ref[r],
                       preferred_element_type=jnp.float32)
        logits = part if logits is None else logits + part
    o_ref[...] = logits + blin_ref[...]


# ----------------------------------------------------------------------------
# Spectral norm (one power iteration, as torch.nn.utils.spectral_norm)
# ----------------------------------------------------------------------------
def spectral_normalize(w, u, eps=1e-12):
    w_mat = w.reshape(w.shape[0], -1)
    v = w_mat.T @ u
    v = v / (jnp.linalg.norm(v) + eps)
    u_new = w_mat @ v
    u_new = u_new / (jnp.linalg.norm(u_new) + eps)
    sigma = u_new @ (w_mat @ v)
    return w / sigma


# ----------------------------------------------------------------------------
# Parameter init (spec-faithful, f32, OIHW)
# ----------------------------------------------------------------------------
def init_params(key, nc, ndf, data_size, num_classes, num_hidden_layers=8):
    keys = jax.random.split(key, 4 * num_hidden_layers + 4)
    ki = 0
    conv_params = []
    in_size = nc
    H = data_size
    out_size = 0
    for i in range(num_hidden_layers):
        cfg = MODEL_DICT[i]
        out_size = ndf * cfg['mult']
        k, s, p = cfg['kernel'], cfg['stride'], cfg['padding']
        w = 0.05 * jax.random.normal(keys[ki], (out_size, in_size, k, k),
                                     jnp.float32); ki += 1
        b = 0.01 * jax.random.normal(keys[ki], (out_size,), jnp.float32); ki += 1
        u = jax.random.normal(keys[ki], (out_size,), jnp.float32); ki += 1
        u = u / (jnp.linalg.norm(u) + 1e-12)
        w = spectral_normalize(w, u)                 # SNConv2d weight rescale
        conv_params.append((w, b, s, p))
        in_size = out_size
        H = floor((H + 2 * p - (k - 1) - 1) / s + 1)

    lin_in = out_size * H * H
    wl = 0.05 * jax.random.normal(keys[ki], (num_classes, lin_in),
                                  jnp.float32); ki += 1
    bl = 0.01 * jax.random.normal(keys[ki], (num_classes,), jnp.float32); ki += 1
    ul = jax.random.normal(keys[ki], (num_classes,), jnp.float32); ki += 1
    ul = ul / (jnp.linalg.norm(ul) + 1e-12)
    wl = spectral_normalize(wl, ul)                  # SNLinear weight rescale
    return conv_params, (wl, bl)


# ----------------------------------------------------------------------------
# Kernel-ready parameter prep (numpy, runs once)
# ----------------------------------------------------------------------------
def prepare_kernel_params(conv_params, lin_params, data_size, nc):
    """Builds per-row width-folded conv weights, width-tiled biases and the
    flatten-order-folded linear weight; returns (static meta, device arrays)."""
    n_layers = len(conv_params)
    meta, w_rows, b_pads = [], [], []
    H, C = data_size, nc
    for i, (w, b, s, p) in enumerate(conv_params):
        w = np.asarray(jax.device_get(w), np.float32)
        b = np.asarray(jax.device_get(b), np.float32)
        Cout, Cin, kh, kw = w.shape
        assert Cin == C
        Ho = (H + 2 * p - kh) // s + 1
        Wo = (H + 2 * p - kw) // s + 1
        assert Ho == Wo
        Hp_in = H + 2 * p
        Wp_in = H + 2 * p
        p_next = conv_params[i + 1][3] if i + 1 < n_layers else 0
        Wp_next = Wo + 2 * p_next
        K, N = Wp_in * Cin, Wp_next * Cout

        # W_row[di]: padded-width input slab -> padded-width output slab,
        # summed over the kw column taps (disjoint supports, no collisions).
        wr = np.zeros((kh, K, N), np.float32)
        for di in range(kh):
            for dj in range(kw):
                wt = w[:, :, di, dj].T                       # (Cin, Cout)
                for ox in range(Wo):
                    r0 = (ox * s + dj) * Cin
                    c0 = (p_next + ox) * Cout
                    wr[di, r0:r0 + Cin, c0:c0 + Cout] += wt
        bp = np.zeros((1, N), np.float32)
        for ox in range(Wo):
            c0 = (p_next + ox) * Cout
            bp[0, c0:c0 + Cout] = b

        w_rows.append(jnp.asarray(wr, jnp.bfloat16))
        b_pads.append(jnp.asarray(bp, jnp.float32))
        meta.append(dict(kh=kh, kw=kw, s=s, p=p, Ho=Ho, p_next=p_next,
                         N=N, K=K, Hp_in=Hp_in, Cin=Cin, Cout=Cout,
                         true_flops=2 * Ho * Wo * Cin * Cout * kh * kw))
        H, C = Ho, Cout

    # Final linear: fold PyTorch (C,H,W) flatten order + the last conv's slab
    # layout (row=oy, col=ox*Cout+co) into a (H7, W7*Cout7, NCLS_PAD) weight.
    wl, bl = lin_params
    wl = np.asarray(jax.device_get(wl), np.float32)
    bl = np.asarray(jax.device_get(bl), np.float32)
    ncls = wl.shape[0]
    ncls_pad = ((ncls + 127) // 128) * 128               # lane-dense HBM store
    H7, Cout7 = H, C
    wlin = np.zeros((H7, H7 * Cout7, ncls_pad), np.float32)
    for oy in range(H7):
        for ox in range(H7):
            for co in range(Cout7):
                flat = co * H7 * H7 + oy * H7 + ox
                wlin[oy, ox * Cout7 + co, :ncls] = wl[:, flat]
    blin = np.zeros((1, ncls_pad), np.float32)
    blin[0, :ncls] = bl

    arrays = (tuple(w_rows), tuple(b_pads),
              jnp.asarray(wlin, jnp.bfloat16), jnp.asarray(blin, jnp.float32))
    return tuple(meta), arrays


# ----------------------------------------------------------------------------
# Forward (single fused pallas_call)
# ----------------------------------------------------------------------------
def build_forward(meta, arrays, num_classes):
    w_rows, b_pads, wlin, blin = arrays
    n_layers = len(meta)
    ncls_pad = wlin.shape[-1]
    kernel = functools.partial(_fused_convnet_kernel, meta=meta,
                               n_layers=n_layers, ncls_pad=ncls_pad,
                               neg_slope=NEG_SLOPE)

    lin_in = meta[-1]['Ho'] * meta[-1]['Ho'] * meta[-1]['Cout']
    flops_per_img = sum(m['true_flops'] for m in meta) + 2 * lin_in * num_classes

    def forward(x_nchw):
        B = x_nchw.shape[0]
        # Only XLA glue in the whole forward: layout + one pad of the input.
        x = jnp.transpose(x_nchw, (0, 2, 3, 1)).astype(jnp.bfloat16)   # NHWC
        p0 = meta[0]['p']
        xp = jnp.pad(x, ((0, 0), (p0, p0), (p0, p0), (0, 0)))
        _, Hp, Wp, C = xp.shape
        xp = xp.reshape(B, Hp, Wp * C)

        ins = [xp]
        in_specs = [pl.BlockSpec((None, Hp, Wp * C), lambda b: (b, 0, 0))]
        for w in w_rows:
            ins.append(w)
            in_specs.append(pl.BlockSpec(w.shape, lambda b: (0, 0, 0)))
        for bp in b_pads:
            ins.append(bp)
            in_specs.append(pl.BlockSpec(bp.shape, lambda b: (0, 0)))
        ins.append(wlin)
        in_specs.append(pl.BlockSpec(wlin.shape, lambda b: (0, 0, 0)))
        ins.append(blin)
        in_specs.append(pl.BlockSpec(blin.shape, lambda b: (0, 0)))

        scratch_shapes = [pltpu.VMEM((m['Hp_in'], m['K']), jnp.bfloat16)
                          for m in meta[1:]]

        bytes_accessed = int(sum(a.size * a.dtype.itemsize for a in ins)
                             + B * ncls_pad * 4)

        out = pl.pallas_call(
            kernel,
            out_shape=jax.ShapeDtypeStruct((B, 1, ncls_pad), jnp.float32),
            grid=(B,),
            in_specs=in_specs,
            out_specs=pl.BlockSpec((None, 1, ncls_pad), lambda b: (b, 0, 0)),
            scratch_shapes=scratch_shapes,
            compiler_params=pltpu.CompilerParams(
                dimension_semantics=("parallel",),      # both TCs busy on v7x
                vmem_limit_bytes=32 * 1024 * 1024),     # safe on 64 MiB v7x too
            cost_estimate=pl.CostEstimate(flops=B * flops_per_img,
                                          transcendentals=0,
                                          bytes_accessed=bytes_accessed),
        )(*ins)
        return out[:, 0, :num_classes]

    return forward


# ----------------------------------------------------------------------------
# Plain-JAX reference with matched quantization points (bf16 ops, f32 accum)
# ----------------------------------------------------------------------------
def convnet_reference(x_nchw, conv_params, lin_params):
    x = jnp.transpose(x_nchw, (0, 2, 3, 1)).astype(jnp.bfloat16)
    for (w, b, s, p) in conv_params:
        w_hwio = jnp.transpose(w, (2, 3, 1, 0)).astype(jnp.bfloat16)
        y = jax.lax.conv_general_dilated(
            x, w_hwio, window_strides=(s, s), padding=[(p, p), (p, p)],
            dimension_numbers=('NHWC', 'HWIO', 'NHWC'),
            preferred_element_type=jnp.float32)
        y = y + b
        y = jnp.where(y >= 0, y, 0.1 * y)
        x = y.astype(jnp.bfloat16)
    B = x.shape[0]
    x_flat = jnp.transpose(x, (0, 3, 1, 2)).reshape(B, -1)   # PyTorch flatten
    wl, bl = lin_params
    return jnp.dot(x_flat.astype(jnp.bfloat16), wl.T.astype(jnp.bfloat16),
                   preferred_element_type=jnp.float32) + bl


if __name__ == "__main__":
    key = jax.random.PRNGKey(0)
    k_params, k_input = jax.random.split(key)

    # Small config consistent with the module: nc=4, ndf=8, data_size=16,
    # num_classes=10, num_hidden_layers=8 -> final feature map (64, 2, 2).
    nc, ndf, data_size, num_classes = 4, 8, 16, 10
    B = 2

    conv_params, lin_params = init_params(k_params, nc, ndf, data_size,
                                          num_classes)
    meta, arrays = prepare_kernel_params(conv_params, lin_params, data_size, nc)
    forward = jax.jit(build_forward(meta, arrays, num_classes))

    x = jax.random.normal(k_input, (B, nc, data_size, data_size), jnp.float32)

    out = jax.block_until_ready(forward(x))
    assert out.shape == (B, num_classes), out.shape

    ref = jax.block_until_ready(convnet_reference(x, conv_params, lin_params))
    max_err = float(jnp.max(jnp.abs(out - ref)))
    assert jnp.allclose(out, ref, rtol=2e-2, atol=2e-2), ("mismatch", max_err)

    print("KERNEL_OK")
</pallas_src>

<mosaic_0001>
module attributes {stable_mosaic.version = 11 : i64} {
  func.func @_fused_convnet_kernel(%arg0: i32, %arg1: memref<1x18x72xbf16, #tpu.memory_space<vmem>>, %arg2: memref<3x72x144xbf16, #tpu.memory_space<vmem>>, %arg3: memref<4x144x80xbf16, #tpu.memory_space<vmem>>, %arg4: memref<3x80x160xbf16, #tpu.memory_space<vmem>>, %arg5: memref<3x160x160xbf16, #tpu.memory_space<vmem>>, %arg6: memref<4x160x96xbf16, #tpu.memory_space<vmem>>, %arg7: memref<3x96x192xbf16, #tpu.memory_space<vmem>>, %arg8: memref<4x192x128xbf16, #tpu.memory_space<vmem>>, %arg9: memref<3x128x128xbf16, #tpu.memory_space<vmem>>, %arg10: memref<1x144xf32, #tpu.memory_space<vmem>>, %arg11: memref<1x80xf32, #tpu.memory_space<vmem>>, %arg12: memref<1x160xf32, #tpu.memory_space<vmem>>, %arg13: memref<1x160xf32, #tpu.memory_space<vmem>>, %arg14: memref<1x96xf32, #tpu.memory_space<vmem>>, %arg15: memref<1x192xf32, #tpu.memory_space<vmem>>, %arg16: memref<1x128xf32, #tpu.memory_space<vmem>>, %arg17: memref<1x128xf32, #tpu.memory_space<vmem>>, %arg18: memref<2x128x128xbf16, #tpu.memory_space<vmem>>, %arg19: memref<1x128xf32, #tpu.memory_space<vmem>>, %arg20: memref<1x1x128xf32, #tpu.memory_space<vmem>>, %arg21: memref<18x144xbf16, #tpu.memory_space<vmem>>, %arg22: memref<10x80xbf16, #tpu.memory_space<vmem>>, %arg23: memref<10x160xbf16, #tpu.memory_space<vmem>>, %arg24: memref<10x160xbf16, #tpu.memory_space<vmem>>, %arg25: memref<6x96xbf16, #tpu.memory_space<vmem>>, %arg26: memref<6x192xbf16, #tpu.memory_space<vmem>>, %arg27: memref<4x128xbf16, #tpu.memory_space<vmem>>) attributes {dimension_semantics = [#tpu.dimension_semantics<parallel>], iteration_bounds = array<i64: 2>, scalar_prefetch = 0 : i64, scratch_operands = 7 : i64, tpu.core_type = #tpu.core_type<tc>, window_params = [{transform_indices = @transform_0, window_bounds = array<i64: 1, 18, 72>}, {pipeline_mode = #tpu.pipeline_mode<synchronous>, transform_indices = @transform_1, window_bounds = array<i64: 3, 72, 144>}, {pipeline_mode = #tpu.pipeline_mode<synchronous>, transform_indices = @transform_2, window_bounds = array<i64: 4, 144, 80>}, {pipeline_mode = #tpu.pipeline_mode<synchronous>, transform_indices = @transform_3, window_bounds = array<i64: 3, 80, 160>}, {pipeline_mode = #tpu.pipeline_mode<synchronous>, transform_indices = @transform_4, window_bounds = array<i64: 3, 160, 160>}, {pipeline_mode = #tpu.pipeline_mode<synchronous>, transform_indices = @transform_5, window_bounds = array<i64: 4, 160, 96>}, {pipeline_mode = #tpu.pipeline_mode<synchronous>, transform_indices = @transform_6, window_bounds = array<i64: 3, 96, 192>}, {pipeline_mode = #tpu.pipeline_mode<synchronous>, transform_indices = @transform_7, window_bounds = array<i64: 4, 192, 128>}, {pipeline_mode = #tpu.pipeline_mode<synchronous>, transform_indices = @transform_8, window_bounds = array<i64: 3, 128, 128>}, {pipeline_mode = #tpu.pipeline_mode<synchronous>, transform_indices = @transform_9, window_bounds = array<i64: 1, 144>}, {pipeline_mode = #tpu.pipeline_mode<synchronous>, transform_indices = @transform_10, window_bounds = array<i64: 1, 80>}, {pipeline_mode = #tpu.pipeline_mode<synchronous>, transform_indices = @transform_11, window_bounds = array<i64: 1, 160>}, {pipeline_mode = #tpu.pipeline_mode<synchronous>, transform_indices = @transform_12, window_bounds = array<i64: 1, 160>}, {pipeline_mode = #tpu.pipeline_mode<synchronous>, transform_indices = @transform_13, window_bounds = array<i64: 1, 96>}, {pipeline_mode = #tpu.pipeline_mode<synchronous>, transform_indices = @transform_14, window_bounds = array<i64: 1, 192>}, {pipeline_mode = #tpu.pipeline_mode<synchronous>, transform_indices = @transform_15, window_bounds = array<i64: 1, 128>}, {pipeline_mode = #tpu.pipeline_mode<synchronous>, transform_indices = @transform_16, window_bounds = array<i64: 1, 128>}, {pipeline_mode = #tpu.pipeline_mode<synchronous>, transform_indices = @transform_17, window_bounds = array<i64: 2, 128, 128>}, {pipeline_mode = #tpu.pipeline_mode<synchronous>, transform_indices = @transform_18, window_bounds = array<i64: 1, 128>}, {transform_indices = @transform_19, window_bounds = array<i64: 1, 1, 128>}]} {
    %cst = arith.constant 0.000000e+00 : bf16
    %0 = vector.broadcast %cst : bf16 to vector<18x144xbf16>
    %c0 = arith.constant 0 : index
    %c0_0 = arith.constant 0 : index
    %1 = vector.load %arg21[%c0, %c0_0] : memref<18x144xbf16, #tpu.memory_space<vmem>>, vector<18x144xbf16>
    tpu.vector_store %arg21[%c0, %c0_0], %0 {strides = array<i32>} : memref<18x144xbf16, #tpu.memory_space<vmem>>, vector<18x144xbf16>,
    %cst_1 = arith.constant 0.000000e+00 : bf16
    %2 = vector.broadcast %cst_1 : bf16 to vector<10x80xbf16>
    %c0_2 = arith.constant 0 : index
    %c0_3 = arith.constant 0 : index
    %3 = vector.load %arg22[%c0_2, %c0_3] : memref<10x80xbf16, #tpu.memory_space<vmem>>, vector<10x80xbf16>
    tpu.vector_store %arg22[%c0_2, %c0_3], %2 {strides = array<i32>} : memref<10x80xbf16, #tpu.memory_space<vmem>>, vector<10x80xbf16>,
    %cst_4 = arith.constant 0.000000e+00 : bf16
    %4 = vector.broadcast %cst_4 : bf16 to vector<10x160xbf16>
    %c0_5 = arith.constant 0 : index
    %c0_6 = arith.constant 0 : index
    %5 = vector.load %arg23[%c0_5, %c0_6] : memref<10x160xbf16, #tpu.memory_space<vmem>>, vector<10x160xbf16>
    tpu.vector_store %arg23[%c0_5, %c0_6], %4 {strides = array<i32>} : memref<10x160xbf16, #tpu.memory_space<vmem>>, vector<10x160xbf16>,
    %cst_7 = arith.constant 0.000000e+00 : bf16
    %6 = vector.broadcast %cst_7 : bf16 to vector<10x160xbf16>
    %c0_8 = arith.constant 0 : index
    %c0_9 = arith.constant 0 : index
    %7 = vector.load %arg24[%c0_8, %c0_9] : memref<10x160xbf16, #tpu.memory_space<vmem>>, vector<10x160xbf16>
    tpu.vector_store %arg24[%c0_8, %c0_9], %6 {strides = array<i32>} : memref<10x160xbf16, #tpu.memory_space<vmem>>, vector<10x160xbf16>,
    %cst_10 = arith.constant 0.000000e+00 : bf16
    %8 = vector.broadcast %cst_10 : bf16 to vector<6x96xbf16>
    %c0_11 = arith.constant 0 : index
    %c0_12 = arith.constant 0 : index
    %9 = vector.load %arg25[%c0_11, %c0_12] : memref<6x96xbf16, #tpu.memory_space<vmem>>, vector<6x96xbf16>
    tpu.vector_store %arg25[%c0_11, %c0_12], %8 {strides = array<i32>} : memref<6x96xbf16, #tpu.memory_space<vmem>>, vector<6x96xbf16>,
    %cst_13 = arith.constant 0.000000e+00 : bf16
    %10 = vector.broadcast %cst_13 : bf16 to vector<6x192xbf16>
    %c0_14 = arith.constant 0 : index
    %c0_15 = arith.constant 0 : index
    %11 = vector.load %arg26[%c0_14, %c0_15] : memref<6x192xbf16, #tpu.memory_space<vmem>>, vector<6x192xbf16>
    tpu.vector_store %arg26[%c0_14, %c0_15], %10 {strides = array<i32>} : memref<6x192xbf16, #tpu.memory_space<vmem>>, vector<6x192xbf16>,
    %cst_16 = arith.constant 0.000000e+00 : bf16
    %12 = vector.broadcast %cst_16 : bf16 to vector<4x128xbf16>
    %c0_17 = arith.constant 0 : index
    %c0_18 = arith.constant 0 : index
    %13 = vector.load %arg27[%c0_17, %c0_18] : memref<4x128xbf16, #tpu.memory_space<vmem>>, vector<4x128xbf16>
    tpu.vector_store %arg27[%c0_17, %c0_18], %12 {strides = array<i32>} : memref<4x128xbf16, #tpu.memory_space<vmem>>, vector<4x128xbf16>,
    %c0_19 = arith.constant 0 : index
    %c0_20 = arith.constant 0 : index
    %c0_21 = arith.constant 0 : index
    %14 = vector.load %arg1[%c0_19, %c0_20, %c0_21] : memref<1x18x72xbf16, #tpu.memory_space<vmem>>, vector<1x16x72xbf16>
    %15 = vector.shape_cast %14 : vector<1x16x72xbf16> to vector<16x72xbf16>
    %c0_22 = arith.constant 0 : index
    %c0_23 = arith.constant 0 : index
    %c0_24 = arith.constant 0 : index
    %16 = vector.load %arg2[%c0_22, %c0_23, %c0_24] : memref<3x72x144xbf16, #tpu.memory_space<vmem>>, vector<1x72x144xbf16>
    %17 = vector.shape_cast %16 : vector<1x72x144xbf16> to vector<72x144xbf16>
    %cst_25 = arith.constant dense<0.000000e+00> : vector<16x144xf32>
    %18 = tpu.matmul %15, %17, %cst_25 {dimension_numbers = #tpu.dot_dimension_numbers<[1], [0], [0], [1], [0, 0, 1, 1], [], []>} : vector<16x72xbf16>, vector<72x144xbf16>, vector<16x144xf32> -> vector<16x144xf32>
    %c0_26 = arith.constant 0 : index
    %c1 = arith.constant 1 : index
    %c0_27 = arith.constant 0 : index
    %19 = vector.load %arg1[%c0_26, %c1, %c0_27] : memref<1x18x72xbf16, #tpu.memory_space<vmem>>, vector<1x16x72xbf16>
    %20 = vector.shape_cast %19 : vector<1x16x72xbf16> to vector<16x72xbf16>
    %c1_28 = arith.constant 1 : index
    %c0_29 = arith.constant 0 : index
    %c0_30 = arith.constant 0 : index
    %21 = vector.load %arg2[%c1_28, %c0_29, %c0_30] : memref<3x72x144xbf16, #tpu.memory_space<vmem>>, vector<1x72x144xbf16>
    %22 = vector.shape_cast %21 : vector<1x72x144xbf16> to vector<72x144xbf16>
    %cst_31 = arith.constant dense<0.000000e+00> : vector<16x144xf32>
    %23 = tpu.matmul %20, %22, %cst_31 {dimension_numbers = #tpu.dot_dimension_numbers<[1], [0], [0], [1], [0, 0, 1, 1], [], []>} : vector<16x72xbf16>, vector<72x144xbf16>, vector<16x144xf32> -> vector<16x144xf32>
    %24 = arith.addf %18, %23 : vector<16x144xf32>
    %c0_32 = arith.constant 0 : index
    %c2 = arith.constant 2 : index
    %c0_33 = arith.constant 0 : index
    %25 = vector.load %arg1[%c0_32, %c2, %c0_33] : memref<1x18x72xbf16, #tpu.memory_space<vmem>>, vector<1x16x72xbf16>
    %26 = vector.shape_cast %25 : vector<1x16x72xbf16> to vector<16x72xbf16>
    %c2_34 = arith.constant 2 : index
    %c0_35 = arith.constant 0 : index
    %c0_36 = arith.constant 0 : index
    %27 = vector.load %arg2[%c2_34, %c0_35, %c0_36] : memref<3x72x144xbf16, #tpu.memory_space<vmem>>, vector<1x72x144xbf16>
    %28 = vector.shape_cast %27 : vector<1x72x144xbf16> to vector<72x144xbf16>
    %cst_37 = arith.constant dense<0.000000e+00> : vector<16x144xf32>
    %29 = tpu.matmul %26, %28, %cst_37 {dimension_numbers = #tpu.dot_dimension_numbers<[1], [0], [0], [1], [0, 0, 1, 1], [], []>} : vector<16x72xbf16>, vector<72x144xbf16>, vector<16x144xf32> -> vector<16x144xf32>
    %30 = arith.addf %24, %29 : vector<16x144xf32>
    %c0_38 = arith.constant 0 : index
    %c0_39 = arith.constant 0 : index
    %31 = vector.load %arg10[%c0_38, %c0_39] : memref<1x144xf32, #tpu.memory_space<vmem>>, vector<1x144xf32>
    %32 = vector.broadcast %31 : vector<1x144xf32> to vector<16x144xf32>
    %33 = arith.addf %30, %32 : vector<16x144xf32>
    %cst_40 = arith.constant 0.000000e+00 : f32
    %34 = vector.broadcast %cst_40 : f32 to vector<16x144xf32>
    %35 = arith.cmpf oge, %33, %34 : vector<16x144xf32>
    %cst_41 = arith.constant 1.000000e-01 : f32
    %36 = vector.broadcast %cst_41 : f32 to vector<16x144xf32>
    %37 = arith.mulf %36, %33 : vector<16x144xf32>
    %38 = arith.select %35, %33, %37 : vector<16x144xi1>, vector<16x144xf32>
    %39 = arith.truncf %38 : vector<16x144xf32> to vector<16x144xbf16>
    %c1_42 = arith.constant 1 : index
    %c0_43 = arith.constant 0 : index
    %40 = vector.load %arg21[%c1_42, %c0_43] : memref<18x144xbf16, #tpu.memory_space<vmem>>, vector<16x144xbf16>
    tpu.vector_store %arg21[%c1_42, %c0_43], %39 {strides = array<i32>} : memref<18x144xbf16, #tpu.memory_space<vmem>>, vector<16x144xbf16>,
    %c0_44 = arith.constant 0 : index
    %c0_45 = arith.constant 0 : index
    %41 = vector.load %arg21[%c0_44, %c0_45] : memref<18x144xbf16, #tpu.memory_space<vmem>>, vector<15x144xbf16>
    %c0_46 = arith.constant 0 : index
    %c0_47 = arith.constant 0 : index
    %c0_48 = arith.constant 0 : index
    %42 = vector.load %arg3[%c0_46, %c0_47, %c0_48] : memref<4x144x80xbf16, #tpu.memory_space<vmem>>, vector<1x144x80xbf16>
    %43 = vector.shape_cast %42 : vector<1x144x80xbf16> to vector<144x80xbf16>
    %cst_49 = arith.constant dense<0.000000e+00> : vector<15x80xf32>
    %44 = tpu.matmul %41, %43, %cst_49 {dimension_numbers = #tpu.dot_dimension_numbers<[1], [0], [0], [1], [0, 0, 1, 1], [], []>} : vector<15x144xbf16>, vector<144x80xbf16>, vector<15x80xf32> -> vector<15x80xf32>
    %c1_50 = arith.constant 1 : index
    %c0_51 = arith.constant 0 : index
    %45 = vector.load %arg21[%c1_50, %c0_51] : memref<18x144xbf16, #tpu.memory_space<vmem>>, vector<15x144xbf16>
    %c1_52 = arith.constant 1 : index
    %c0_53 = arith.constant 0 : index
    %c0_54 = arith.constant 0 : index
    %46 = vector.load %arg3[%c1_52, %c0_53, %c0_54] : memref<4x144x80xbf16, #tpu.memory_space<vmem>>, vector<1x144x80xbf16>
    %47 = vector.shape_cast %46 : vector<1x144x80xbf16> to vector<144x80xbf16>
    %cst_55 = arith.constant dense<0.000000e+00> : vector<15x80xf32>
    %48 = tpu.matmul %45, %47, %cst_55 {dimension_numbers = #tpu.dot_dimension_numbers<[1], [0], [0], [1], [0, 0, 1, 1], [], []>} : vector<15x144xbf16>, vector<144x80xbf16>, vector<15x80xf32> -> vector<15x80xf32>
    %49 = arith.addf %44, %48 : vector<15x80xf32>
    %c2_56 = arith.constant 2 : index
    %c0_57 = arith.constant 0 : index
    %50 = vector.load %arg21[%c2_56, %c0_57] : memref<18x144xbf16, #tpu.memory_space<vmem>>, vector<15x144xbf16>
    %c2_58 = arith.constant 2 : index
    %c0_59 = arith.constant 0 : index
    %c0_60 = arith.constant 0 : index
    %51 = vector.load %arg3[%c2_58, %c0_59, %c0_60] : memref<4x144x80xbf16, #tpu.memory_space<vmem>>, vector<1x144x80xbf16>
    %52 = vector.shape_cast %51 : vector<1x144x80xbf16> to vector<144x80xbf16>
    %cst_61 = arith.constant dense<0.000000e+00> : vector<15x80xf32>
    %53 = tpu.matmul %50, %52, %cst_61 {dimension_numbers = #tpu.dot_dimension_numbers<[1], [0], [0], [1], [0, 0, 1, 1], [], []>} : vector<15x144xbf16>, vector<144x80xbf16>, vector<15x80xf32> -> vector<15x80xf32>
    %54 = arith.addf %49, %53 : vector<15x80xf32>
    %c3 = arith.constant 3 : index
    %c0_62 = arith.constant 0 : index
    %55 = vector.load %arg21[%c3, %c0_62] : memref<18x144xbf16, #tpu.memory_space<vmem>>, vector<15x144xbf16>
    %c3_63 = arith.constant 3 : index
    %c0_64 = arith.constant 0 : index
    %c0_65 = arith.constant 0 : index
    %56 = vector.load %arg3[%c3_63, %c0_64, %c0_65] : memref<4x144x80xbf16, #tpu.memory_space<vmem>>, vector<1x144x80xbf16>
    %57 = vector.shape_cast %56 : vector<1x144x80xbf16> to vector<144x80xbf16>
    %cst_66 = arith.constant dense<0.000000e+00> : vector<15x80xf32>
    %58 = tpu.matmul %55, %57, %cst_66 {dimension_numbers = #tpu.dot_dimension_numbers<[1], [0], [0], [1], [0, 0, 1, 1], [], []>} : vector<15x144xbf16>, vector<144x80xbf16>, vector<15x80xf32> -> vector<15x80xf32>
    %59 = arith.addf %54, %58 : vector<15x80xf32>
    %c0_67 = arith.constant 0 : index
    %c0_68 = arith.constant 0 : index
    %60 = vector.load %arg11[%c0_67, %c0_68] : memref<1x80xf32, #tpu.memory_space<vmem>>, vector<1x80xf32>
    %61 = vector.broadcast %60 : vector<1x80xf32> to vector<15x80xf32>
    %62 = arith.addf %59, %61 : vector<15x80xf32>
    %cst_69 = arith.constant 0.000000e+00 : f32
    %63 = vector.broadcast %cst_69 : f32 to vector<15x80xf32>
    %64 = arith.cmpf oge, %62, %63 : vector<15x80xf32>
    %cst_70 = arith.constant 1.000000e-01 : f32
    %65 = vector.broadcast %cst_70 : f32 to vector<15x80xf32>
    %66 = arith.mulf %65, %62 : vector<15x80xf32>
    %67 = arith.select %64, %62, %66 : vector<15x80xi1>, vector<15x80xf32>
    %68 = arith.truncf %67 : vector<15x80xf32> to vector<15x80xbf16>
    %69 = tpu.iota {dimensions = array<i32: 0>} : vector<8x15xi32>
    %70 = tpu.iota {dimensions = array<i32: 1>} : vector<8x15xi32>
    %c2_i32 = arith.constant 2 : i32
    %71 = vector.broadcast %c2_i32 : i32 to vector<8x15xi32>
    %72 = arith.muli %71, %69 : vector<8x15xi32>
    %73 = arith.cmpi eq, %70, %72 : vector<8x15xi32>
    %74 = arith.extui %73 : vector<8x15xi1> to vector<8x15xi32>
    %75 = arith.sitofp %74 : vector<8x15xi32> to vector<8x15xf32>
    %76 = arith.truncf %75 : vector<8x15xf32> to vector<8x15xbf16>
    %cst_71 = arith.constant dense<0.000000e+00> : vector<8x80xf32>
    %77 = tpu.matmul %76, %68, %cst_71 {dimension_numbers = #tpu.dot_dimension_numbers<[1], [0], [0], [1], [0, 0, 1, 1], [], []>} : vector<8x15xbf16>, vector<15x80xbf16>, vector<8x80xf32> -> vector<8x80xf32>
    %78 = arith.truncf %77 : vector<8x80xf32> to vector<8x80xbf16>
    %c1_72 = arith.constant 1 : index
    %c0_73 = arith.constant 0 : index
    %79 = vector.load %arg22[%c1_72, %c0_73] : memref<10x80xbf16, #tpu.memory_space<vmem>>, vector<8x80xbf16>
    tpu.vector_store %arg22[%c1_72, %c0_73], %78 {strides = array<i32>} : memref<10x80xbf16, #tpu.memory_space<vmem>>, vector<8x80xbf16>,
    %c0_74 = arith.constant 0 : index
    %c0_75 = arith.constant 0 : index
    %80 = vector.load %arg22[%c0_74, %c0_75] : memref<10x80xbf16, #tpu.memory_space<vmem>>, vector<8x80xbf16>
    %c0_76 = arith.constant 0 : index
    %c0_77 = arith.constant 0 : index
    %c0_78 = arith.constant 0 : index
    %81 = vector.load %arg4[%c0_76, %c0_77, %c0_78] : memref<3x80x160xbf16, #tpu.memory_space<vmem>>, vector<1x80x160xbf16>
    %82 = vector.shape_cast %81 : vector<1x80x160xbf16> to vector<80x160xbf16>
    %cst_79 = arith.constant dense<0.000000e+00> : vector<8x160xf32>
    %83 = tpu.matmul %80, %82, %cst_79 {dimension_numbers = #tpu.dot_dimension_numbers<[1], [0], [0], [1], [0, 0, 1, 1], [], []>} : vector<8x80xbf16>, vector<80x160xbf16>, vector<8x160xf32> -> vector<8x160xf32>
    %c1_80 = arith.constant 1 : index
    %c0_81 = arith.constant 0 : index
    %84 = vector.load %arg22[%c1_80, %c0_81] : memref<10x80xbf16, #tpu.memory_space<vmem>>, vector<8x80xbf16>
    %c1_82 = arith.constant 1 : index
    %c0_83 = arith.constant 0 : index
    %c0_84 = arith.constant 0 : index
    %85 = vector.load %arg4[%c1_82, %c0_83, %c0_84] : memref<3x80x160xbf16, #tpu.memory_space<vmem>>, vector<1x80x160xbf16>
    %86 = vector.shape_cast %85 : vector<1x80x160xbf16> to vector<80x160xbf16>
    %cst_85 = arith.constant dense<0.000000e+00> : vector<8x160xf32>
    %87 = tpu.matmul %84, %86, %cst_85 {dimension_numbers = #tpu.dot_dimension_numbers<[1], [0], [0], [1], [0, 0, 1, 1], [], []>} : vector<8x80xbf16>, vector<80x160xbf16>, vector<8x160xf32> -> vector<8x160xf32>
    %88 = arith.addf %83, %87 : vector<8x160xf32>
    %c2_86 = arith.constant 2 : index
    %c0_87 = arith.constant 0 : index
    %89 = vector.load %arg22[%c2_86, %c0_87] : memref<10x80xbf16, #tpu.memory_space<vmem>>, vector<8x80xbf16>
    %c2_88 = arith.constant 2 : index
    %c0_89 = arith.constant 0 : index
    %c0_90 = arith.constant 0 : index
    %90 = vector.load %arg4[%c2_88, %c0_89, %c0_90] : memref<3x80x160xbf16, #tpu.memory_space<vmem>>, vector<1x80x160xbf16>
    %91 = vector.shape_cast %90 : vector<1x80x160xbf16> to vector<80x160xbf16>
    %cst_91 = arith.constant dense<0.000000e+00> : vector<8x160xf32>
    %92 = tpu.matmul %89, %91, %cst_91 {dimension_numbers = #tpu.dot_dimension_numbers<[1], [0], [0], [1], [0, 0, 1, 1], [], []>} : vector<8x80xbf16>, vector<80x160xbf16>, vector<8x160xf32> -> vector<8x160xf32>
    %93 = arith.addf %88, %92 : vector<8x160xf32>
    %c0_92 = arith.constant 0 : index
    %c0_93 = arith.constant 0 : index
    %94 = vector.load %arg12[%c0_92, %c0_93] : memref<1x160xf32, #tpu.memory_space<vmem>>, vector<1x160xf32>
    %95 = vector.broadcast %94 : vector<1x160xf32> to vector<8x160xf32>
    %96 = arith.addf %93, %95 : vector<8x160xf32>
    %cst_94 = arith.constant 0.000000e+00 : f32
    %97 = vector.broadcast %cst_94 : f32 to vector<8x160xf32>
    %98 = arith.cmpf oge, %96, %97 : vector<8x160xf32>
    %cst_95 = arith.constant 1.000000e-01 : f32
    %99 = vector.broadcast %cst_95 : f32 to vector<8x160xf32>
    %100 = arith.mulf %99, %96 : vector<8x160xf32>
    %101 = arith.select %98, %96, %100 : vector<8x160xi1>, vector<8x160xf32>
    %102 = arith.truncf %101 : vector<8x160xf32> to vector<8x160xbf16>
    %c1_96 = arith.constant 1 : index
    %c0_97 = arith.constant 0 : index
    %103 = vector.load %arg23[%c1_96, %c0_97] : memref<10x160xbf16, #tpu.memory_space<vmem>>, vector<8x160xbf16>
    tpu.vector_store %arg23[%c1_96, %c0_97], %102 {strides = array<i32>} : memref<10x160xbf16, #tpu.memory_space<vmem>>, vector<8x160xbf16>,
    %c0_98 = arith.constant 0 : index
    %c0_99 = arith.constant 0 : index
    %104 = vector.load %arg23[%c0_98, %c0_99] : memref<10x160xbf16, #tpu.memory_space<vmem>>, vector<8x160xbf16>
    %c0_100 = arith.constant 0 : index
    %c0_101 = arith.constant 0 : index
    %c0_102 = arith.constant 0 : index
    %105 = vector.load %arg5[%c0_100, %c0_101, %c0_102] : memref<3x160x160xbf16, #tpu.memory_space<vmem>>, vector<1x160x160xbf16>
    %106 = vector.shape_cast %105 : vector<1x160x160xbf16> to vector<160x160xbf16>
    %cst_103 = arith.constant dense<0.000000e+00> : vector<8x160xf32>
    %107 = tpu.matmul %104, %106, %cst_103 {dimension_numbers = #tpu.dot_dimension_numbers<[1], [0], [0], [1], [0, 0, 1, 1], [], []>} : vector<8x160xbf16>, vector<160x160xbf16>, vector<8x160xf32> -> vector<8x160xf32>
    %c1_104 = arith.constant 1 : index
    %c0_105 = arith.constant 0 : index
    %108 = vector.load %arg23[%c1_104, %c0_105] : memref<10x160xbf16, #tpu.memory_space<vmem>>, vector<8x160xbf16>
    %c1_106 = arith.constant 1 : index
    %c0_107 = arith.constant 0 : index
    %c0_108 = arith.constant 0 : index
    %109 = vector.load %arg5[%c1_106, %c0_107, %c0_108] : memref<3x160x160xbf16, #tpu.memory_space<vmem>>, vector<1x160x160xbf16>
    %110 = vector.shape_cast %109 : vector<1x160x160xbf16> to vector<160x160xbf16>
    %cst_109 = arith.constant dense<0.000000e+00> : vector<8x160xf32>
    %111 = tpu.matmul %108, %110, %cst_109 {dimension_numbers = #tpu.dot_dimension_numbers<[1], [0], [0], [1], [0, 0, 1, 1], [], []>} : vector<8x160xbf16>, vector<160x160xbf16>, vector<8x160xf32> -> vector<8x160xf32>
    %112 = arith.addf %107, %111 : vector<8x160xf32>
    %c2_110 = arith.constant 2 : index
    %c0_111 = arith.constant 0 : index
    %113 = vector.load %arg23[%c2_110, %c0_111] : memref<10x160xbf16, #tpu.memory_space<vmem>>, vector<8x160xbf16>
    %c2_112 = arith.constant 2 : index
    %c0_113 = arith.constant 0 : index
    %c0_114 = arith.constant 0 : index
    %114 = vector.load %arg5[%c2_112, %c0_113, %c0_114] : memref<3x160x160xbf16, #tpu.memory_space<vmem>>, vector<1x160x160xbf16>
    %115 = vector.shape_cast %114 : vector<1x160x160xbf16> to vector<160x160xbf16>
    %cst_115 = arith.constant dense<0.000000e+00> : vector<8x160xf32>
    %116 = tpu.matmul %113, %115, %cst_115 {dimension_numbers = #tpu.dot_dimension_numbers<[1], [0], [0], [1], [0, 0, 1, 1], [], []>} : vector<8x160xbf16>, vector<160x160xbf16>, vector<8x160xf32> -> vector<8x160xf32>
    %117 = arith.addf %112, %116 : vector<8x160xf32>
    %c0_116 = arith.constant 0 : index
    %c0_117 = arith.constant 0 : index
    %118 = vector.load %arg13[%c0_116, %c0_117] : memref<1x160xf32, #tpu.memory_space<vmem>>, vector<1x160xf32>
    %119 = vector.broadcast %118 : vector<1x160xf32> to vector<8x160xf32>
    %120 = arith.addf %117, %119 : vector<8x160xf32>
    %cst_118 = arith.constant 0.000000e+00 : f32
    %121 = vector.broadcast %cst_118 : f32 to vector<8x160xf32>
    %122 = arith.cmpf oge, %120, %121 : vector<8x160xf32>
    %cst_119 = arith.constant 1.000000e-01 : f32
    %123 = vector.broadcast %cst_119 : f32 to vector<8x160xf32>
    %124 = arith.mulf %123, %120 : vector<8x160xf32>
    %125 = arith.select %122, %120, %124 : vector<8x160xi1>, vector<8x160xf32>
    %126 = arith.truncf %125 : vector<8x160xf32> to vector<8x160xbf16>
    %c1_120 = arith.constant 1 : index
    %c0_121 = arith.constant 0 : index
    %127 = vector.load %arg24[%c1_120, %c0_121] : memref<10x160xbf16, #tpu.memory_space<vmem>>, vector<8x160xbf16>
    tpu.vector_store %arg24[%c1_120, %c0_121], %126 {strides = array<i32>} : memref<10x160xbf16, #tpu.memory_space<vmem>>, vector<8x160xbf16>,
    %c0_122 = arith.constant 0 : index
    %c0_123 = arith.constant 0 : index
    %128 = vector.load %arg24[%c0_122, %c0_123] : memref<10x160xbf16, #tpu.memory_space<vmem>>, vector<7x160xbf16>
    %c0_124 = arith.constant 0 : index
    %c0_125 = arith.constant 0 : index
    %c0_126 = arith.constant 0 : index
    %129 = vector.load %arg6[%c0_124, %c0_125, %c0_126] : memref<4x160x96xbf16, #tpu.memory_space<vmem>>, vector<1x160x96xbf16>
    %130 = vector.shape_cast %129 : vector<1x160x96xbf16> to vector<160x96xbf16>
    %cst_127 = arith.constant dense<0.000000e+00> : vector<7x96xf32>
    %131 = tpu.matmul %128, %130, %cst_127 {dimension_numbers = #tpu.dot_dimension_numbers<[1], [0], [0], [1], [0, 0, 1, 1], [], []>} : vector<7x160xbf16>, vector<160x96xbf16>, vector<7x96xf32> -> vector<7x96xf32>
    %c1_128 = arith.constant 1 : index
    %c0_129 = arith.constant 0 : index
    %132 = vector.load %arg24[%c1_128, %c0_129] : memref<10x160xbf16, #tpu.memory_space<vmem>>, vector<7x160xbf16>
    %c1_130 = arith.constant 1 : index
    %c0_131 = arith.constant 0 : index
    %c0_132 = arith.constant 0 : index
    %133 = vector.load %arg6[%c1_130, %c0_131, %c0_132] : memref<4x160x96xbf16, #tpu.memory_space<vmem>>, vector<1x160x96xbf16>
    %134 = vector.shape_cast %133 : vector<1x160x96xbf16> to vector<160x96xbf16>
    %cst_133 = arith.constant dense<0.000000e+00> : vector<7x96xf32>
    %135 = tpu.matmul %132, %134, %cst_133 {dimension_numbers = #tpu.dot_dimension_numbers<[1], [0], [0], [1], [0, 0, 1, 1], [], []>} : vector<7x160xbf16>, vector<160x96xbf16>, vector<7x96xf32> -> vector<7x96xf32>
    %136 = arith.addf %131, %135 : vector<7x96xf32>
    %c2_134 = arith.constant 2 : index
    %c0_135 = arith.constant 0 : index
    %137 = vector.load %arg24[%c2_134, %c0_135] : memref<10x160xbf16, #tpu.memory_space<vmem>>, vector<7x160xbf16>
    %c2_136 = arith.constant 2 : index
    %c0_137 = arith.constant 0 : index
    %c0_138 = arith.constant 0 : index
    %138 = vector.load %arg6[%c2_136, %c0_137, %c0_138] : memref<4x160x96xbf16, #tpu.memory_space<vmem>>, vector<1x160x96xbf16>
    %139 = vector.shape_cast %138 : vector<1x160x96xbf16> to vector<160x96xbf16>
    %cst_139 = arith.constant dense<0.000000e+00> : vector<7x96xf32>
    %140 = tpu.matmul %137, %139, %cst_139 {dimension_numbers = #tpu.dot_dimension_numbers<[1], [0], [0], [1], [0, 0, 1, 1], [], []>} : vector<7x160xbf16>, vector<160x96xbf16>, vector<7x96xf32> -> vector<7x96xf32>
    %141 = arith.addf %136, %140 : vector<7x96xf32>
    %c3_140 = arith.constant 3 : index
    %c0_141 = arith.constant 0 : index
    %142 = vector.load %arg24[%c3_140, %c0_141] : memref<10x160xbf16, #tpu.memory_space<vmem>>, vector<7x160xbf16>
    %c3_142 = arith.constant 3 : index
    %c0_143 = arith.constant 0 : index
    %c0_144 = arith.constant 0 : index
    %143 = vector.load %arg6[%c3_142, %c0_143, %c0_144] : memref<4x160x96xbf16, #tpu.memory_space<vmem>>, vector<1x160x96xbf16>
    %144 = vector.shape_cast %143 : vector<1x160x96xbf16> to vector<160x96xbf16>
    %cst_145 = arith.constant dense<0.000000e+00> : vector<7x96xf32>
    %145 = tpu.matmul %142, %144, %cst_145 {dimension_numbers = #tpu.dot_dimension_numbers<[1], [0], [0], [1], [0, 0, 1, 1], [], []>} : vector<7x160xbf16>, vector<160x96xbf16>, vector<7x96xf32> -> vector<7x96xf32>
    %146 = arith.addf %141, %145 : vector<7x96xf32>
    %c0_146 = arith.constant 0 : index
    %c0_147 = arith.constant 0 : index
    %147 = vector.load %arg14[%c0_146, %c0_147] : memref<1x96xf32, #tpu.memory_space<vmem>>, vector<1x96xf32>
    %148 = vector.broadcast %147 : vector<1x96xf32> to vector<7x96xf32>
    %149 = arith.addf %146, %148 : vector<7x96xf32>
    %cst_148 = arith.constant 0.000000e+00 : f32
    %150 = vector.broadcast %cst_148 : f32 to vector<7x96xf32>
    %151 = arith.cmpf oge, %149, %150 : vector<7x96xf32>
    %cst_149 = arith.constant 1.000000e-01 : f32
    %152 = vector.broadcast %cst_149 : f32 to vector<7x96xf32>
    %153 = arith.mulf %152, %149 : vector<7x96xf32>
    %154 = arith.select %151, %149, %153 : vector<7x96xi1>, vector<7x96xf32>
    %155 = arith.truncf %154 : vector<7x96xf32> to vector<7x96xbf16>
    %156 = tpu.iota {dimensions = array<i32: 0>} : vector<4x7xi32>
    %157 = tpu.iota {dimensions = array<i32: 1>} : vector<4x7xi32>
    %c2_i32_150 = arith.constant 2 : i32
    %158 = vector.broadcast %c2_i32_150 : i32 to vector<4x7xi32>
    %159 = arith.muli %158, %156 : vector<4x7xi32>
    %160 = arith.cmpi eq, %157, %159 : vector<4x7xi32>
    %161 = arith.extui %160 : vector<4x7xi1> to vector<4x7xi32>
    %162 = arith.sitofp %161 : vector<4x7xi32> to vector<4x7xf32>
    %163 = arith.truncf %162 : vector<4x7xf32> to vector<4x7xbf16>
    %cst_151 = arith.constant dense<0.000000e+00> : vector<4x96xf32>
    %164 = tpu.matmul %163, %155, %cst_151 {dimension_numbers = #tpu.dot_dimension_numbers<[1], [0], [0], [1], [0, 0, 1, 1], [], []>} : vector<4x7xbf16>, vector<7x96xbf16>, vector<4x96xf32> -> vector<4x96xf32>
    %165 = arith.truncf %164 : vector<4x96xf32> to vector<4x96xbf16>
    %c1_152 = arith.constant 1 : index
    %c0_153 = arith.constant 0 : index
    %166 = vector.load %arg25[%c1_152, %c0_153] : memref<6x96xbf16, #tpu.memory_space<vmem>>, vector<4x96xbf16>
    tpu.vector_store %arg25[%c1_152, %c0_153], %165 {strides = array<i32>} : memref<6x96xbf16, #tpu.memory_space<vmem>>, vector<4x96xbf16>,
    %c0_154 = arith.constant 0 : index
    %c0_155 = arith.constant 0 : index
    %167 = vector.load %arg25[%c0_154, %c0_155] : memref<6x96xbf16, #tpu.memory_space<vmem>>, vector<4x96xbf16>
    %c0_156 = arith.constant 0 : index
    %c0_157 = arith.constant 0 : index
    %c0_158 = arith.constant 0 : index
    %168 = vector.load %arg7[%c0_156, %c0_157, %c0_158] : memref<3x96x192xbf16, #tpu.memory_space<vmem>>, vector<1x96x192xbf16>
    %169 = vector.shape_cast %168 : vector<1x96x192xbf16> to vector<96x192xbf16>
    %cst_159 = arith.constant dense<0.000000e+00> : vector<4x192xf32>
    %170 = tpu.matmul %167, %169, %cst_159 {dimension_numbers = #tpu.dot_dimension_numbers<[1], [0], [0], [1], [0, 0, 1, 1], [], []>} : vector<4x96xbf16>, vector<96x192xbf16>, vector<4x192xf32> -> vector<4x192xf32>
    %c1_160 = arith.constant 1 : index
    %c0_161 = arith.constant 0 : index
    %171 = vector.load %arg25[%c1_160, %c0_161] : memref<6x96xbf16, #tpu.memory_space<vmem>>, vector<4x96xbf16>
    %c1_162 = arith.constant 1 : index
    %c0_163 = arith.constant 0 : index
    %c0_164 = arith.constant 0 : index
    %172 = vector.load %arg7[%c1_162, %c0_163, %c0_164] : memref<3x96x192xbf16, #tpu.memory_space<vmem>>, vector<1x96x192xbf16>
    %173 = vector.shape_cast %172 : vector<1x96x192xbf16> to vector<96x192xbf16>
    %cst_165 = arith.constant dense<0.000000e+00> : vector<4x192xf32>
    %174 = tpu.matmul %171, %173, %cst_165 {dimension_numbers = #tpu.dot_dimension_numbers<[1], [0], [0], [1], [0, 0, 1, 1], [], []>} : vector<4x96xbf16>, vector<96x192xbf16>, vector<4x192xf32> -> vector<4x192xf32>
    %175 = arith.addf %170, %174 : vector<4x192xf32>
    %c2_166 = arith.constant 2 : index
    %c0_167 = arith.constant 0 : index
    %176 = vector.load %arg25[%c2_166, %c0_167] : memref<6x96xbf16, #tpu.memory_space<vmem>>, vector<4x96xbf16>
    %c2_168 = arith.constant 2 : index
    %c0_169 = arith.constant 0 : index
    %c0_170 = arith.constant 0 : index
    %177 = vector.load %arg7[%c2_168, %c0_169, %c0_170] : memref<3x96x192xbf16, #tpu.memory_space<vmem>>, vector<1x96x192xbf16>
    %178 = vector.shape_cast %177 : vector<1x96x192xbf16> to vector<96x192xbf16>
    %cst_171 = arith.constant dense<0.000000e+00> : vector<4x192xf32>
    %179 = tpu.matmul %176, %178, %cst_171 {dimension_numbers = #tpu.dot_dimension_numbers<[1], [0], [0], [1], [0, 0, 1, 1], [], []>} : vector<4x96xbf16>, vector<96x192xbf16>, vector<4x192xf32> -> vector<4x192xf32>
    %180 = arith.addf %175, %179 : vector<4x192xf32>
    %c0_172 = arith.constant 0 : index
    %c0_173 = arith.constant 0 : index
    %181 = vector.load %arg15[%c0_172, %c0_173] : memref<1x192xf32, #tpu.memory_space<vmem>>, vector<1x192xf32>
    %182 = vector.broadcast %181 : vector<1x192xf32> to vector<4x192xf32>
    %183 = arith.addf %180, %182 : vector<4x192xf32>
    %cst_174 = arith.constant 0.000000e+00 : f32
    %184 = vector.broadcast %cst_174 : f32 to vector<4x192xf32>
    %185 = arith.cmpf oge, %183, %184 : vector<4x192xf32>
    %cst_175 = arith.constant 1.000000e-01 : f32
    %186 = vector.broadcast %cst_175 : f32 to vector<4x192xf32>
    %187 = arith.mulf %186, %183 : vector<4x192xf32>
    %188 = arith.select %185, %183, %187 : vector<4x192xi1>, vector<4x192xf32>
    %189 = arith.truncf %188 : vector<4x192xf32> to vector<4x192xbf16>
    %c1_176 = arith.constant 1 : index
    %c0_177 = arith.constant 0 : index
    %190 = vector.load %arg26[%c1_176, %c0_177] : memref<6x192xbf16, #tpu.memory_space<vmem>>, vector<4x192xbf16>
    tpu.vector_store %arg26[%c1_176, %c0_177], %189 {strides = array<i32>} : memref<6x192xbf16, #tpu.memory_space<vmem>>, vector<4x192xbf16>,
    %c0_178 = arith.constant 0 : index
    %c0_179 = arith.constant 0 : index
    %191 = vector.load %arg26[%c0_178, %c0_179] : memref<6x192xbf16, #tpu.memory_space<vmem>>, vector<3x192xbf16>
    %c0_180 = arith.constant 0 : index
    %c0_181 = arith.constant 0 : index
    %c0_182 = arith.constant 0 : index
    %192 = vector.load %arg8[%c0_180, %c0_181, %c0_182] : memref<4x192x128xbf16, #tpu.memory_space<vmem>>, vector<1x192x128xbf16>
    %193 = vector.shape_cast %192 : vector<1x192x128xbf16> to vector<192x128xbf16>
    %cst_183 = arith.constant dense<0.000000e+00> : vector<3x128xf32>
    %194 = tpu.matmul %191, %193, %cst_183 {dimension_numbers = #tpu.dot_dimension_numbers<[1], [0], [0], [1], [0, 0, 1, 1], [], []>} : vector<3x192xbf16>, vector<192x128xbf16>, vector<3x128xf32> -> vector<3x128xf32>
    %c1_184 = arith.constant 1 : index
    %c0_185 = arith.constant 0 : index
    %195 = vector.load %arg26[%c1_184, %c0_185] : memref<6x192xbf16, #tpu.memory_space<vmem>>, vector<3x192xbf16>
    %c1_186 = arith.constant 1 : index
    %c0_187 = arith.constant 0 : index
    %c0_188 = arith.constant 0 : index
    %196 = vector.load %arg8[%c1_186, %c0_187, %c0_188] : memref<4x192x128xbf16, #tpu.memory_space<vmem>>, vector<1x192x128xbf16>
    %197 = vector.shape_cast %196 : vector<1x192x128xbf16> to vector<192x128xbf16>
    %cst_189 = arith.constant dense<0.000000e+00> : vector<3x128xf32>
    %198 = tpu.matmul %195, %197, %cst_189 {dimension_numbers = #tpu.dot_dimension_numbers<[1], [0], [0], [1], [0, 0, 1, 1], [], []>} : vector<3x192xbf16>, vector<192x128xbf16>, vector<3x128xf32> -> vector<3x128xf32>
    %199 = arith.addf %194, %198 : vector<3x128xf32>
    %c2_190 = arith.constant 2 : index
    %c0_191 = arith.constant 0 : index
    %200 = vector.load %arg26[%c2_190, %c0_191] : memref<6x192xbf16, #tpu.memory_space<vmem>>, vector<3x192xbf16>
    %c2_192 = arith.constant 2 : index
    %c0_193 = arith.constant 0 : index
    %c0_194 = arith.constant 0 : index
    %201 = vector.load %arg8[%c2_192, %c0_193, %c0_194] : memref<4x192x128xbf16, #tpu.memory_space<vmem>>, vector<1x192x128xbf16>
    %202 = vector.shape_cast %201 : vector<1x192x128xbf16> to vector<192x128xbf16>
    %cst_195 = arith.constant dense<0.000000e+00> : vector<3x128xf32>
    %203 = tpu.matmul %200, %202, %cst_195 {dimension_numbers = #tpu.dot_dimension_numbers<[1], [0], [0], [1], [0, 0, 1, 1], [], []>} : vector<3x192xbf16>, vector<192x128xbf16>, vector<3x128xf32> -> vector<3x128xf32>
    %204 = arith.addf %199, %203 : vector<3x128xf32>
    %c3_196 = arith.constant 3 : index
    %c0_197 = arith.constant 0 : index
    %205 = vector.load %arg26[%c3_196, %c0_197] : memref<6x192xbf16, #tpu.memory_space<vmem>>, vector<3x192xbf16>
    %c3_198 = arith.constant 3 : index
    %c0_199 = arith.constant 0 : index
    %c0_200 = arith.constant 0 : index
    %206 = vector.load %arg8[%c3_198, %c0_199, %c0_200] : memref<4x192x128xbf16, #tpu.memory_space<vmem>>, vector<1x192x128xbf16>
    %207 = vector.shape_cast %206 : vector<1x192x128xbf16> to vector<192x128xbf16>
    %cst_201 = arith.constant dense<0.000000e+00> : vector<3x128xf32>
    %208 = tpu.matmul %205, %207, %cst_201 {dimension_numbers = #tpu.dot_dimension_numbers<[1], [0], [0], [1], [0, 0, 1, 1], [], []>} : vector<3x192xbf16>, vector<192x128xbf16>, vector<3x128xf32> -> vector<3x128xf32>
    %209 = arith.addf %204, %208 : vector<3x128xf32>
    %c0_202 = arith.constant 0 : index
    %c0_203 = arith.constant 0 : index
    %210 = vector.load %arg16[%c0_202, %c0_203] : memref<1x128xf32, #tpu.memory_space<vmem>>, vector<1x128xf32>
    %211 = vector.broadcast %210 : vector<1x128xf32> to vector<3x128xf32>
    %212 = arith.addf %209, %211 : vector<3x128xf32>
    %cst_204 = arith.constant 0.000000e+00 : f32
    %213 = vector.broadcast %cst_204 : f32 to vector<3x128xf32>
    %214 = arith.cmpf oge, %212, %213 : vector<3x128xf32>
    %cst_205 = arith.constant 1.000000e-01 : f32
    %215 = vector.broadcast %cst_205 : f32 to vector<3x128xf32>
    %216 = arith.mulf %215, %212 : vector<3x128xf32>
    %217 = arith.select %214, %212, %216 : vector<3x128xi1>, vector<3x128xf32>
    %218 = arith.truncf %217 : vector<3x128xf32> to vector<3x128xbf16>
    %219 = tpu.iota {dimensions = array<i32: 0>} : vector<2x3xi32>
    %220 = tpu.iota {dimensions = array<i32: 1>} : vector<2x3xi32>
    %c2_i32_206 = arith.constant 2 : i32
    %221 = vector.broadcast %c2_i32_206 : i32 to vector<2x3xi32>
    %222 = arith.muli %221, %219 : vector<2x3xi32>
    %223 = arith.cmpi eq, %220, %222 : vector<2x3xi32>
    %224 = arith.extui %223 : vector<2x3xi1> to vector<2x3xi32>
    %225 = arith.sitofp %224 : vector<2x3xi32> to vector<2x3xf32>
    %226 = arith.truncf %225 : vector<2x3xf32> to vector<2x3xbf16>
    %cst_207 = arith.constant dense<0.000000e+00> : vector<2x128xf32>
    %227 = tpu.matmul %226, %218, %cst_207 {dimension_numbers = #tpu.dot_dimension_numbers<[1], [0], [0], [1], [0, 0, 1, 1], [], []>} : vector<2x3xbf16>, vector<3x128xbf16>, vector<2x128xf32> -> vector<2x128xf32>
    %228 = arith.truncf %227 : vector<2x128xf32> to vector<2x128xbf16>
    %c1_208 = arith.constant 1 : index
    %c0_209 = arith.constant 0 : index
    %229 = vector.load %arg27[%c1_208, %c0_209] : memref<4x128xbf16, #tpu.memory_space<vmem>>, vector<2x128xbf16>
    tpu.vector_store %arg27[%c1_208, %c0_209], %228 {strides = array<i32>} : memref<4x128xbf16, #tpu.memory_space<vmem>>, vector<2x128xbf16>,
    %c0_210 = arith.constant 0 : index
    %c0_211 = arith.constant 0 : index
    %230 = vector.load %arg27[%c0_210, %c0_211] : memref<4x128xbf16, #tpu.memory_space<vmem>>, vector<2x128xbf16>
    %c0_212 = arith.constant 0 : index
    %c0_213 = arith.constant 0 : index
    %c0_214 = arith.constant 0 : index
    %231 = vector.load %arg9[%c0_212, %c0_213, %c0_214] : memref<3x128x128xbf16, #tpu.memory_space<vmem>>, vector<1x128x128xbf16>
    %232 = vector.shape_cast %231 : vector<1x128x128xbf16> to vector<128x128xbf16>
    %cst_215 = arith.constant dense<0.000000e+00> : vector<2x128xf32>
    %233 = tpu.matmul %230, %232, %cst_215 {dimension_numbers = #tpu.dot_dimension_numbers<[1], [0], [0], [1], [0, 0, 1, 1], [], []>} : vector<2x128xbf16>, vector<128x128xbf16>, vector<2x128xf32> -> vector<2x128xf32>
    %c1_216 = arith.constant 1 : index
    %c0_217 = arith.constant 0 : index
    %234 = vector.load %arg27[%c1_216, %c0_217] : memref<4x128xbf16, #tpu.memory_space<vmem>>, vector<2x128xbf16>
    %c1_218 = arith.constant 1 : index
    %c0_219 = arith.constant 0 : index
    %c0_220 = arith.constant 0 : index
    %235 = vector.load %arg9[%c1_218, %c0_219, %c0_220] : memref<3x128x128xbf16, #tpu.memory_space<vmem>>, vector<1x128x128xbf16>
    %236 = vector.shape_cast %235 : vector<1x128x128xbf16> to vector<128x128xbf16>
    %cst_221 = arith.constant dense<0.000000e+00> : vector<2x128xf32>
    %237 = tpu.matmul %234, %236, %cst_221 {dimension_numbers = #tpu.dot_dimension_numbers<[1], [0], [0], [1], [0, 0, 1, 1], [], []>} : vector<2x128xbf16>, vector<128x128xbf16>, vector<2x128xf32> -> vector<2x128xf32>
    %238 = arith.addf %233, %237 : vector<2x128xf32>
    %c2_222 = arith.constant 2 : index
    %c0_223 = arith.constant 0 : index
    %239 = vector.load %arg27[%c2_222, %c0_223] : memref<4x128xbf16, #tpu.memory_space<vmem>>, vector<2x128xbf16>
    %c2_224 = arith.constant 2 : index
    %c0_225 = arith.constant 0 : index
    %c0_226 = arith.constant 0 : index
    %240 = vector.load %arg9[%c2_224, %c0_225, %c0_226] : memref<3x128x128xbf16, #tpu.memory_space<vmem>>, vector<1x128x128xbf16>
    %241 = vector.shape_cast %240 : vector<1x128x128xbf16> to vector<128x128xbf16>
    %cst_227 = arith.constant dense<0.000000e+00> : vector<2x128xf32>
    %242 = tpu.matmul %239, %241, %cst_227 {dimension_numbers = #tpu.dot_dimension_numbers<[1], [0], [0], [1], [0, 0, 1, 1], [], []>} : vector<2x128xbf16>, vector<128x128xbf16>, vector<2x128xf32> -> vector<2x128xf32>
    %243 = arith.addf %238, %242 : vector<2x128xf32>
    %c0_228 = arith.constant 0 : index
    %c0_229 = arith.constant 0 : index
    %244 = vector.load %arg17[%c0_228, %c0_229] : memref<1x128xf32, #tpu.memory_space<vmem>>, vector<1x128xf32>
    %245 = vector.broadcast %244 : vector<1x128xf32> to vector<2x128xf32>
    %246 = arith.addf %243, %245 : vector<2x128xf32>
    %cst_230 = arith.constant 0.000000e+00 : f32
    %247 = vector.broadcast %cst_230 : f32 to vector<2x128xf32>
    %248 = arith.cmpf oge, %246, %247 : vector<2x128xf32>
    %cst_231 = arith.constant 1.000000e-01 : f32
    %249 = vector.broadcast %cst_231 : f32 to vector<2x128xf32>
    %250 = arith.mulf %249, %246 : vector<2x128xf32>
    %251 = arith.select %248, %246, %250 : vector<2x128xi1>, vector<2x128xf32>
    %252 = arith.truncf %251 : vector<2x128xf32> to vector<2x128xbf16>
    %253 = vector.extract_strided_slice %252 {offsets = [0, 0], sizes = [1, 128], strides = [1, 1]} : vector<2x128xbf16> to vector<1x128xbf16>
    %c0_232 = arith.constant 0 : index
    %c0_233 = arith.constant 0 : index
    %c0_234 = arith.constant 0 : index
    %254 = vector.load %arg18[%c0_232, %c0_233, %c0_234] : memref<2x128x128xbf16, #tpu.memory_space<vmem>>, vector<1x128x128xbf16>
    %255 = vector.shape_cast %254 : vector<1x128x128xbf16> to vector<128x128xbf16>
    %cst_235 = arith.constant dense<0.000000e+00> : vector<1x128xf32>
    %256 = tpu.matmul %253, %255, %cst_235 {dimension_numbers = #tpu.dot_dimension_numbers<[1], [0], [0], [1], [0, 0, 1, 1], [], []>} : vector<1x128xbf16>, vector<128x128xbf16>, vector<1x128xf32> -> vector<1x128xf32>
    %257 = vector.extract_strided_slice %252 {offsets = [1, 0], sizes = [1, 128], strides = [1, 1]} : vector<2x128xbf16> to vector<1x128xbf16>
    %c1_236 = arith.constant 1 : index
    %c0_237 = arith.constant 0 : index
    %c0_238 = arith.constant 0 : index
    %258 = vector.load %arg18[%c1_236, %c0_237, %c0_238] : memref<2x128x128xbf16, #tpu.memory_space<vmem>>, vector<1x128x128xbf16>
    %259 = vector.shape_cast %258 : vector<1x128x128xbf16> to vector<128x128xbf16>
    %cst_239 = arith.constant dense<0.000000e+00> : vector<1x128xf32>
    %260 = tpu.matmul %257, %259, %cst_239 {dimension_numbers = #tpu.dot_dimension_numbers<[1], [0], [0], [1], [0, 0, 1, 1], [], []>} : vector<1x128xbf16>, vector<128x128xbf16>, vector<1x128xf32> -> vector<1x128xf32>
    %261 = arith.addf %256, %260 : vector<1x128xf32>
    %c0_240 = arith.constant 0 : index
    %c0_241 = arith.constant 0 : index
    %262 = vector.load %arg19[%c0_240, %c0_241] : memref<1x128xf32, #tpu.memory_space<vmem>>, vector<1x128xf32>
    %263 = arith.addf %261, %262 : vector<1x128xf32>
    %c0_242 = arith.constant 0 : index
    %c0_243 = arith.constant 0 : index
    %c0_244 = arith.constant 0 : index
    %264 = vector.load %arg20[%c0_242, %c0_243, %c0_244] : memref<1x1x128xf32, #tpu.memory_space<vmem>>, vector<1x1x128xf32>
    %265 = vector.shape_cast %264 : vector<1x1x128xf32> to vector<1x128xf32>
    %266 = vector.shape_cast %263 : vector<1x128xf32> to vector<1x1x128xf32>
    tpu.vector_store %arg20[%c0_242, %c0_243, %c0_244], %266 {strides = array<i32>} : memref<1x1x128xf32, #tpu.memory_space<vmem>>, vector<1x1x128xf32>,
    return
  }
  func.func @transform_0(%arg0: i32) -> (i32, i32, i32) {
    %c0_i32 = arith.constant 0 : i32
    %c0_i32_0 = arith.constant 0 : i32
    %c0_i32_1 = arith.constant 0 : i32
    return %arg0, %c0_i32, %c0_i32_0 : i32, i32, i32
  }
  func.func @transform_1(%arg0: i32) -> (i32, i32, i32) {
    %c0_i32 = arith.constant 0 : i32
    %c0_i32_0 = arith.constant 0 : i32
    %c0_i32_1 = arith.constant 0 : i32
    %c0_i32_2 = arith.constant 0 : i32
    return %c0_i32, %c0_i32_0, %c0_i32_1 : i32, i32, i32
  }
  func.func @transform_2(%arg0: i32) -> (i32, i32, i32) {
    %c0_i32 = arith.constant 0 : i32
    %c0_i32_0 = arith.constant 0 : i32
    %c0_i32_1 = arith.constant 0 : i32
    %c0_i32_2 = arith.constant 0 : i32
    return %c0_i32, %c0_i32_0, %c0_i32_1 : i32, i32, i32
  }
  func.func @transform_3(%arg0: i32) -> (i32, i32, i32) {
    %c0_i32 = arith.constant 0 : i32
    %c0_i32_0 = arith.constant 0 : i32
    %c0_i32_1 = arith.constant 0 : i32
    %c0_i32_2 = arith.constant 0 : i32
    return %c0_i32, %c0_i32_0, %c0_i32_1 : i32, i32, i32
  }
  func.func @transform_4(%arg0: i32) -> (i32, i32, i32) {
    %c0_i32 = arith.constant 0 : i32
    %c0_i32_0 = arith.constant 0 : i32
    %c0_i32_1 = arith.constant 0 : i32
    %c0_i32_2 = arith.constant 0 : i32
    return %c0_i32, %c0_i32_0, %c0_i32_1 : i32, i32, i32
  }
  func.func @transform_5(%arg0: i32) -> (i32, i32, i32) {
    %c0_i32 = arith.constant 0 : i32
    %c0_i32_0 = arith.constant 0 : i32
    %c0_i32_1 = arith.constant 0 : i32
    %c0_i32_2 = arith.constant 0 : i32
    return %c0_i32, %c0_i32_0, %c0_i32_1 : i32, i32, i32
  }
  func.func @transform_6(%arg0: i32) -> (i32, i32, i32) {
    %c0_i32 = arith.constant 0 : i32
    %c0_i32_0 = arith.constant 0 : i32
    %c0_i32_1 = arith.constant 0 : i32
    %c0_i32_2 = arith.constant 0 : i32
    return %c0_i32, %c0_i32_0, %c0_i32_1 : i32, i32, i32
  }
  func.func @transform_7(%arg0: i32) -> (i32, i32, i32) {
    %c0_i32 = arith.constant 0 : i32
    %c0_i32_0 = arith.constant 0 : i32
    %c0_i32_1 = arith.constant 0 : i32
    %c0_i32_2 = arith.constant 0 : i32
    return %c0_i32, %c0_i32_0, %c0_i32_1 : i32, i32, i32
  }
  func.func @transform_8(%arg0: i32) -> (i32, i32, i32) {
    %c0_i32 = arith.constant 0 : i32
    %c0_i32_0 = arith.constant 0 : i32
    %c0_i32_1 = arith.constant 0 : i32
    %c0_i32_2 = arith.constant 0 : i32
    return %c0_i32, %c0_i32_0, %c0_i32_1 : i32, i32, i32
  }
  func.func @transform_9(%arg0: i32) -> (i32, i32) {
    %c0_i32 = arith.constant 0 : i32
    %c0_i32_0 = arith.constant 0 : i32
    %c0_i32_1 = arith.constant 0 : i32
    return %c0_i32, %c0_i32_0 : i32, i32
  }
  func.func @transform_10(%arg0: i32) -> (i32, i32) {
    %c0_i32 = arith.constant 0 : i32
    %c0_i32_0 = arith.constant 0 : i32
    %c0_i32_1 = arith.constant 0 : i32
    return %c0_i32, %c0_i32_0 : i32, i32
  }
  func.func @transform_11(%arg0: i32) -> (i32, i32) {
    %c0_i32 = arith.constant 0 : i32
    %c0_i32_0 = arith.constant 0 : i32
    %c0_i32_1 = arith.constant 0 : i32
    return %c0_i32, %c0_i32_0 : i32, i32
  }
  func.func @transform_12(%arg0: i32) -> (i32, i32) {
    %c0_i32 = arith.constant 0 : i32
    %c0_i32_0 = arith.constant 0 : i32
    %c0_i32_1 = arith.constant 0 : i32
    return %c0_i32, %c0_i32_0 : i32, i32
  }
  func.func @transform_13(%arg0: i32) -> (i32, i32) {
    %c0_i32 = arith.constant 0 : i32
    %c0_i32_0 = arith.constant 0 : i32
    %c0_i32_1 = arith.constant 0 : i32
    return %c0_i32, %c0_i32_0 : i32, i32
  }
  func.func @transform_14(%arg0: i32) -> (i32, i32) {
    %c0_i32 = arith.constant 0 : i32
    %c0_i32_0 = arith.constant 0 : i32
    %c0_i32_1 = arith.constant 0 : i32
    return %c0_i32, %c0_i32_0 : i32, i32
  }
  func.func @transform_15(%arg0: i32) -> (i32, i32) {
    %c0_i32 = arith.constant 0 : i32
    %c0_i32_0 = arith.constant 0 : i32
    %c0_i32_1 = arith.constant 0 : i32
    return %c0_i32, %c0_i32_0 : i32, i32
  }
  func.func @transform_16(%arg0: i32) -> (i32, i32) {
    %c0_i32 = arith.constant 0 : i32
    %c0_i32_0 = arith.constant 0 : i32
    %c0_i32_1 = arith.constant 0 : i32
    return %c0_i32, %c0_i32_0 : i32, i32
  }
  func.func @transform_17(%arg0: i32) -> (i32, i32, i32) {
    %c0_i32 = arith.constant 0 : i32
    %c0_i32_0 = arith.constant 0 : i32
    %c0_i32_1 = arith.constant 0 : i32
    %c0_i32_2 = arith.constant 0 : i32
    return %c0_i32, %c0_i32_0, %c0_i32_1 : i32, i32, i32
  }
  func.func @transform_18(%arg0: i32) -> (i32, i32) {
    %c0_i32 = arith.constant 0 : i32
    %c0_i32_0 = arith.constant 0 : i32
    %c0_i32_1 = arith.constant 0 : i32
    return %c0_i32, %c0_i32_0 : i32, i32
  }
  func.func @transform_19(%arg0: i32) -> (i32, i32, i32) {
    %c0_i32 = arith.constant 0 : i32
    %c0_i32_0 = arith.constant 0 : i32
    %c0_i32_1 = arith.constant 0 : i32
    return %arg0, %c0_i32, %c0_i32_0 : i32, i32, i32
  }
}

</mosaic_0001>

<llo_original>
// kernel: forward.1
$region0: #{forward.1}
  #allocation0 [shape = 'u32[]', space=smem, size = 0x4, offset = 0x4, fixed_abs, tag = 'smem constant byte address 0x4 - core index']
  #allocation1 [shape = 'u32[144,128]{1,0:T(1,128)}', space=vmem, size = 0x12000, scoped, tag = 'internal scratch']
  #allocation2 [shape = 'bf16[18,144]{1,0:T(8,128)(2,1)}', space=vmem, size = 0x3000, scoped, tag = 'scratch operand']
  #allocation3 [shape = 'bf16[10,80]{1,0:T(8,128)(2,1)}', space=vmem, size = 0x1000, scoped, tag = 'scratch operand']
  #allocation4 [shape = 'bf16[10,160]{1,0:T(8,128)(2,1)}', space=vmem, size = 0x2000, scoped, tag = 'scratch operand']
  #allocation5 [shape = 'bf16[10,160]{1,0:T(8,128)(2,1)}', space=vmem, size = 0x2000, scoped, tag = 'scratch operand']
  #allocation6 [shape = 'bf16[6,96]{1,0:T(8,128)(2,1)}', space=vmem, size = 0x800, scoped, tag = 'scratch operand']
  #allocation7 [shape = 'bf16[6,192]{1,0:T(8,128)(2,1)}', space=vmem, size = 0x1000, scoped, tag = 'scratch operand']
  #allocation8 [shape = 'bf16[4,128]{1,0:T(4,128)(2,1)}', space=vmem, size = 0x400, scoped, tag = 'scratch operand']
  %s0 = inlined_call_operand.vmem [shape: bf16[2,18,72], index: 0, kind: input, shape index: {}]
  %s1 = inlined_call_operand.hbm [shape: bf16[3,72,144], index: 1, kind: input, shape index: {}]
  %s2 = inlined_call_operand.hbm [shape: bf16[4,144,80], index: 2, kind: input, shape index: {}]
  %s3 = inlined_call_operand.hbm [shape: bf16[3,80,160], index: 3, kind: input, shape index: {}]
  %s4 = inlined_call_operand.vmem [shape: bf16[3,160,160], index: 4, kind: input, shape index: {}]
  %s5 = inlined_call_operand.hbm [shape: bf16[4,160,96], index: 5, kind: input, shape index: {}]
  %s6 = inlined_call_operand.hbm [shape: bf16[3,96,192], index: 6, kind: input, shape index: {}]
  %s7 = inlined_call_operand.hbm [shape: bf16[4,192,128], index: 7, kind: input, shape index: {}]
  %s8 = inlined_call_operand.hbm [shape: bf16[3,128,128], index: 8, kind: input, shape index: {}]
  %s9 = inlined_call_operand.vmem [shape: f32[1,144], index: 9, kind: input, shape index: {}]
  %s10 = inlined_call_operand.vmem [shape: f32[1,80], index: 10, kind: input, shape index: {}]
  %s11 = inlined_call_operand.vmem [shape: f32[1,160], index: 11, kind: input, shape index: {}]
  %s12 = inlined_call_operand.vmem [shape: f32[1,160], index: 12, kind: input, shape index: {}]
  %s13 = inlined_call_operand.vmem [shape: f32[1,96], index: 13, kind: input, shape index: {}]
  %s14 = inlined_call_operand.vmem [shape: f32[1,192], index: 14, kind: input, shape index: {}]
  %s15 = inlined_call_operand.vmem [shape: f32[1,128], index: 15, kind: input, shape index: {}]
  %s16 = inlined_call_operand.vmem [shape: f32[1,128], index: 16, kind: input, shape index: {}]
  %s17 = inlined_call_operand.hbm [shape: bf16[2,128,128], index: 17, kind: input, shape index: {}]
  %s18 = inlined_call_operand.vmem [shape: f32[1,128], index: 18, kind: input, shape index: {}]
  %s19 = inlined_call_operand.hbm [shape: f32[2,1,128], index: 19, kind: output, shape index: {}]
  %s20 = sld [smem:[#allocation0]]
  $region141: #{forward.1} parent=0
    _
  %s22 = ssub.s32 1, %s20
  %s23 = scalar_select 0, %s22, %s20
  $region1: #{forward.1} parent=0
    #allocation9 [shape = 'u8[110592]{0}', space=vmem, size = 0x1b000, scoped, tag = 'input window, operand 1, single buffered']
    #allocation10 [shape = 's32[2]{0}', space=sflag, size = 0x8, scoped, tag = 'scoped memory for forward.1']
    #allocation11 [shape = 's32[2]{0}', space=sflag, size = 0x8, scoped, tag = 'scoped memory for forward.1']
    #allocation12 [shape = 'u8[147456]{0}', space=vmem, size = 0x24000, scoped, tag = 'input window, operand 2, single buffered']
    #allocation13 [shape = 's32[1]{0}', space=sflag, size = 0x4, scoped, tag = 'scoped memory for forward.1']
    #allocation14 [shape = 'u8[122880]{0}', space=vmem, size = 0x1e000, scoped, tag = 'input window, operand 3, single buffered']
    #allocation15 [shape = 'u8[163840]{0}', space=vmem, size = 0x28000, scoped, tag = 'input window, operand 5, single buffered']
    #allocation16 [shape = 's32[1]{0}', space=sflag, size = 0x4, scoped, tag = 'scoped memory for forward.1']
    #allocation17 [shape = 'u8[147456]{0}', space=vmem, size = 0x24000, scoped, tag = 'input window, operand 6, single buffered']
    #allocation18 [shape = 'u8[196608]{0}', space=vmem, size = 0x30000, scoped, tag = 'input window, operand 7, single buffered']
    #allocation19 [shape = 's32[1]{0}', space=sflag, size = 0x4, scoped, tag = 'scoped memory for forward.1']
    #allocation20 [shape = 'u8[98304]{0}', space=vmem, size = 0x18000, scoped, tag = 'input window, operand 8, single buffered']
    #allocation21 [shape = 'u8[65536]{0}', space=vmem, size = 0x10000, scoped, tag = 'input window, operand 17, single buffered']
    #allocation22 [shape = 's32[1]{0}', space=sflag, size = 0x4, scoped, tag = 'scoped memory for forward.1']
    #allocation23 [shape = 'u8[1024]{0}', space=vmem, size = 0x400, scoped, tag = 'output window, operand 0']
    %24 = vsyncpa [#allocation10], 0
    %25 = vsyncpa [#allocation13], 0
    %26 = vsyncpa [#allocation16], 0
    %27 = vsyncpa [#allocation19], 0
    %28 = vsyncpa [#allocation22], 0
    %29 = vsyncpa [#allocation11], 0
    %s30 = scalar_lea.sflag [#allocation11], 1
    %31 = vsyncpa %s30, 0
    loop: start=0, step=1, limit=4
    $region2: #{forward.1} parent=1 // loop_pre_header
      _
    $region3: #{forward.1} parent=1 // loop_header
      %s33 = sphi 0, %s37
      %p34 = scmp.ge.s32.totalorder %s33, 4
      %s43 = sphi 0, %s45
      %s46 = sphi 0, %s43
      %s47 = sphi 0, %s46
      %s63 = sphi 0, %s47
      %s67 = sphi 0, %s67
      %s69 = sphi 0, %s67
      %s70 = sphi 0, %s69
      %s84 = sphi 0, %s70
      %s88 = sphi 0, %s88
      %s90 = sphi 0, %s88
      %s91 = sphi 0, %s90
      %s105 = sphi 0, %s91
      %s109 = sphi 0, %s109
      %s111 = sphi 0, %s109
      %s112 = sphi 0, %s111
      %s126 = sphi 0, %s112
      %s130 = sphi 0, %s130
      %s132 = sphi 0, %s130
      %s133 = sphi 0, %s132
      %s147 = sphi 0, %s133
      %s151 = sphi 0, %s151
      %s153 = sphi 0, %s151
      %s154 = sphi 0, %s153
      %s168 = sphi 0, %s154
      %s172 = sphi 0, %s172
      %s174 = sphi 0, %s172
      %s175 = sphi 0, %s174
      %s189 = sphi 0, %s175
      %s193 = sphi 0, %s193
      %s195 = sphi 0, %s193
      %s196 = sphi 0, %s195
      %s210 = sphi 0, %s196
      %s214 = sphi 0, %s214
      %s216 = sphi 0, %s214
      %s217 = sphi 0, %s216
      %s231 = sphi 0, %s217
      %s235 = sphi 0, %s235
      %s237 = sphi 0, %s235
      %s238 = sphi 0, %s237
      %s252 = sphi 0, %s238
      %s256 = sphi 0, %s256
      %s258 = sphi 0, %s256
      %s259 = sphi 0, %s258
      %s273 = sphi 0, %s259
      %s277 = sphi 0, %s277
      %s279 = sphi 0, %s277
      %s280 = sphi 0, %s279
      %s294 = sphi 0, %s280
      %s298 = sphi 0, %s298
      %s300 = sphi 0, %s298
      %s301 = sphi 0, %s300
      %s315 = sphi 0, %s301
      %s319 = sphi 0, %s319
      %s321 = sphi 0, %s319
      %s322 = sphi 0, %s321
      %s336 = sphi 0, %s322
      %s340 = sphi 0, %s340
      %s342 = sphi 0, %s340
      %s343 = sphi 0, %s342
      %s357 = sphi 0, %s343
      %s361 = sphi 0, %s361
      %s363 = sphi 0, %s361
      %s364 = sphi 0, %s363
      %s378 = sphi 0, %s364
      %s382 = sphi 0, %s382
      %s384 = sphi 0, %s382
      %s385 = sphi 0, %s384
      %s399 = sphi 0, %s385
      %s403 = sphi 0, %s403
      %s405 = sphi 0, %s403
      %s406 = sphi 0, %s405
      %s420 = sphi 0, %s406
      %s424 = sphi 0, %s424
      %s426 = sphi 0, %s424
      %s427 = sphi 0, %s426
      %s441 = sphi 0, %s427
      %s447 = sphi 0, %s449
      %s450 = sphi 0, %s447
      %s451 = sphi 0, %s450
      %s467 = sphi 0, %s451
    $region4: #{forward.1} parent=1 // loop_header_branch
      %36 = sbr.rel (%p34) target = $region8
    $region5: #{forward.1} parent=1 // loop_body
      %s38 = ssub.s32 %s33, 1
      %s39 = ssub.s32 %s33, 2
      %s40 = sadd.s32 %s33, 1
      %s41 = ssub.s32 %s33, %s40
      %p42 = scmp.eq.s32.totalorder %s41, 0
      %s44 = sadd.s32 %s43, 1
      %s45 = scalar_select %p42, %s43, %s44
      %p48 = pneg %p42
      %p49 = scmp.eq.s32.totalorder %s33, 1
      %p50 = por %p48, %p49
      %p51 = scmp.ne.s32.totalorder %s43, %s46
      %p52 = scmp.eq.s32.totalorder %s33, 0
      %p53 = por %p51, %p52
      %p54 = scmp.ne.s32.totalorder %s43, %s46
      %p55 = scmp.eq.s32.totalorder %s38, 1
      %p56 = por %p54, %p55
      %p57 = scmp.ne.s32.totalorder %s46, %s47
      %p58 = scmp.eq.s32.totalorder %s38, 0
      %p59 = por %p57, %p58
      %p60 = scmp.ne.s32.totalorder %s46, %s47
      %p61 = scmp.eq.s32.totalorder %s39, 1
      %p62 = por %p60, %p61
      %p64 = scmp.ne.s32.totalorder %s47, %s63
      %p65 = scmp.eq.s32.totalorder %s39, 0
      %p66 = por %p64, %p65
      %s68 = sadd.s32 %s67, 1
      %p71 = scmp.eq.s32.totalorder %s33, 1
      %p72 = scmp.ne.s32.totalorder %s67, %s69
      %p73 = scmp.eq.s32.totalorder %s33, 0
      %p74 = por %p72, %p73
      %p75 = scmp.ne.s32.totalorder %s67, %s69
      %p76 = scmp.eq.s32.totalorder %s38, 1
      %p77 = por %p75, %p76
      %p78 = scmp.ne.s32.totalorder %s69, %s70
      %p79 = scmp.eq.s32.totalorder %s38, 0
      %p80 = por %p78, %p79
      %p81 = scmp.ne.s32.totalorder %s69, %s70
      %p82 = scmp.eq.s32.totalorder %s39, 1
      %p83 = por %p81, %p82
      %p85 = scmp.ne.s32.totalorder %s70, %s84
      %p86 = scmp.eq.s32.totalorder %s39, 0
      %p87 = por %p85, %p86
      %s89 = sadd.s32 %s88, 1
      %p92 = scmp.eq.s32.totalorder %s33, 1
      %p93 = scmp.ne.s32.totalorder %s88, %s90
      %p94 = scmp.eq.s32.totalorder %s33, 0
      %p95 = por %p93, %p94
      %p96 = scmp.ne.s32.totalorder %s88, %s90
      %p97 = scmp.eq.s32.totalorder %s38, 1
      %p98 = por %p96, %p97
      %p99 = scmp.ne.s32.totalorder %s90, %s91
      %p100 = scmp.eq.s32.totalorder %s38, 0
      %p101 = por %p99, %p100
      %p102 = scmp.ne.s32.totalorder %s90, %s91
      %p103 = scmp.eq.s32.totalorder %s39, 1
      %p104 = por %p102, %p103
      %p106 = scmp.ne.s32.totalorder %s91, %s105
      %p107 = scmp.eq.s32.totalorder %s39, 0
      %p108 = por %p106, %p107
      %s110 = sadd.s32 %s109, 1
      %p113 = scmp.eq.s32.totalorder %s33, 1
      %p114 = scmp.ne.s32.totalorder %s109, %s111
      %p115 = scmp.eq.s32.totalorder %s33, 0
      %p116 = por %p114, %p115
      %p117 = scmp.ne.s32.totalorder %s109, %s111
      %p118 = scmp.eq.s32.totalorder %s38, 1
      %p119 = por %p117, %p118
      %p120 = scmp.ne.s32.totalorder %s111, %s112
      %p121 = scmp.eq.s32.totalorder %s38, 0
      %p122 = por %p120, %p121
      %p123 = scmp.ne.s32.totalorder %s111, %s112
      %p124 = scmp.eq.s32.totalorder %s39, 1
      %p125 = por %p123, %p124
      %p127 = scmp.ne.s32.totalorder %s112, %s126
      %p128 = scmp.eq.s32.totalorder %s39, 0
      %p129 = por %p127, %p128
      %s131 = sadd.s32 %s130, 1
      %p134 = scmp.eq.s32.totalorder %s33, 1
      %p135 = scmp.ne.s32.totalorder %s130, %s132
      %p136 = scmp.eq.s32.totalorder %s33, 0
      %p137 = por %p135, %p136
      %p138 = scmp.ne.s32.totalorder %s130, %s132
      %p139 = scmp.eq.s32.totalorder %s38, 1
      %p140 = por %p138, %p139
      %p141 = scmp.ne.s32.totalorder %s132, %s133
      %p142 = scmp.eq.s32.totalorder %s38, 0
      %p143 = por %p141, %p142
      %p144 = scmp.ne.s32.totalorder %s132, %s133
      %p145 = scmp.eq.s32.totalorder %s39, 1
      %p146 = por %p144, %p145
      %p148 = scmp.ne.s32.totalorder %s133, %s147
      %p149 = scmp.eq.s32.totalorder %s39, 0
      %p150 = por %p148, %p149
      %s152 = sadd.s32 %s151, 1
      %p155 = scmp.eq.s32.totalorder %s33, 1
      %p156 = scmp.ne.s32.totalorder %s151, %s153
      %p157 = scmp.eq.s32.totalorder %s33, 0
      %p158 = por %p156, %p157
      %p159 = scmp.ne.s32.totalorder %s151, %s153
      %p160 = scmp.eq.s32.totalorder %s38, 1
      %p161 = por %p159, %p160
      %p162 = scmp.ne.s32.totalorder %s153, %s154
      %p163 = scmp.eq.s32.totalorder %s38, 0
      %p164 = por %p162, %p163
      %p165 = scmp.ne.s32.totalorder %s153, %s154
      %p166 = scmp.eq.s32.totalorder %s39, 1
      %p167 = por %p165, %p166
      %p169 = scmp.ne.s32.totalorder %s154, %s168
      %p170 = scmp.eq.s32.totalorder %s39, 0
      %p171 = por %p169, %p170
      %s173 = sadd.s32 %s172, 1
      %p176 = scmp.eq.s32.totalorder %s33, 1
      %p177 = scmp.ne.s32.totalorder %s172, %s174
      %p178 = scmp.eq.s32.totalorder %s33, 0
      %p179 = por %p177, %p178
      %p180 = scmp.ne.s32.totalorder %s172, %s174
      %p181 = scmp.eq.s32.totalorder %s38, 1
      %p182 = por %p180, %p181
      %p183 = scmp.ne.s32.totalorder %s174, %s175
      %p184 = scmp.eq.s32.totalorder %s38, 0
      %p185 = por %p183, %p184
      %p186 = scmp.ne.s32.totalorder %s174, %s175
      %p187 = scmp.eq.s32.totalorder %s39, 1
      %p188 = por %p186, %p187
      %p190 = scmp.ne.s32.totalorder %s175, %s189
      %p191 = scmp.eq.s32.totalorder %s39, 0
      %p192 = por %p190, %p191
      %s194 = sadd.s32 %s193, 1
      %p197 = scmp.eq.s32.totalorder %s33, 1
      %p198 = scmp.ne.s32.totalorder %s193, %s195
      %p199 = scmp.eq.s32.totalorder %s33, 0
      %p200 = por %p198, %p199
      %p201 = scmp.ne.s32.totalorder %s193, %s195
      %p202 = scmp.eq.s32.totalorder %s38, 1
      %p203 = por %p201, %p202
      %p204 = scmp.ne.s32.totalorder %s195, %s196
      %p205 = scmp.eq.s32.totalorder %s38, 0
      %p206 = por %p204, %p205
      %p207 = scmp.ne.s32.totalorder %s195, %s196
      %p208 = scmp.eq.s32.totalorder %s39, 1
      %p209 = por %p207, %p208
      %p211 = scmp.ne.s32.totalorder %s196, %s210
      %p212 = scmp.eq.s32.totalorder %s39, 0
      %p213 = por %p211, %p212
      %s215 = sadd.s32 %s214, 1
      %p218 = scmp.eq.s32.totalorder %s33, 1
      %p219 = scmp.ne.s32.totalorder %s214, %s216
      %p220 = scmp.eq.s32.totalorder %s33, 0
      %p221 = por %p219, %p220
      %p222 = scmp.ne.s32.totalorder %s214, %s216
      %p223 = scmp.eq.s32.totalorder %s38, 1
      %p224 = por %p222, %p223
      %p225 = scmp.ne.s32.totalorder %s216, %s217
      %p226 = scmp.eq.s32.totalorder %s38, 0
      %p227 = por %p225, %p226
      %p228 = scmp.ne.s32.totalorder %s216, %s217
      %p229 = scmp.eq.s32.totalorder %s39, 1
      %p230 = por %p228, %p229
      %p232 = scmp.ne.s32.totalorder %s217, %s231
      %p233 = scmp.eq.s32.totalorder %s39, 0
      %p234 = por %p232, %p233
      %s236 = sadd.s32 %s235, 1
      %p239 = scmp.eq.s32.totalorder %s33, 1
      %p240 = scmp.ne.s32.totalorder %s235, %s237
      %p241 = scmp.eq.s32.totalorder %s33, 0
      %p242 = por %p240, %p241
      %p243 = scmp.ne.s32.totalorder %s235, %s237
      %p244 = scmp.eq.s32.totalorder %s38, 1
      %p245 = por %p243, %p244
      %p246 = scmp.ne.s32.totalorder %s237, %s238
      %p247 = scmp.eq.s32.totalorder %s38, 0
      %p248 = por %p246, %p247
      %p249 = scmp.ne.s32.totalorder %s237, %s238
      %p250 = scmp.eq.s32.totalorder %s39, 1
      %p251 = por %p249, %p250
      %p253 = scmp.ne.s32.totalorder %s238, %s252
      %p254 = scmp.eq.s32.totalorder %s39, 0
      %p255 = por %p253, %p254
      %s257 = sadd.s32 %s256, 1
      %p260 = scmp.eq.s32.totalorder %s33, 1
      %p261 = scmp.ne.s32.totalorder %s256, %s258
      %p262 = scmp.eq.s32.totalorder %s33, 0
      %p263 = por %p261, %p262
      %p264 = scmp.ne.s32.totalorder %s256, %s258
      %p265 = scmp.eq.s32.totalorder %s38, 1
      %p266 = por %p264, %p265
      %p267 = scmp.ne.s32.totalorder %s258, %s259
      %p268 = scmp.eq.s32.totalorder %s38, 0
      %p269 = por %p267, %p268
      %p270 = scmp.ne.s32.totalorder %s258, %s259
      %p271 = scmp.eq.s32.totalorder %s39, 1
      %p272 = por %p270, %p271
      %p274 = scmp.ne.s32.totalorder %s259, %s273
      %p275 = scmp.eq.s32.totalorder %s39, 0
      %p276 = por %p274, %p275
      %s278 = sadd.s32 %s277, 1
      %p281 = scmp.eq.s32.totalorder %s33, 1
      %p282 = scmp.ne.s32.totalorder %s277, %s279
      %p283 = scmp.eq.s32.totalorder %s33, 0
      %p284 = por %p282, %p283
      %p285 = scmp.ne.s32.totalorder %s277, %s279
      %p286 = scmp.eq.s32.totalorder %s38, 1
      %p287 = por %p285, %p286
      %p288 = scmp.ne.s32.totalorder %s279, %s280
      %p289 = scmp.eq.s32.totalorder %s38, 0
      %p290 = por %p288, %p289
      %p291 = scmp.ne.s32.totalorder %s279, %s280
      %p292 = scmp.eq.s32.totalorder %s39, 1
      %p293 = por %p291, %p292
      %p295 = scmp.ne.s32.totalorder %s280, %s294
      %p296 = scmp.eq.s32.totalorder %s39, 0
      %p297 = por %p295, %p296
      %s299 = sadd.s32 %s298, 1
      %p302 = scmp.eq.s32.totalorder %s33, 1
      %p303 = scmp.ne.s32.totalorder %s298, %s300
      %p304 = scmp.eq.s32.totalorder %s33, 0
      %p305 = por %p303, %p304
      %p306 = scmp.ne.s32.totalorder %s298, %s300
      %p307 = scmp.eq.s32.totalorder %s38, 1
      %p308 = por %p306, %p307
      %p309 = scmp.ne.s32.totalorder %s300, %s301
      %p310 = scmp.eq.s32.totalorder %s38, 0
      %p311 = por %p309, %p310
      %p312 = scmp.ne.s32.totalorder %s300, %s301
      %p313 = scmp.eq.s32.totalorder %s39, 1
      %p314 = por %p312, %p313
      %p316 = scmp.ne.s32.totalorder %s301, %s315
      %p317 = scmp.eq.s32.totalorder %s39, 0
      %p318 = por %p316, %p317
      %s320 = sadd.s32 %s319, 1
      %p323 = scmp.eq.s32.totalorder %s33, 1
      %p324 = scmp.ne.s32.totalorder %s319, %s321
      %p325 = scmp.eq.s32.totalorder %s33, 0
      %p326 = por %p324, %p325
      %p327 = scmp.ne.s32.totalorder %s319, %s321
      %p328 = scmp.eq.s32.totalorder %s38, 1
      %p329 = por %p327, %p328
      %p330 = scmp.ne.s32.totalorder %s321, %s322
      %p331 = scmp.eq.s32.totalorder %s38, 0
      %p332 = por %p330, %p331
      %p333 = scmp.ne.s32.totalorder %s321, %s322
      %p334 = scmp.eq.s32.totalorder %s39, 1
      %p335 = por %p333, %p334
      %p337 = scmp.ne.s32.totalorder %s322, %s336
      %p338 = scmp.eq.s32.totalorder %s39, 0
      %p339 = por %p337, %p338
      %s341 = sadd.s32 %s340, 1
      %p344 = scmp.eq.s32.totalorder %s33, 1
      %p345 = scmp.ne.s32.totalorder %s340, %s342
      %p346 = scmp.eq.s32.totalorder %s33, 0
      %p347 = por %p345, %p346
      %p348 = scmp.ne.s32.totalorder %s340, %s342
      %p349 = scmp.eq.s32.totalorder %s38, 1
      %p350 = por %p348, %p349
      %p351 = scmp.ne.s32.totalorder %s342, %s343
      %p352 = scmp.eq.s32.totalorder %s38, 0
      %p353 = por %p351, %p352
      %p354 = scmp.ne.s32.totalorder %s342, %s343
      %p355 = scmp.eq.s32.totalorder %s39, 1
      %p356 = por %p354, %p355
      %p358 = scmp.ne.s32.totalorder %s343, %s357
      %p359 = scmp.eq.s32.totalorder %s39, 0
      %p360 = por %p358, %p359
      %s362 = sadd.s32 %s361, 1
      %p365 = scmp.eq.s32.totalorder %s33, 1
      %p366 = scmp.ne.s32.totalorder %s361, %s363
      %p367 = scmp.eq.s32.totalorder %s33, 0
      %p368 = por %p366, %p367
      %p369 = scmp.ne.s32.totalorder %s361, %s363
      %p370 = scmp.eq.s32.totalorder %s38, 1
      %p371 = por %p369, %p370
      %p372 = scmp.ne.s32.totalorder %s363, %s364
      %p373 = scmp.eq.s32.totalorder %s38, 0
      %p374 = por %p372, %p373
      %p375 = scmp.ne.s32.totalorder %s363, %s364
      %p376 = scmp.eq.s32.totalorder %s39, 1
      %p377 = por %p375, %p376
      %p379 = scmp.ne.s32.totalorder %s364, %s378
      %p380 = scmp.eq.s32.totalorder %s39, 0
      %p381 = por %p379, %p380
      %s383 = sadd.s32 %s382, 1
      %p386 = scmp.eq.s32.totalorder %s33, 1
      %p387 = scmp.ne.s32.totalorder %s382, %s384
      %p388 = scmp.eq.s32.totalorder %s33, 0
      %p389 = por %p387, %p388
      %p390 = scmp.ne.s32.totalorder %s382, %s384
      %p391 = scmp.eq.s32.totalorder %s38, 1
      %p392 = por %p390, %p391
      %p393 = scmp.ne.s32.totalorder %s384, %s385
      %p394 = scmp.eq.s32.totalorder %s38, 0
      %p395 = por %p393, %p394
      %p396 = scmp.ne.s32.totalorder %s384, %s385
      %p397 = scmp.eq.s32.totalorder %s39, 1
      %p398 = por %p396, %p397
      %p400 = scmp.ne.s32.totalorder %s385, %s399
      %p401 = scmp.eq.s32.totalorder %s39, 0
      %p402 = por %p400, %p401
      %s404 = sadd.s32 %s403, 1
      %p407 = scmp.eq.s32.totalorder %s33, 1
      %p408 = scmp.ne.s32.totalorder %s403, %s405
      %p409 = scmp.eq.s32.totalorder %s33, 0
      %p410 = por %p408, %p409
      %p411 = scmp.ne.s32.totalorder %s403, %s405
      %p412 = scmp.eq.s32.totalorder %s38, 1
      %p413 = por %p411, %p412
      %p414 = scmp.ne.s32.totalorder %s405, %s406
      %p415 = scmp.eq.s32.totalorder %s38, 0
      %p416 = por %p414, %p415
      %p417 = scmp.ne.s32.totalorder %s405, %s406
      %p418 = scmp.eq.s32.totalorder %s39, 1
      %p419 = por %p417, %p418
      %p421 = scmp.ne.s32.totalorder %s406, %s420
      %p422 = scmp.eq.s32.totalorder %s39, 0
      %p423 = por %p421, %p422
      %s425 = sadd.s32 %s424, 1
      %p428 = scmp.eq.s32.totalorder %s33, 1
      %p429 = scmp.ne.s32.totalorder %s424, %s426
      %p430 = scmp.eq.s32.totalorder %s33, 0
      %p431 = por %p429, %p430
      %p432 = scmp.ne.s32.totalorder %s424, %s426
      %p433 = scmp.eq.s32.totalorder %s38, 1
      %p434 = por %p432, %p433
      %p435 = scmp.ne.s32.totalorder %s426, %s427
      %p436 = scmp.eq.s32.totalorder %s38, 0
      %p437 = por %p435, %p436
      %p438 = scmp.ne.s32.totalorder %s426, %s427
      %p439 = scmp.eq.s32.totalorder %s39, 1
      %p440 = por %p438, %p439
      %p442 = scmp.ne.s32.totalorder %s427, %s441
      %p443 = scmp.eq.s32.totalorder %s39, 0
      %p444 = por %p442, %p443
      %s445 = ssub.s32 %s33, %s40
      %p446 = scmp.eq.s32.totalorder %s445, 0
      %s448 = sadd.s32 %s447, 1
      %s449 = scalar_select %p446, %s447, %s448
      %p452 = pneg %p446
      %p453 = scmp.eq.s32.totalorder %s33, 1
      %p454 = por %p452, %p453
      %p455 = scmp.ne.s32.totalorder %s447, %s450
      %p456 = scmp.eq.s32.totalorder %s33, 0
      %p457 = por %p455, %p456
      %p458 = scmp.ne.s32.totalorder %s447, %s450
      %p459 = scmp.eq.s32.totalorder %s38, 1
      %p460 = por %p458, %p459
      %p461 = scmp.ne.s32.totalorder %s450, %s451
      %p462 = scmp.eq.s32.totalorder %s38, 0
      %p463 = por %p461, %p462
      %p464 = scmp.ne.s32.totalorder %s450, %s451
      %p465 = scmp.eq.s32.totalorder %s39, 1
      %p466 = por %p464, %p465
      %p468 = scmp.ne.s32.totalorder %s451, %s467
      %p469 = scmp.eq.s32.totalorder %s39, 0
      %p470 = por %p468, %p469
      %p471 = scmp.le.s32.totalorder 1, %s33
      %p472 = scmp.lt.s32.totalorder %s33, 3
      %p473 = pnand %p471, %p472
      %p474 = pneg %p473
      // Predicated region
      $region9: #{forward.1} parent=5 // pred_check
        _
      $region10: #{forward.1} parent=5 // pred_check_branch
        %476 = sbr.rel (%p473) target = $region12
      $region11: #{forward.1} parent=5 // pred_region
        %s477 = ssub.s32 %s33, 1
        // Predicated region
        $region13: #{forward.1} parent=11 // pred_check
          %p478 = pneg %p80
        $region14: #{forward.1} parent=11 // pred_check_branch
          %480 = sbr.rel (%p478) target = $region16
        $region15: #{forward.1} parent=11 // pred_region
          %s482 = ssub.s32 3456, 3456
          %483 = vsyncadd [#allocation10], %s482
          %s484 = sshll.u32 [#allocation9], 4
          %s485 = int_to_ptr.vmem [resolvable:$true] %s484
          %490 = dma.hbm_to_vmem [thread:$0]  %s1, 3456, %s485, [#allocation10], 128, 128, 8
        $region16: #{forward.1} parent=11 // pred_fallthru
          _
        // Predicated region
        $region17: #{forward.1} parent=11 // pred_check
          %p491 = pneg %p101
        $region18: #{forward.1} parent=11 // pred_check_branch
          %493 = sbr.rel (%p491) target = $region20
        $region19: #{forward.1} parent=11 // pred_region
          %s495 = ssub.s32 4608, 4608
          %496 = vsyncadd [#allocation13], %s495
          %s497 = sshll.u32 [#allocation12], 4
          %s498 = int_to_ptr.vmem [resolvable:$true] %s497
          %503 = dma.hbm_to_vmem [thread:$0]  %s2, 4608, %s498, [#allocation13], 64, 64, 4
        $region20: #{forward.1} parent=11 // pred_fallthru
          _
        // Predicated region
        $region21: #{forward.1} parent=11 // pred_check
          %p504 = pneg %p122
        $region22: #{forward.1} parent=11 // pred_check_branch
          %506 = sbr.rel (%p504) target = $region24
        $region23: #{forward.1} parent=11 // pred_region
          %s508 = ssub.s32 3840, 3840
          %509 = vsyncadd [#allocation13], %s508
          %s510 = sshll.u32 [#allocation14], 4
          %s511 = int_to_ptr.vmem [resolvable:$true] %s510
          %516 = dma.hbm_to_vmem [thread:$0]  %s3, 3840, %s511, [#allocation13], 128, 128, 8
        $region24: #{forward.1} parent=11 // pred_fallthru
          _
        // Predicated region
        $region25: #{forward.1} parent=11 // pred_check
          %p517 = pneg %p143
        $region26: #{forward.1} parent=11 // pred_check_branch
          %519 = sbr.rel (%p517) target = $region28
        $region27: #{forward.1} parent=11 // pred_region
          _
        $region28: #{forward.1} parent=11 // pred_fallthru
          _
        // Predicated region
        $region29: #{forward.1} parent=11 // pred_check
          %p520 = pneg %p164
        $region30: #{forward.1} parent=11 // pred_check_branch
          %522 = sbr.rel (%p520) target = $region32
        $region31: #{forward.1} parent=11 // pred_region
          %s524 = ssub.s32 5120, 5120
          %525 = vsyncadd [#allocation16], %s524
          %s526 = sshll.u32 [#allocation15], 4
          %s527 = int_to_ptr.vmem [resolvable:$true] %s526
          %532 = dma.hbm_to_vmem [thread:$0]  %s5, 5120, %s527, [#allocation16], 64, 64, 4
        $region32: #{forward.1} parent=11 // pred_fallthru
          _
        // Predicated region
        $region33: #{forward.1} parent=11 // pred_check
          %p533 = pneg %p185
        $region34: #{forward.1} parent=11 // pred_check_branch
          %535 = sbr.rel (%p533) target = $region36
        $region35: #{forward.1} parent=11 // pred_region
          %s537 = ssub.s32 4608, 4608
          %538 = vsyncadd [#allocation16], %s537
          %s539 = sshll.u32 [#allocation17], 4
          %s540 = int_to_ptr.vmem [resolvable:$true] %s539
          %545 = dma.hbm_to_vmem [thread:$0]  %s6, 4608, %s540, [#allocation16], 128, 128, 8
        $region36: #{forward.1} parent=11 // pred_fallthru
          _
        // Predicated region
        $region37: #{forward.1} parent=11 // pred_check
          %p546 = pneg %p206
        $region38: #{forward.1} parent=11 // pred_check_branch
          %548 = sbr.rel (%p546) target = $region40
        $region39: #{forward.1} parent=11 // pred_region
          %s550 = ssub.s32 6144, 6144
          %551 = vsyncadd [#allocation19], %s550
          %s552 = sshll.u32 [#allocation18], 4
          %s553 = int_to_ptr.vmem [resolvable:$true] %s552
          %558 = dma.hbm_to_vmem [thread:$0]  %s7, 6144, %s553, [#allocation19], 64, 64, 4
        $region40: #{forward.1} parent=11 // pred_fallthru
          _
        // Predicated region
        $region41: #{forward.1} parent=11 // pred_check
          %p559 = pneg %p227
        $region42: #{forward.1} parent=11 // pred_check_branch
          %561 = sbr.rel (%p559) target = $region44
        $region43: #{forward.1} parent=11 // pred_region
          %s563 = ssub.s32 3072, 3072
          %564 = vsyncadd [#allocation19], %s563
          %s565 = sshll.u32 [#allocation20], 4
          %s566 = int_to_ptr.vmem [resolvable:$true] %s565
          %571 = dma.hbm_to_vmem [thread:$0]  %s8, 3072, %s566, [#allocation19], 64, 64, 4
        $region44: #{forward.1} parent=11 // pred_fallthru
          _
        // Predicated region
        $region45: #{forward.1} parent=11 // pred_check
          %p572 = pneg %p248
        $region46: #{forward.1} parent=11 // pred_check_branch
          %574 = sbr.rel (%p572) target = $region48
        $region47: #{forward.1} parent=11 // pred_region
          _
        $region48: #{forward.1} parent=11 // pred_fallthru
          _
        // Predicated region
        $region49: #{forward.1} parent=11 // pred_check
          %p575 = pneg %p269
        $region50: #{forward.1} parent=11 // pred_check_branch
          %577 = sbr.rel (%p575) target = $region52
        $region51: #{forward.1} parent=11 // pred_region
          _
        $region52: #{forward.1} parent=11 // pred_fallthru
          _
        // Predicated region
        $region53: #{forward.1} parent=11 // pred_check
          %p578 = pneg %p290
        $region54: #{forward.1} parent=11 // pred_check_branch
          %580 = sbr.rel (%p578) target = $region56
        $region55: #{forward.1} parent=11 // pred_region
          _
        $region56: #{forward.1} parent=11 // pred_fallthru
          _
        // Predicated region
        $region57: #{forward.1} parent=11 // pred_check
          %p581 = pneg %p311
        $region58: #{forward.1} parent=11 // pred_check_branch
          %583 = sbr.rel (%p581) target = $region60
        $region59: #{forward.1} parent=11 // pred_region
          _
        $region60: #{forward.1} parent=11 // pred_fallthru
          _
        // Predicated region
        $region61: #{forward.1} parent=11 // pred_check
          %p584 = pneg %p332
        $region62: #{forward.1} parent=11 // pred_check_branch
          %586 = sbr.rel (%p584) target = $region64
        $region63: #{forward.1} parent=11 // pred_region
          _
        $region64: #{forward.1} parent=11 // pred_fallthru
          _
        // Predicated region
        $region65: #{forward.1} parent=11 // pred_check
          %p587 = pneg %p353
        $region66: #{forward.1} parent=11 // pred_check_branch
          %589 = sbr.rel (%p587) target = $region68
        $region67: #{forward.1} parent=11 // pred_region
          _
        $region68: #{forward.1} parent=11 // pred_fallthru
          _
        // Predicated region
        $region69: #{forward.1} parent=11 // pred_check
          %p590 = pneg %p374
        $region70: #{forward.1} parent=11 // pred_check_branch
          %592 = sbr.rel (%p590) target = $region72
        $region71: #{forward.1} parent=11 // pred_region
          _
        $region72: #{forward.1} parent=11 // pred_fallthru
          _
        // Predicated region
        $region73: #{forward.1} parent=11 // pred_check
          %p593 = pneg %p395
        $region74: #{forward.1} parent=11 // pred_check_branch
          %595 = sbr.rel (%p593) target = $region76
        $region75: #{forward.1} parent=11 // pred_region
          _
        $region76: #{forward.1} parent=11 // pred_fallthru
          _
        // Predicated region
        $region77: #{forward.1} parent=11 // pred_check
          %p596 = pneg %p416
        $region78: #{forward.1} parent=11 // pred_check_branch
          %598 = sbr.rel (%p596) target = $region80
        $region79: #{forward.1} parent=11 // pred_region
          %s600 = ssub.s32 2048, 2048
          %601 = vsyncadd [#allocation22], %s600
          %s602 = sshll.u32 [#allocation21], 4
          %s603 = int_to_ptr.vmem [resolvable:$true] %s602
          %608 = dma.hbm_to_vmem [thread:$0]  %s17, 2048, %s603, [#allocation22], 64, 64, 4
        $region80: #{forward.1} parent=11 // pred_fallthru
          _
        // Predicated region
        $region81: #{forward.1} parent=11 // pred_check
          %p609 = pneg %p437
        $region82: #{forward.1} parent=11 // pred_check_branch
          %611 = sbr.rel (%p609) target = $region84
        $region83: #{forward.1} parent=11 // pred_region
          _
        $region84: #{forward.1} parent=11 // pred_fallthru
          _
      $region12: #{forward.1} parent=5 // pred_fallthru
        _
      %p612 = scmp.lt.s32.totalorder %s33, 2
      // Predicated region
      $region85: #{forward.1} parent=5 // pred_check
        %p613 = pneg %p612
      $region86: #{forward.1} parent=5 // pred_check_branch
        %615 = sbr.rel (%p613) target = $region88
      $region87: #{forward.1} parent=5 // pred_region
        // Predicated region
        $region89: #{forward.1} parent=87 // pred_check
          %p616 = pneg %p53
        $region90: #{forward.1} parent=87 // pred_check_branch
          %618 = sbr.rel (%p616) target = $region92
        $region91: #{forward.1} parent=87 // pred_region
          %p619 = scmp.lt.s32.totalorder %s33, 1
          %s620 = scalar_select %p619, %s33, 1
          %s621 = smul.addr %s620, 3
          %s622 = smul.addr %s621, 4
          %s623 = scalar_lea.vmem %s0, %s622
        $region92: #{forward.1} parent=87 // pred_fallthru
          _
      $region88: #{forward.1} parent=5 // pred_fallthru
        _
      %p624 = scmp.le.s32.totalorder 1, %s33
      %p625 = scmp.lt.s32.totalorder %s33, 3
      %p626 = pnand %p624, %p625
      %p627 = pneg %p626
      // Predicated region
      $region93: #{forward.1} parent=5 // pred_check
        _
      $region94: #{forward.1} parent=5 // pred_check_branch
        %629 = sbr.rel (%p626) target = $region96
      $region95: #{forward.1} parent=5 // pred_region
        %s630 = ssub.s32 %s33, 1
        // Predicated region
        $region97: #{forward.1} parent=95 // pred_check
          %p631 = pneg %p80
        $region98: #{forward.1} parent=95 // pred_check_branch
          %633 = sbr.rel (%p631) target = $region100
        $region99: #{forward.1} parent=95 // pred_region
          %634 = dma.done [#allocation10], 3456
        $region100: #{forward.1} parent=95 // pred_fallthru
          _
        // Predicated region
        $region101: #{forward.1} parent=95 // pred_check
          %p635 = pneg %p101
        $region102: #{forward.1} parent=95 // pred_check_branch
          %637 = sbr.rel (%p635) target = $region104
        $region103: #{forward.1} parent=95 // pred_region
          %638 = dma.done [#allocation13], 4608
        $region104: #{forward.1} parent=95 // pred_fallthru
          _
        // Predicated region
        $region105: #{forward.1} parent=95 // pred_check
          %p639 = pneg %p122
        $region106: #{forward.1} parent=95 // pred_check_branch
          %641 = sbr.rel (%p639) target = $region108
        $region107: #{forward.1} parent=95 // pred_region
          %642 = dma.done [#allocation13], 3840
        $region108: #{forward.1} parent=95 // pred_fallthru
          _
        // Predicated region
        $region109: #{forward.1} parent=95 // pred_check
          %p643 = pneg %p164
        $region110: #{forward.1} parent=95 // pred_check_branch
          %645 = sbr.rel (%p643) target = $region112
        $region111: #{forward.1} parent=95 // pred_region
          %646 = dma.done [#allocation16], 5120
        $region112: #{forward.1} parent=95 // pred_fallthru
          _
        // Predicated region
        $region113: #{forward.1} parent=95 // pred_check
          %p647 = pneg %p185
        $region114: #{forward.1} parent=95 // pred_check_branch
          %649 = sbr.rel (%p647) target = $region116
        $region115: #{forward.1} parent=95 // pred_region
          %650 = dma.done [#allocation16], 4608
        $region116: #{forward.1} parent=95 // pred_fallthru
          _
        // Predicated region
        $region117: #{forward.1} parent=95 // pred_check
          %p651 = pneg %p206
        $region118: #{forward.1} parent=95 // pred_check_branch
          %653 = sbr.rel (%p651) target = $region120
        $region119: #{forward.1} parent=95 // pred_region
          %654 = dma.done [#allocation19], 6144
        $region120: #{forward.1} parent=95 // pred_fallthru
          _
        // Predicated region
        $region121: #{forward.1} parent=95 // pred_check
          %p655 = pneg %p227
        $region122: #{forward.1} parent=95 // pred_check_branch
          %657 = sbr.rel (%p655) target = $region124
        $region123: #{forward.1} parent=95 // pred_region
          %658 = dma.done [#allocation19], 3072
        $region124: #{forward.1} parent=95 // pred_fallthru
          _
        // Predicated region
        $region125: #{forward.1} parent=95 // pred_check
          %p659 = pneg %p416
        $region126: #{forward.1} parent=95 // pred_check_branch
          %661 = sbr.rel (%p659) target = $region128
        $region127: #{forward.1} parent=95 // pred_region
          %662 = dma.done [#allocation22], 2048
        $region128: #{forward.1} parent=95 // pred_fallthru
          _
        %p663 = scmp.lt.s32.totalorder %s38, 1
        %s664 = scalar_select %p663, %s38, 1
        %s665 = smul.addr %s664, 3
        %s666 = smul.addr %s665, 4
        %s667 = scalar_lea.vmem %s0, %s666
        %p668 = pneg %p59
        %p669 = pneg %p56
        %p670 = pneg %p80
        %p671 = pneg %p77
        %p672 = pneg %p101
        %p673 = pneg %p98
        %p674 = pneg %p122
        %p675 = pneg %p119
        %p676 = pneg %p143
        %p677 = pneg %p140
        %p678 = pneg %p164
        %p679 = pneg %p161
        %p680 = pneg %p185
        %p681 = pneg %p182
        %p682 = pneg %p206
        %p683 = pneg %p203
        %p684 = pneg %p227
        %p685 = pneg %p224
        %p686 = pneg %p248
        %p687 = pneg %p245
        %p688 = pneg %p269
        %p689 = pneg %p266
        %p690 = pneg %p290
        %p691 = pneg %p287
        %p692 = pneg %p311
        %p693 = pneg %p308
        %p694 = pneg %p332
        %p695 = pneg %p329
        %p696 = pneg %p353
        %p697 = pneg %p350
        %p698 = pneg %p374
        %p699 = pneg %p371
        %p700 = pneg %p395
        %p701 = pneg %p392
        %p702 = pneg %p416
        %p703 = pneg %p413
        %p704 = pneg %p437
        %p705 = pneg %p434
        %p706 = pneg %p463
        %p707 = pneg %p460
        %s708 = sand.u32 %s450, 1
        %s709 = scalar_lea.sflag [#allocation11], %s708
        %s710 = sand.u32 %s450, 1
        %s711 = scalar_lea.vmem [#allocation23], %s710
        %p712 = scmp.lt.s32.totalorder %s38, 1
        %s713 = scalar_select %p712, %s38, 1
        %s714 = smul.addr %s713, 3
        %s715 = smul.addr %s714, 4
        %s716 = scalar_lea.vmem %s0, %s715
        %vm718 = vcmask 1043456
        %vm719 = vcmask 130052
        %vm720 = vmor %vm719, %vm718
        %721 = vst.msk [vmem:[#allocation2] sm:$0xff] %vm720, 0
        %722 = vst.msk [vmem:[#allocation2 + $0x8] sm:$0xff] %vm720, 0
        %vm723 = vcmask 1040384
        %vm724 = vcmask 126980
        %vm725 = vmor %vm724, %vm723
        %726 = vst.msk [vmem:[#allocation2 + $0x10] sm:$0x11] %vm725, 0
        %vm727 = vcmask 650240
        %728 = vst.msk [vmem:[#allocation3] sm:$0xf] %vm727, 0
        %vm729 = vcmask 647168
        %730 = vst.msk [vmem:[#allocation3 + $0x4] sm:$0x1] %vm729, 0
        %vm731 = vcmask 261124
        %vm732 = vmor %vm731, %vm718
        %733 = vst.msk [vmem:[#allocation4] sm:$0xff] %vm732, 0
        %vm734 = vcmask 258052
        %vm735 = vmor %vm734, %vm723
        %736 = vst.msk [vmem:[#allocation4 + $0x8] sm:$0x11] %vm735, 0
        %737 = vst.msk [vmem:[#allocation5] sm:$0xff] %vm732, 0
        %738 = vst.msk [vmem:[#allocation5 + $0x8] sm:$0x11] %vm735, 0
        %vm739 = vcmask 780288
        %740 = vst.msk [vmem:[#allocation6] sm:$0x7] %vm739, 0
        %vm741 = vcmask 1042432
        %vm742 = vcmask 522244
        %vm743 = vmor %vm742, %vm741
        %744 = vst.msk [vmem:[#allocation7] sm:$0x77] %vm743, 0
        %745 = vst [vmem:[#allocation8] sm:$0x3] 0
        %v746 = vld [vmem:[%s716] sm:$0xf]
        %v747 = vld [vmem:[%s716 + $0x4] sm:$0xf]
        %v748 = vld [vmem:[#allocation9] sm:$0xff]
        %v749 = vld [vmem:[#allocation9 + $0x8] sm:$0xff]
        %v750 = vld [vmem:[#allocation9 + $0x10] sm:$0xff]
        %v751 = vld [vmem:[#allocation9 + $0x18] sm:$0xff]
        %v752 = vld [vmem:[#allocation9 + $0x20] sm:$0xff]
        %v753 = vld [vmem:[#allocation9 + $0x28] sm:$0xff]
        %v754 = vld [vmem:[#allocation9 + $0x30] sm:$0xff]
        %v755 = vld [vmem:[#allocation9 + $0x38] sm:$0xff]
        %v756 = vld [vmem:[#allocation9 + $0x40] sm:$0xff]
        %v757 = vld [vmem:[%s716 + $0x8] sm:$0x1]
        %s758 = scalar_lea.vmem [#allocation9], 72
        %v759 = vld [vmem:[%s758] sm:$0xff]
        %v760 = vld [vmem:[%s758 + $0x8] sm:$0xff]
        %v761 = vld [vmem:[%s758 + $0x10] sm:$0xff]
        %v762 = vld [vmem:[%s758 + $0x18] sm:$0xff]
        %v763 = vld [vmem:[%s758 + $0x20] sm:$0xff]
        %v764 = vld [vmem:[%s758 + $0x28] sm:$0xff]
        %v765 = vld [vmem:[%s758 + $0x30] sm:$0xff]
        %v766 = vld [vmem:[%s758 + $0x38] sm:$0xff]
        %v767 = vld [vmem:[%s758 + $0x40] sm:$0xff]
        %v771 = vunpack.c.l.b16 %v746
        %v772 = vunpack.c.l.b16 %v747
        %v773 = vunpack.c.l.b16 %v757
        %v774 = vpack.c.b16 %v772, %v771
        %v775 = vpack.c.b16 %v773, %v773
        %vm776 = vsmask.f32 7424
        %v778 = vshrl.u32 %v774, 16
        %v780 = vshll.u32 %v774, 16
        %v782 = vrot.slane %v780, 1
        %v783 = vor.u32 %v778, %v782
        %v785 = vshll.u32 %v775, 16
        %v787 = vrot.slane %v785, 1
        %v788 = vsel %vm776, %v783, %v787
        %v798 = vunpack.c.l.b16 %v759
        %v799 = vunpack.c.h.b16 %v759
        %v800 = vunpack.c.l.b16 %v760
        %v801 = vunpack.c.h.b16 %v760
        %v802 = vunpack.c.l.b16 %v761
        %v803 = vunpack.c.h.b16 %v761
        %v804 = vunpack.c.l.b16 %v762
        %v805 = vunpack.c.h.b16 %v762
        %v806 = vunpack.c.l.b16 %v763
        %v807 = vunpack.c.h.b16 %v763
        %v808 = vunpack.c.l.b16 %v764
        %v809 = vunpack.c.h.b16 %v764
        %v810 = vunpack.c.l.b16 %v765
        %v811 = vunpack.c.h.b16 %v765
        %v812 = vunpack.c.l.b16 %v766
        %v813 = vunpack.c.h.b16 %v766
        %v814 = vunpack.c.l.b16 %v767
        %v815 = vunpack.c.h.b16 %v767
        %v816 = vpack.c.b16 %v800, %v798
        %v817 = vpack.c.b16 %v801, %v799
        %v818 = vpack.c.b16 %v804, %v802
        %v819 = vpack.c.b16 %v805, %v803
        %v820 = vpack.c.b16 %v808, %v806
        %v821 = vpack.c.b16 %v809, %v807
        %v822 = vpack.c.b16 %v812, %v810
        %v823 = vpack.c.b16 %v813, %v811
        %v824 = vpack.c.b16 %v814, %v814
        %v825 = vpack.c.b16 %v815, %v815
        %vm834 = vcmask 588800
        %v836 = vsel %vm834, %v788, 0
        %v839 = vsel %vm718, %v824, 0
        %v842 = vsel %vm718, %v825, 0
        %844 = vmatprep.subr.bf16.mxu0 0
        %845 = vmatpush1.bf16.msra.mxu0 0
        %846 = vmatprep.subr.bf16.mxu0 0
        %847 = vmatpush1.bf16.msra.mxu0 0
        %848 = vmatprep.subr.bf16.mxu0 0
        %849 = vmatpush1.bf16.msra.mxu0 0
        %850 = vmatprep.subr.bf16.mxu0 %v842
        %851 = vmatpush1.bf16.msra.mxu0 %v839
        %852 = vmatprep.subr.bf16.mxu0 %v823
        %853 = vmatpush1.bf16.msra.mxu0 %v822
        %854 = vmatprep.subr.bf16.mxu0 %v821
        %855 = vmatpush1.bf16.msra.mxu0 %v820
        %856 = vmatprep.subr.bf16.mxu0 %v819
        %857 = vmatpush1.bf16.msra.mxu0 %v818
        %858 = vmatprep.subr.bf16.mxu0 %v817
        %859 = vmatpush1.bf16.msra.mxu0 %v816
        %860 = vmatprep.subr.bf16.mxu0 0
        %861 = vmatpush2.bf16.msra.mxu0 0
        %862 = vmatprep.subr.bf16.mxu0 0
        %863 = vmatpush2.bf16.msra.mxu0 0
        %864 = vmatprep.subr.bf16.mxu0 0
        %865 = vmatpush2.bf16.msra.mxu0 0
        %866 = vmatprep.subr.bf16.mxu0 0
        %867 = vmatpush2.bf16.msra.mxu0 0
        %868 = vmatprep.subr.bf16.mxu0 0
        %869 = vmatpush2.bf16.msra.mxu0 0
        %870 = vmatprep.subr.bf16.mxu0 0
        %871 = vmatpush2.bf16.msra.mxu0 0
        %872 = vmatprep.subr.bf16.mxu0 0
        %873 = vmatpush2.bf16.msra.mxu0 0
        %874 = vmatprep.subr.bf16.mxu0 0
        %875 = vmatpush2.bf16.msra.mxu0 0
        %876 = vmatprep.mubr.bf16.mxu0 0
        %877 = vmatmul.mubr.bf16.gmra.mxu0 %v836
        %v878 = vpop.f32.mrf.mxu0
        %v879 = vadd.f32 0.0, %v878
        %v880 = vpop.f32.mrf.mxu0
        %v881 = vadd.f32 0.0, %v880
        %v882 = vpop.f32.mrf.mxu0
        %v883 = vadd.f32 0.0, %v882
        %v884 = vpop.f32.mrf.mxu0
        %v885 = vadd.f32 0.0, %v884
        %886 = vdwg.mxu0
        %v896 = vunpack.c.l.b16 %v748
        %v897 = vunpack.c.h.b16 %v748
        %v898 = vunpack.c.l.b16 %v749
        %v899 = vunpack.c.h.b16 %v749
        %v900 = vunpack.c.l.b16 %v750
        %v901 = vunpack.c.h.b16 %v750
        %v902 = vunpack.c.l.b16 %v751
        %v903 = vunpack.c.h.b16 %v751
        %v904 = vunpack.c.l.b16 %v752
        %v905 = vunpack.c.h.b16 %v752
        %v906 = vunpack.c.l.b16 %v753
        %v907 = vunpack.c.h.b16 %v753
        %v908 = vunpack.c.l.b16 %v754
        %v909 = vunpack.c.h.b16 %v754
        %v910 = vunpack.c.l.b16 %v755
        %v911 = vunpack.c.h.b16 %v755
        %v912 = vunpack.c.l.b16 %v756
        %v913 = vunpack.c.h.b16 %v756
        %v914 = vpack.c.b16 %v898, %v896
        %v915 = vpack.c.b16 %v899, %v897
        %v916 = vpack.c.b16 %v902, %v900
        %v917 = vpack.c.b16 %v903, %v901
        %v918 = vpack.c.b16 %v906, %v904
        %v919 = vpack.c.b16 %v907, %v905
        %v920 = vpack.c.b16 %v910, %v908
        %v921 = vpack.c.b16 %v911, %v909
        %v922 = vpack.c.b16 %v912, %v912
        %v923 = vpack.c.b16 %v913, %v913
        %v932 = vsel %vm834, %v774, 0
        %v935 = vsel %vm718, %v922, 0
        %v938 = vsel %vm718, %v923, 0
        %940 = vmatprep.subr.bf16.mxu0 0
        %941 = vmatpush1.bf16.msra.mxu0 0
        %942 = vmatprep.subr.bf16.mxu0 0
        %943 = vmatpush1.bf16.msra.mxu0 0
        %944 = vmatprep.subr.bf16.mxu0 0
        %945 = vmatpush1.bf16.msra.mxu0 0
        %946 = vmatprep.subr.bf16.mxu0 %v938
        %947 = vmatpush1.bf16.msra.mxu0 %v935
        %948 = vmatprep.subr.bf16.mxu0 %v921
        %949 = vmatpush1.bf16.msra.mxu0 %v920
        %950 = vmatprep.subr.bf16.mxu0 %v919
        %951 = vmatpush1.bf16.msra.mxu0 %v918
        %952 = vmatprep.subr.bf16.mxu0 %v917
        %953 = vmatpush1.bf16.msra.mxu0 %v916
        %954 = vmatprep.subr.bf16.mxu0 %v915
        %955 = vmatpush1.bf16.msra.mxu0 %v914
        %956 = vmatprep.subr.bf16.mxu0 0
        %957 = vmatpush2.bf16.msra.mxu0 0
        %958 = vmatprep.subr.bf16.mxu0 0
        %959 = vmatpush2.bf16.msra.mxu0 0
        %960 = vmatprep.subr.bf16.mxu0 0
        %961 = vmatpush2.bf16.msra.mxu0 0
        %962 = vmatprep.subr.bf16.mxu0 0
        %963 = vmatpush2.bf16.msra.mxu0 0
        %964 = vmatprep.subr.bf16.mxu0 0
        %965 = vmatpush2.bf16.msra.mxu0 0
        %966 = vmatprep.subr.bf16.mxu0 0
        %967 = vmatpush2.bf16.msra.mxu0 0
        %968 = vmatprep.subr.bf16.mxu0 0
        %969 = vmatpush2.bf16.msra.mxu0 0
        %970 = vmatprep.subr.bf16.mxu0 0
        %971 = vmatpush2.bf16.msra.mxu0 0
        %972 = vmatprep.mubr.bf16.mxu0 0
        %973 = vmatmul.mubr.bf16.gmra.mxu0 %v932
        %v974 = vpop.f32.mrf.mxu0
        %v975 = vadd.f32 %v879, %v974
        %v976 = vpop.f32.mrf.mxu0
        %v977 = vadd.f32 %v881, %v976
        %v978 = vpop.f32.mrf.mxu0
        %v979 = vadd.f32 %v883, %v978
        %v980 = vpop.f32.mrf.mxu0
        %v981 = vadd.f32 %v885, %v980
        %982 = vdwg.mxu0
        %v983 = vld [vmem:[%s716] sm:$0xe]
        %s984 = scalar_lea.vmem [#allocation9], 144
        %v985 = vld [vmem:[%s984] sm:$0xff]
        %v986 = vld [vmem:[%s984 + $0x8] sm:$0xff]
        %v987 = vld [vmem:[%s984 + $0x10] sm:$0xff]
        %v988 = vld [vmem:[%s984 + $0x18] sm:$0xff]
        %v989 = vld [vmem:[%s984 + $0x20] sm:$0xff]
        %v990 = vld [vmem:[%s984 + $0x28] sm:$0xff]
        %v991 = vld [vmem:[%s984 + $0x30] sm:$0xff]
        %v992 = vld [vmem:[%s984 + $0x38] sm:$0xff]
        %v993 = vld [vmem:[%s984 + $0x40] sm:$0xff]
        %v995 = vunpack.c.l.b16 %v983
        %v996 = vpack.c.b16 %v772, %v995
        %vm997 = vcmask 1046528
        %v998 = vrot.slane %v996, 1
        %v999 = vrot.slane %v775, 1
        %v1000 = vsel %vm997, %v998, %v999
        %v1010 = vunpack.c.l.b16 %v985
        %v1011 = vunpack.c.h.b16 %v985
        %v1012 = vunpack.c.l.b16 %v986
        %v1013 = vunpack.c.h.b16 %v986
        %v1014 = vunpack.c.l.b16 %v987
        %v1015 = vunpack.c.h.b16 %v987
        %v1016 = vunpack.c.l.b16 %v988
        %v1017 = vunpack.c.h.b16 %v988
        %v1018 = vunpack.c.l.b16 %v989
        %v1019 = vunpack.c.h.b16 %v989
        %v1020 = vunpack.c.l.b16 %v990
        %v1021 = vunpack.c.h.b16 %v990
        %v1022 = vunpack.c.l.b16 %v991
        %v1023 = vunpack.c.h.b16 %v991
        %v1024 = vunpack.c.l.b16 %v992
        %v1025 = vunpack.c.h.b16 %v992
        %v1026 = vunpack.c.l.b16 %v993
        %v1027 = vunpack.c.h.b16 %v993
        %v1028 = vpack.c.b16 %v1012, %v1010
        %v1029 = vpack.c.b16 %v1013, %v1011
        %v1030 = vpack.c.b16 %v1016, %v1014
        %v1031 = vpack.c.b16 %v1017, %v1015
        %v1032 = vpack.c.b16 %v1020, %v1018
        %v1033 = vpack.c.b16 %v1021, %v1019
        %v1034 = vpack.c.b16 %v1024, %v1022
        %v1035 = vpack.c.b16 %v1025, %v1023
        %v1036 = vpack.c.b16 %v1026, %v1026
        %v1037 = vpack.c.b16 %v1027, %v1027
        %v1047 = vsel %vm834, %v1000, 0
        %v1050 = vsel %vm718, %v1036, 0
        %v1053 = vsel %vm718, %v1037, 0
        %1055 = vmatprep.subr.bf16.mxu0 0
        %1056 = vmatpush1.bf16.msra.mxu0 0
        %1057 = vmatprep.subr.bf16.mxu0 0
        %1058 = vmatpush1.bf16.msra.mxu0 0
        %1059 = vmatprep.subr.bf16.mxu0 0
        %1060 = vmatpush1.bf16.msra.mxu0 0
        %1061 = vmatprep.subr.bf16.mxu0 %v1053
        %1062 = vmatpush1.bf16.msra.mxu0 %v1050
        %1063 = vmatprep.subr.bf16.mxu0 %v1035
        %1064 = vmatpush1.bf16.msra.mxu0 %v1034
        %1065 = vmatprep.subr.bf16.mxu0 %v1033
        %1066 = vmatpush1.bf16.msra.mxu0 %v1032
        %1067 = vmatprep.subr.bf16.mxu0 %v1031
        %1068 = vmatpush1.bf16.msra.mxu0 %v1030
        %1069 = vmatprep.subr.bf16.mxu0 %v1029
        %1070 = vmatpush1.bf16.msra.mxu0 %v1028
        %1071 = vmatprep.subr.bf16.mxu0 0
        %1072 = vmatpush2.bf16.msra.mxu0 0
        %1073 = vmatprep.subr.bf16.mxu0 0
        %1074 = vmatpush2.bf16.msra.mxu0 0
        %1075 = vmatprep.subr.bf16.mxu0 0
        %1076 = vmatpush2.bf16.msra.mxu0 0
        %1077 = vmatprep.subr.bf16.mxu0 0
        %1078 = vmatpush2.bf16.msra.mxu0 0
        %1079 = vmatprep.subr.bf16.mxu0 0
        %1080 = vmatpush2.bf16.msra.mxu0 0
        %1081 = vmatprep.subr.bf16.mxu0 0
        %1082 = vmatpush2.bf16.msra.mxu0 0
        %1083 = vmatprep.subr.bf16.mxu0 0
        %1084 = vmatpush2.bf16.msra.mxu0 0
        %1085 = vmatprep.subr.bf16.mxu0 0
        %1086 = vmatpush2.bf16.msra.mxu0 0
        %1087 = vmatprep.mubr.bf16.mxu0 0
        %1088 = vmatmul.mubr.bf16.gmra.mxu0 %v1047
        %v1089 = vpop.f32.mrf.mxu0
        %v1090 = vadd.f32 0.0, %v1089
        %v1091 = vpop.f32.mrf.mxu0
        %v1092 = vadd.f32 0.0, %v1091
        %v1093 = vpop.f32.mrf.mxu0
        %v1094 = vadd.f32 0.0, %v1093
        %v1095 = vpop.f32.mrf.mxu0
        %v1096 = vadd.f32 0.0, %v1095
        %1097 = vdwg.mxu0
        %v1098 = vadd.f32 %v975, %v1090
        %v1099 = vadd.f32 %v977, %v1092
        %v1100 = vadd.f32 %v979, %v1094
        %v1101 = vadd.f32 %v981, %v1096
        %v1102 = vld [vmem:[%s9] sm:$0x3]
        %v1104 = vlaneseq
        %v1105 = vshrl.u32 %v1104, 7
        %v1106 = vsub.s32 0, %v1105
        %v1107 = vrot.slane %v1102, %v1106
        %v1108 = vlaneseq
        %v1109 = vshrl.u32 %v1108, 7
        %v1110 = vsub.s32 1, %v1109
        %v1111 = vrot.slane %v1102, %v1110
        %v1114 = vadd.f32 %v1098, %v1107
        %v1115 = vadd.f32 %v1099, %v1111
        %v1116 = vadd.f32 %v1100, %v1107
        %v1117 = vadd.f32 %v1101, %v1111
        %vm1118 = vcmp.ge.f32.partialorder %v1114, 0.0
        %vm1119 = vcmp.ge.f32.partialorder %v1115, 0.0
        %vm1120 = vcmp.ge.f32.partialorder %v1116, 0.0
        %vm1121 = vcmp.ge.f32.partialorder %v1117, 0.0
        %v1122 = vmul.f32 %v1114, 0.1
        %v1123 = vmul.f32 %v1115, 0.1
        %v1124 = vmul.f32 %v1116, 0.1
        %v1125 = vmul.f32 %v1117, 0.1
        %v1126 = vsel %vm1118, %v1114, %v1122
        %v1127 = vsel %vm1119, %v1115, %v1123
        %v1128 = vsel %vm1120, %v1116, %v1124
        %v1129 = vsel %vm1121, %v1117, %v1125
        %v1130 = vpack.c.bf16 %v1128, %v1126
        %v1131 = vpack.c.bf16 %v1129, %v1127
        %v1134 = vunpack.c.l.b16 %v1130
        %v1135 = vunpack.c.l.b16 %v1131
        %v1136 = vunpack.c.h.b16 %v1130
        %v1137 = vunpack.c.h.b16 %v1131
        %v1138 = vpack.c.b16 %v1135, %v1134
        %v1139 = vpack.c.b16 %v1137, %v1136
        %vm1140 = vsmask.f32 256
        %vm1141 = vsmask.f32 4368
        %vm1142 = vmor %vm1140, %vm1141
        %v1144 = vshrl.u32 %v1138, 16
        %v1146 = vrot.slane %v1144, 7
        %v1147 = vshll.u32 %v1138, 16
        %v1149 = vor.u32 %v1146, %v1147
        %v1150 = vrot.slane %v1146, 4
        %v1152 = vshrl.u32 %v1139, 16
        %v1154 = vrot.slane %v1152, 7
        %v1155 = vshll.u32 %v1139, 16
        %v1157 = vor.u32 %v1154, %v1155
        %v1158 = vsel %vm1142, %v1150, %v1157
        %v1159 = vrot.slane %v1154, 4
        %vm1163 = vcmask 1043456
        %vm1164 = vsmask.f32 7938
        %vm1165 = vmand %vm1163, %vm1164
        %vm1166 = vcmask 130052
        %vm1167 = vsmask.f32 7954
        %vm1168 = vmand %vm1166, %vm1167
        %vm1169 = vmor %vm1168, %vm1165
        %v1170 = vld [vmem:[#allocation2] sm:$0xff]
        %v1171 = vsel %vm1169, %v1149, %v1170
        %1172 = vst [vmem:[#allocation2] sm:$0xff] %v1171
        %1173 = vst.msk [vmem:[#allocation2 + $0x8] sm:$0xff] %vm720, %v1158
        %vm1174 = vcmask 1040384
        %vm1175 = vmand %vm1174, %vm1140
        %vm1176 = vcmask 126980
        %vm1177 = vsmask.f32 4352
        %vm1178 = vmand %vm1176, %vm1177
        %vm1179 = vmor %vm1178, %vm1175
        %v1180 = vld [vmem:[#allocation2 + $0x10] sm:$0x11]
        %v1181 = vsel %vm1179, %v1159, %v1180
        %1182 = vst [vmem:[#allocation2 + $0x10] sm:$0x11] %v1181
        %v1183 = vld [vmem:[#allocation2] sm:$0xff]
        %v1184 = vld [vmem:[#allocation2 + $0x8] sm:$0xff]
        %v1185 = vld [vmem:[#allocation12] sm:$0xf]
        %v1186 = vld [vmem:[#allocation12 + $0x4] sm:$0xf]
        %v1187 = vld [vmem:[#allocation12 + $0x8] sm:$0xf]
        %v1188 = vld [vmem:[#allocation12 + $0xc] sm:$0xf]
        %v1189 = vld [vmem:[#allocation12 + $0x10] sm:$0xf]
        %v1190 = vld [vmem:[#allocation12 + $0x14] sm:$0xf]
        %v1191 = vld [vmem:[#allocation12 + $0x18] sm:$0xf]
        %v1192 = vld [vmem:[#allocation12 + $0x1c] sm:$0xf]
        %v1193 = vld [vmem:[#allocation12 + $0x20] sm:$0xf]
        %v1194 = vld [vmem:[#allocation12 + $0x24] sm:$0xf]
        %v1195 = vld [vmem:[#allocation12 + $0x28] sm:$0xf]
        %v1196 = vld [vmem:[#allocation12 + $0x2c] sm:$0xf]
        %v1197 = vld [vmem:[#allocation12 + $0x30] sm:$0xf]
        %v1198 = vld [vmem:[#allocation12 + $0x34] sm:$0xf]
        %v1199 = vld [vmem:[#allocation12 + $0x38] sm:$0xf]
        %v1200 = vld [vmem:[#allocation12 + $0x3c] sm:$0xf]
        %v1201 = vld [vmem:[#allocation12 + $0x40] sm:$0xf]
        %v1202 = vld [vmem:[#allocation12 + $0x44] sm:$0xf]
        %s1203 = scalar_lea.vmem [#allocation12], 72
        %v1204 = vld [vmem:[%s1203] sm:$0xf]
        %v1205 = vld [vmem:[%s1203 + $0x4] sm:$0xf]
        %v1206 = vld [vmem:[%s1203 + $0x8] sm:$0xf]
        %v1207 = vld [vmem:[%s1203 + $0xc] sm:$0xf]
        %v1208 = vld [vmem:[%s1203 + $0x10] sm:$0xf]
        %v1209 = vld [vmem:[%s1203 + $0x14] sm:$0xf]
        %v1210 = vld [vmem:[%s1203 + $0x18] sm:$0xf]
        %v1211 = vld [vmem:[%s1203 + $0x1c] sm:$0xf]
        %v1212 = vld [vmem:[%s1203 + $0x20] sm:$0xf]
        %v1213 = vld [vmem:[%s1203 + $0x24] sm:$0xf]
        %v1214 = vld [vmem:[%s1203 + $0x28] sm:$0xf]
        %v1215 = vld [vmem:[%s1203 + $0x2c] sm:$0xf]
        %v1216 = vld [vmem:[%s1203 + $0x30] sm:$0xf]
        %v1217 = vld [vmem:[%s1203 + $0x34] sm:$0xf]
        %v1218 = vld [vmem:[%s1203 + $0x38] sm:$0xf]
        %v1219 = vld [vmem:[%s1203 + $0x3c] sm:$0xf]
        %v1220 = vld [vmem:[%s1203 + $0x40] sm:$0xf]
        %v1221 = vld [vmem:[%s1203 + $0x44] sm:$0xf]
        %v1224 = vunpack.c.l.b16 %v1183
        %v1225 = vunpack.c.h.b16 %v1183
        %v1226 = vunpack.c.l.b16 %v1184
        %v1227 = vunpack.c.h.b16 %v1184
        %v1228 = vpack.c.b16 %v1226, %v1224
        %v1229 = vpack.c.b16 %v1227, %v1225
        %v1231 = vshrl.u32 %v1228, 16
        %v1233 = vshll.u32 %v1228, 16
        %v1235 = vrot.slane %v1233, 1
        %v1236 = vor.u32 %v1231, %v1235
        %v1238 = vshrl.u32 %v1229, 16
        %v1240 = vshll.u32 %v1229, 16
        %v1242 = vrot.slane %v1240, 1
        %v1243 = vor.u32 %v1238, %v1242
        %v1263 = vunpack.c.l.b16 %v1204
        %v1264 = vunpack.c.l.b16 %v1205
        %v1265 = vunpack.c.l.b16 %v1206
        %v1266 = vunpack.c.l.b16 %v1207
        %v1267 = vunpack.c.l.b16 %v1208
        %v1268 = vunpack.c.l.b16 %v1209
        %v1269 = vunpack.c.l.b16 %v1210
        %v1270 = vunpack.c.l.b16 %v1211
        %v1271 = vunpack.c.l.b16 %v1212
        %v1272 = vunpack.c.l.b16 %v1213
        %v1273 = vunpack.c.l.b16 %v1214
        %v1274 = vunpack.c.l.b16 %v1215
        %v1275 = vunpack.c.l.b16 %v1216
        %v1276 = vunpack.c.l.b16 %v1217
        %v1277 = vunpack.c.l.b16 %v1218
        %v1278 = vunpack.c.l.b16 %v1219
        %v1279 = vunpack.c.l.b16 %v1220
        %v1280 = vunpack.c.l.b16 %v1221
        %v1281 = vpack.c.b16 %v1264, %v1263
        %v1282 = vpack.c.b16 %v1266, %v1265
        %v1283 = vpack.c.b16 %v1268, %v1267
        %v1284 = vpack.c.b16 %v1270, %v1269
        %v1285 = vpack.c.b16 %v1272, %v1271
        %v1286 = vpack.c.b16 %v1274, %v1273
        %v1287 = vpack.c.b16 %v1276, %v1275
        %v1288 = vpack.c.b16 %v1278, %v1277
        %v1289 = vpack.c.b16 %v1280, %v1279
        %vm1299 = vcmask 130048
        %v1301 = vsel %vm1299, %v1243, 0
        %1303 = vmatprep.subr.bf16.mxu0 0
        %1304 = vmatpush1.bf16.msra.mxu0 %v1288
        %1305 = vmatprep.subr.bf16.mxu0 0
        %1306 = vmatpush1.bf16.msra.mxu0 %v1287
        %1307 = vmatprep.subr.bf16.mxu0 0
        %1308 = vmatpush1.bf16.msra.mxu0 %v1286
        %1309 = vmatprep.subr.bf16.mxu0 0
        %1310 = vmatpush1.bf16.msra.mxu0 %v1285
        %1311 = vmatprep.subr.bf16.mxu0 0
        %1312 = vmatpush1.bf16.msra.mxu0 %v1284
        %1313 = vmatprep.subr.bf16.mxu0 0
        %1314 = vmatpush1.bf16.msra.mxu0 %v1283
        %1315 = vmatprep.subr.bf16.mxu0 0
        %1316 = vmatpush1.bf16.msra.mxu0 %v1282
        %1317 = vmatprep.subr.bf16.mxu0 0
        %1318 = vmatpush1.bf16.msra.mxu0 %v1281
        %1319 = vmatprep.subr.bf16.mxu0 0
        %1320 = vmatpush2.bf16.msra.mxu0 0
        %1321 = vmatprep.subr.bf16.mxu0 0
        %1322 = vmatpush2.bf16.msra.mxu0 0
        %1323 = vmatprep.subr.bf16.mxu0 0
        %1324 = vmatpush2.bf16.msra.mxu0 0
        %1325 = vmatprep.subr.bf16.mxu0 0
        %1326 = vmatpush2.bf16.msra.mxu0 0
        %1327 = vmatprep.subr.bf16.mxu0 0
        %1328 = vmatpush2.bf16.msra.mxu0 0
        %1329 = vmatprep.subr.bf16.mxu0 0
        %1330 = vmatpush2.bf16.msra.mxu0 0
        %1331 = vmatprep.subr.bf16.mxu0 0
        %1332 = vmatpush2.bf16.msra.mxu0 0
        %1333 = vmatprep.subr.bf16.mxu0 0
        %1334 = vmatpush2.bf16.msra.mxu0 %v1289
        %1335 = vmatprep.mubr.bf16.mxu0 %v1301
        %1336 = vmatmul.mubr.bf16.gmra.mxu0 %v1236
        %v1337 = vpop.f32.mrf.mxu0
        %v1338 = vadd.f32 0.0, %v1337
        %v1339 = vpop.f32.mrf.mxu0
        %v1340 = vpop.f32.mrf.mxu0
        %v1341 = vadd.f32 0.0, %v1340
        %v1342 = vpop.f32.mrf.mxu0
        %1343 = vdwg.mxu0
        %v1363 = vunpack.c.l.b16 %v1185
        %v1364 = vunpack.c.l.b16 %v1186
        %v1365 = vunpack.c.l.b16 %v1187
        %v1366 = vunpack.c.l.b16 %v1188
        %v1367 = vunpack.c.l.b16 %v1189
        %v1368 = vunpack.c.l.b16 %v1190
        %v1369 = vunpack.c.l.b16 %v1191
        %v1370 = vunpack.c.l.b16 %v1192
        %v1371 = vunpack.c.l.b16 %v1193
        %v1372 = vunpack.c.l.b16 %v1194
        %v1373 = vunpack.c.l.b16 %v1195
        %v1374 = vunpack.c.l.b16 %v1196
        %v1375 = vunpack.c.l.b16 %v1197
        %v1376 = vunpack.c.l.b16 %v1198
        %v1377 = vunpack.c.l.b16 %v1199
        %v1378 = vunpack.c.l.b16 %v1200
        %v1379 = vunpack.c.l.b16 %v1201
        %v1380 = vunpack.c.l.b16 %v1202
        %v1381 = vpack.c.b16 %v1364, %v1363
        %v1382 = vpack.c.b16 %v1366, %v1365
        %v1383 = vpack.c.b16 %v1368, %v1367
        %v1384 = vpack.c.b16 %v1370, %v1369
        %v1385 = vpack.c.b16 %v1372, %v1371
        %v1386 = vpack.c.b16 %v1374, %v1373
        %v1387 = vpack.c.b16 %v1376, %v1375
        %v1388 = vpack.c.b16 %v1378, %v1377
        %v1389 = vpack.c.b16 %v1380, %v1379
        %v1399 = vsel %vm1299, %v1229, 0
        %1401 = vmatprep.subr.bf16.mxu0 0
        %1402 = vmatpush1.bf16.msra.mxu0 %v1388
        %1403 = vmatprep.subr.bf16.mxu0 0
        %1404 = vmatpush1.bf16.msra.mxu0 %v1387
        %1405 = vmatprep.subr.bf16.mxu0 0
        %1406 = vmatpush1.bf16.msra.mxu0 %v1386
        %1407 = vmatprep.subr.bf16.mxu0 0
        %1408 = vmatpush1.bf16.msra.mxu0 %v1385
        %1409 = vmatprep.subr.bf16.mxu0 0
        %1410 = vmatpush1.bf16.msra.mxu0 %v1384
        %1411 = vmatprep.subr.bf16.mxu0 0
        %1412 = vmatpush1.bf16.msra.mxu0 %v1383
        %1413 = vmatprep.subr.bf16.mxu0 0
        %1414 = vmatpush1.bf16.msra.mxu0 %v1382
        %1415 = vmatprep.subr.bf16.mxu0 0
        %1416 = vmatpush1.bf16.msra.mxu0 %v1381
        %1417 = vmatprep.subr.bf16.mxu0 0
        %1418 = vmatpush2.bf16.msra.mxu0 0
        %1419 = vmatprep.subr.bf16.mxu0 0
        %1420 = vmatpush2.bf16.msra.mxu0 0
        %1421 = vmatprep.subr.bf16.mxu0 0
        %1422 = vmatpush2.bf16.msra.mxu0 0
        %1423 = vmatprep.subr.bf16.mxu0 0
        %1424 = vmatpush2.bf16.msra.mxu0 0
        %1425 = vmatprep.subr.bf16.mxu0 0
        %1426 = vmatpush2.bf16.msra.mxu0 0
        %1427 = vmatprep.subr.bf16.mxu0 0
        %1428 = vmatpush2.bf16.msra.mxu0 0
        %1429 = vmatprep.subr.bf16.mxu0 0
        %1430 = vmatpush2.bf16.msra.mxu0 0
        %1431 = vmatprep.subr.bf16.mxu0 0
        %1432 = vmatpush2.bf16.msra.mxu0 %v1389
        %1433 = vmatprep.mubr.bf16.mxu0 %v1399
        %1434 = vmatmul.mubr.bf16.gmra.mxu0 %v1228
        %v1435 = vpop.f32.mrf.mxu0
        %v1436 = vadd.f32 %v1338, %v1435
        %v1437 = vpop.f32.mrf.mxu0
        %v1438 = vpop.f32.mrf.mxu0
        %v1439 = vadd.f32 %v1341, %v1438
        %v1440 = vpop.f32.mrf.mxu0
        %1441 = vdwg.mxu0
        %v1442 = vld [vmem:[#allocation2] sm:$0xee]
        %v1443 = vld [vmem:[#allocation2 + $0x8] sm:$0xff]
        %v1444 = vld [vmem:[#allocation2 + $0x10] sm:$0x11]
        %s1445 = scalar_lea.vmem [#allocation12], 144
        %v1446 = vld [vmem:[%s1445] sm:$0xf]
        %v1447 = vld [vmem:[%s1445 + $0x4] sm:$0xf]
        %v1448 = vld [vmem:[%s1445 + $0x8] sm:$0xf]
        %v1449 = vld [vmem:[%s1445 + $0xc] sm:$0xf]
        %v1450 = vld [vmem:[%s1445 + $0x10] sm:$0xf]
        %v1451 = vld [vmem:[%s1445 + $0x14] sm:$0xf]
        %v1452 = vld [vmem:[%s1445 + $0x18] sm:$0xf]
        %v1453 = vld [vmem:[%s1445 + $0x1c] sm:$0xf]
        %v1454 = vld [vmem:[%s1445 + $0x20] sm:$0xf]
        %v1455 = vld [vmem:[%s1445 + $0x24] sm:$0xf]
        %v1456 = vld [vmem:[%s1445 + $0x28] sm:$0xf]
        %v1457 = vld [vmem:[%s1445 + $0x2c] sm:$0xf]
        %v1458 = vld [vmem:[%s1445 + $0x30] sm:$0xf]
        %v1459 = vld [vmem:[%s1445 + $0x34] sm:$0xf]
        %v1460 = vld [vmem:[%s1445 + $0x38] sm:$0xf]
        %v1461 = vld [vmem:[%s1445 + $0x3c] sm:$0xf]
        %v1462 = vld [vmem:[%s1445 + $0x40] sm:$0xf]
        %v1463 = vld [vmem:[%s1445 + $0x44] sm:$0xf]
        %v1467 = vunpack.c.l.b16 %v1442
        %v1468 = vunpack.c.h.b16 %v1442
        %v1469 = vunpack.c.l.b16 %v1443
        %v1470 = vunpack.c.h.b16 %v1443
        %v1471 = vunpack.c.l.b16 %v1444
        %v1472 = vunpack.c.h.b16 %v1444
        %v1473 = vpack.c.b16 %v1469, %v1467
        %v1474 = vpack.c.b16 %v1470, %v1468
        %v1475 = vpack.c.b16 %v1471, %v1471
        %v1476 = vpack.c.b16 %v1472, %v1472
        %v1477 = vrot.slane %v1473, 1
        %v1478 = vrot.slane %v1475, 1
        %v1479 = vsel %vm997, %v1477, %v1478
        %v1480 = vrot.slane %v1474, 1
        %v1481 = vrot.slane %v1476, 1
        %v1482 = vsel %vm997, %v1480, %v1481
        %v1502 = vunpack.c.l.b16 %v1446
        %v1503 = vunpack.c.l.b16 %v1447
        %v1504 = vunpack.c.l.b16 %v1448
        %v1505 = vunpack.c.l.b16 %v1449
        %v1506 = vunpack.c.l.b16 %v1450
        %v1507 = vunpack.c.l.b16 %v1451
        %v1508 = vunpack.c.l.b16 %v1452
        %v1509 = vunpack.c.l.b16 %v1453
        %v1510 = vunpack.c.l.b16 %v1454
        %v1511 = vunpack.c.l.b16 %v1455
        %v1512 = vunpack.c.l.b16 %v1456
        %v1513 = vunpack.c.l.b16 %v1457
        %v1514 = vunpack.c.l.b16 %v1458
        %v1515 = vunpack.c.l.b16 %v1459
        %v1516 = vunpack.c.l.b16 %v1460
        %v1517 = vunpack.c.l.b16 %v1461
        %v1518 = vunpack.c.l.b16 %v1462
        %v1519 = vunpack.c.l.b16 %v1463
        %v1520 = vpack.c.b16 %v1503, %v1502
        %v1521 = vpack.c.b16 %v1505, %v1504
        %v1522 = vpack.c.b16 %v1507, %v1506
        %v1523 = vpack.c.b16 %v1509, %v1508
        %v1524 = vpack.c.b16 %v1511, %v1510
        %v1525 = vpack.c.b16 %v1513, %v1512
        %v1526 = vpack.c.b16 %v1515, %v1514
        %v1527 = vpack.c.b16 %v1517, %v1516
        %v1528 = vpack.c.b16 %v1519, %v1518
        %v1539 = vsel %vm1299, %v1482, 0
        %1541 = vmatprep.subr.bf16.mxu0 0
        %1542 = vmatpush1.bf16.msra.mxu0 %v1527
        %1543 = vmatprep.subr.bf16.mxu0 0
        %1544 = vmatpush1.bf16.msra.mxu0 %v1526
        %1545 = vmatprep.subr.bf16.mxu0 0
        %1546 = vmatpush1.bf16.msra.mxu0 %v1525
        %1547 = vmatprep.subr.bf16.mxu0 0
        %1548 = vmatpush1.bf16.msra.mxu0 %v1524
        %1549 = vmatprep.subr.bf16.mxu0 0
        %1550 = vmatpush1.bf16.msra.mxu0 %v1523
        %1551 = vmatprep.subr.bf16.mxu0 0
        %1552 = vmatpush1.bf16.msra.mxu0 %v1522
        %1553 = vmatprep.subr.bf16.mxu0 0
        %1554 = vmatpush1.bf16.msra.mxu0 %v1521
        %1555 = vmatprep.subr.bf16.mxu0 0
        %1556 = vmatpush1.bf16.msra.mxu0 %v1520
        %1557 = vmatprep.subr.bf16.mxu0 0
        %1558 = vmatpush2.bf16.msra.mxu0 0
        %1559 = vmatprep.subr.bf16.mxu0 0
        %1560 = vmatpush2.bf16.msra.mxu0 0
        %1561 = vmatprep.subr.bf16.mxu0 0
        %1562 = vmatpush2.bf16.msra.mxu0 0
        %1563 = vmatprep.subr.bf16.mxu0 0
        %1564 = vmatpush2.bf16.msra.mxu0 0
        %1565 = vmatprep.subr.bf16.mxu0 0
        %1566 = vmatpush2.bf16.msra.mxu0 0
        %1567 = vmatprep.subr.bf16.mxu0 0
        %1568 = vmatpush2.bf16.msra.mxu0 0
        %1569 = vmatprep.subr.bf16.mxu0 0
        %1570 = vmatpush2.bf16.msra.mxu0 0
        %1571 = vmatprep.subr.bf16.mxu0 0
        %1572 = vmatpush2.bf16.msra.mxu0 %v1528
        %1573 = vmatprep.mubr.bf16.mxu0 %v1539
        %1574 = vmatmul.mubr.bf16.gmra.mxu0 %v1479
        %v1575 = vpop.f32.mrf.mxu0
        %v1576 = vadd.f32 0.0, %v1575
        %v1577 = vpop.f32.mrf.mxu0
        %v1578 = vpop.f32.mrf.mxu0
        %v1579 = vadd.f32 0.0, %v1578
        %v1580 = vpop.f32.mrf.mxu0
        %1581 = vdwg.mxu0
        %v1582 = vadd.f32 %v1436, %v1576
        %v1583 = vadd.f32 %v1439, %v1579
        %s1584 = scalar_lea.vmem [#allocation12], 216
        %v1585 = vld [vmem:[%s1584] sm:$0xf]
        %v1586 = vld [vmem:[%s1584 + $0x4] sm:$0xf]
        %v1587 = vld [vmem:[%s1584 + $0x8] sm:$0xf]
        %v1588 = vld [vmem:[%s1584 + $0xc] sm:$0xf]
        %v1589 = vld [vmem:[%s1584 + $0x10] sm:$0xf]
        %v1590 = vld [vmem:[%s1584 + $0x14] sm:$0xf]
        %v1591 = vld [vmem:[%s1584 + $0x18] sm:$0xf]
        %v1592 = vld [vmem:[%s1584 + $0x1c] sm:$0xf]
        %v1593 = vld [vmem:[%s1584 + $0x20] sm:$0xf]
        %v1594 = vld [vmem:[%s1584 + $0x24] sm:$0xf]
        %v1595 = vld [vmem:[%s1584 + $0x28] sm:$0xf]
        %v1596 = vld [vmem:[%s1584 + $0x2c] sm:$0xf]
        %v1597 = vld [vmem:[%s1584 + $0x30] sm:$0xf]
        %v1598 = vld [vmem:[%s1584 + $0x34] sm:$0xf]
        %v1599 = vld [vmem:[%s1584 + $0x38] sm:$0xf]
        %v1600 = vld [vmem:[%s1584 + $0x3c] sm:$0xf]
        %v1601 = vld [vmem:[%s1584 + $0x40] sm:$0xf]
        %v1602 = vld [vmem:[%s1584 + $0x44] sm:$0xf]
        %vm1603 = vsmask.f32 6400
        %v1605 = vshrl.u32 %v1473, 16
        %v1607 = vrot.slane %v1605, 1
        %v1608 = vshll.u32 %v1473, 16
        %v1610 = vrot.slane %v1608, 2
        %v1611 = vor.u32 %v1607, %v1610
        %v1613 = vshrl.u32 %v1475, 16
        %v1615 = vrot.slane %v1613, 1
        %v1616 = vshll.u32 %v1475, 16
        %v1618 = vrot.slane %v1616, 2
        %v1619 = vor.u32 %v1615, %v1618
        %v1620 = vsel %vm1603, %v1611, %v1619
        %v1622 = vshrl.u32 %v1474, 16
        %v1624 = vrot.slane %v1622, 1
        %v1625 = vshll.u32 %v1474, 16
        %v1627 = vrot.slane %v1625, 2
        %v1628 = vor.u32 %v1624, %v1627
        %v1630 = vshrl.u32 %v1476, 16
        %v1632 = vrot.slane %v1630, 1
        %v1633 = vshll.u32 %v1476, 16
        %v1635 = vrot.slane %v1633, 2
        %v1636 = vor.u32 %v1632, %v1635
        %v1637 = vsel %vm1603, %v1628, %v1636
        %v1657 = vunpack.c.l.b16 %v1585
        %v1658 = vunpack.c.l.b16 %v1586
        %v1659 = vunpack.c.l.b16 %v1587
        %v1660 = vunpack.c.l.b16 %v1588
        %v1661 = vunpack.c.l.b16 %v1589
        %v1662 = vunpack.c.l.b16 %v1590
        %v1663 = vunpack.c.l.b16 %v1591
        %v1664 = vunpack.c.l.b16 %v1592
        %v1665 = vunpack.c.l.b16 %v1593
        %v1666 = vunpack.c.l.b16 %v1594
        %v1667 = vunpack.c.l.b16 %v1595
        %v1668 = vunpack.c.l.b16 %v1596
        %v1669 = vunpack.c.l.b16 %v1597
        %v1670 = vunpack.c.l.b16 %v1598
        %v1671 = vunpack.c.l.b16 %v1599
        %v1672 = vunpack.c.l.b16 %v1600
        %v1673 = vunpack.c.l.b16 %v1601
        %v1674 = vunpack.c.l.b16 %v1602
        %v1675 = vpack.c.b16 %v1658, %v1657
        %v1676 = vpack.c.b16 %v1660, %v1659
        %v1677 = vpack.c.b16 %v1662, %v1661
        %v1678 = vpack.c.b16 %v1664, %v1663
        %v1679 = vpack.c.b16 %v1666, %v1665
        %v1680 = vpack.c.b16 %v1668, %v1667
        %v1681 = vpack.c.b16 %v1670, %v1669
        %v1682 = vpack.c.b16 %v1672, %v1671
        %v1683 = vpack.c.b16 %v1674, %v1673
        %v1694 = vsel %vm1299, %v1637, 0
        %1696 = vmatprep.subr.bf16.mxu0 0
        %1697 = vmatpush1.bf16.msra.mxu0 %v1682
        %1698 = vmatprep.subr.bf16.mxu0 0
        %1699 = vmatpush1.bf16.msra.mxu0 %v1681
        %1700 = vmatprep.subr.bf16.mxu0 0
        %1701 = vmatpush1.bf16.msra.mxu0 %v1680
        %1702 = vmatprep.subr.bf16.mxu0 0
        %1703 = vmatpush1.bf16.msra.mxu0 %v1679
        %1704 = vmatprep.subr.bf16.mxu0 0
        %1705 = vmatpush1.bf16.msra.mxu0 %v1678
        %1706 = vmatprep.subr.bf16.mxu0 0
        %1707 = vmatpush1.bf16.msra.mxu0 %v1677
        %1708 = vmatprep.subr.bf16.mxu0 0
        %1709 = vmatpush1.bf16.msra.mxu0 %v1676
        %1710 = vmatprep.subr.bf16.mxu0 0
        %1711 = vmatpush1.bf16.msra.mxu0 %v1675
        %1712 = vmatprep.subr.bf16.mxu0 0
        %1713 = vmatpush2.bf16.msra.mxu0 0
        %1714 = vmatprep.subr.bf16.mxu0 0
        %1715 = vmatpush2.bf16.msra.mxu0 0
        %1716 = vmatprep.subr.bf16.mxu0 0
        %1717 = vmatpush2.bf16.msra.mxu0 0
        %1718 = vmatprep.subr.bf16.mxu0 0
        %1719 = vmatpush2.bf16.msra.mxu0 0
        %1720 = vmatprep.subr.bf16.mxu0 0
        %1721 = vmatpush2.bf16.msra.mxu0 0
        %1722 = vmatprep.subr.bf16.mxu0 0
        %1723 = vmatpush2.bf16.msra.mxu0 0
        %1724 = vmatprep.subr.bf16.mxu0 0
        %1725 = vmatpush2.bf16.msra.mxu0 0
        %1726 = vmatprep.subr.bf16.mxu0 0
        %1727 = vmatpush2.bf16.msra.mxu0 %v1683
        %1728 = vmatprep.mubr.bf16.mxu0 %v1694
        %1729 = vmatmul.mubr.bf16.gmra.mxu0 %v1620
        %v1730 = vpop.f32.mrf.mxu0
        %v1731 = vadd.f32 0.0, %v1730
        %v1732 = vpop.f32.mrf.mxu0
        %v1733 = vpop.f32.mrf.mxu0
        %v1734 = vadd.f32 0.0, %v1733
        %v1735 = vpop.f32.mrf.mxu0
        %1736 = vdwg.mxu0
        %v1737 = vadd.f32 %v1582, %v1731
        %v1738 = vadd.f32 %v1583, %v1734
        %v1739 = vld [vmem:[%s10] sm:$0x1]
        %v1741 = vlaneseq
        %v1742 = vshrl.u32 %v1741, 7
        %v1743 = vsub.s32 0, %v1742
        %v1744 = vrot.slane %v1739, %v1743
        %v1746 = vadd.f32 %v1737, %v1744
        %v1747 = vadd.f32 %v1738, %v1744
        %vm1748 = vcmp.ge.f32.partialorder %v1746, 0.0
        %vm1749 = vcmp.ge.f32.partialorder %v1747, 0.0
        %v1750 = vmul.f32 %v1746, 0.1
        %v1751 = vmul.f32 %v1747, 0.1
        %v1752 = vsel %vm1748, %v1746, %v1750
        %v1753 = vsel %vm1749, %v1747, %v1751
        %v1754 = vpack.c.bf16 %v1753, %v1752
        %v1755 = vlaneseq
        %v1756 = vshrl.u32 %v1755, 7
        %v1757 = vlaneseq
        %v1758 = vand.u32 %v1757, 127
        %v1759 = vmul.u32 %v1756, 2
        %vm1760 = vcmp.eq.s32.totalorder %v1758, %v1759
        %v1761 = vsel %vm1760, 1, 0
        %v1762 = vcvt.s32.f32 %v1761
        %v1763 = vpack.c.bf16 %v1762, %v1762
        %vm1764 = vcmask 121856
        %v1766 = vsel %vm1764, %v1763, 0
        %vm1768 = vcmask 1046528
        %vm1769 = vcmask 1047552
        %v1770 = vsel %vm1768, 4294967295, 65535
        %v1771 = vsel %vm1769, %v1770, 0
        %v1773 = vand.u32 %v1754, %v1771
        %1775 = vmatprep.subr.bf16.mxu0 0
        %1776 = vmatpush1.bf16.msra.mxu0 0
        %1777 = vmatprep.subr.bf16.mxu0 0
        %1778 = vmatpush1.bf16.msra.mxu0 0
        %1779 = vmatprep.subr.bf16.mxu0 0
        %1780 = vmatpush1.bf16.msra.mxu0 0
        %1781 = vmatprep.subr.bf16.mxu0 0
        %1782 = vmatpush1.bf16.msra.mxu0 0
        %1783 = vmatprep.subr.bf16.mxu0 0
        %1784 = vmatpush1.bf16.msra.mxu0 0
        %1785 = vmatprep.subr.bf16.mxu0 0
        %1786 = vmatpush1.bf16.msra.mxu0 0
        %1787 = vmatprep.subr.bf16.mxu0 0
        %1788 = vmatpush1.bf16.msra.mxu0 0
        %1789 = vmatprep.subr.bf16.mxu0 0
        %1790 = vmatpush1.bf16.msra.mxu0 %v1773
        %1791 = vmatprep.subr.bf16.mxu0 0
        %1792 = vmatpush2.bf16.msra.mxu0 0
        %1793 = vmatprep.subr.bf16.mxu0 0
        %1794 = vmatpush2.bf16.msra.mxu0 0
        %1795 = vmatprep.subr.bf16.mxu0 0
        %1796 = vmatpush2.bf16.msra.mxu0 0
        %1797 = vmatprep.subr.bf16.mxu0 0
        %1798 = vmatpush2.bf16.msra.mxu0 0
        %1799 = vmatprep.subr.bf16.mxu0 0
        %1800 = vmatpush2.bf16.msra.mxu0 0
        %1801 = vmatprep.subr.bf16.mxu0 0
        %1802 = vmatpush2.bf16.msra.mxu0 0
        %1803 = vmatprep.subr.bf16.mxu0 0
        %1804 = vmatpush2.bf16.msra.mxu0 0
        %1805 = vmatprep.subr.bf16.mxu0 0
        %1806 = vmatpush2.bf16.msra.mxu0 0
        %1807 = vmatprep.mubr.bf16.mxu0 0
        %1808 = vmatmul.mubr.bf16.gmra.mxu0 %v1766
        %v1809 = vpop.f32.mrf.mxu0
        %v1810 = vadd.f32 0.0, %v1809
        %v1811 = vpop.f32.mrf.mxu0
        %v1812 = vpop.f32.mrf.mxu0
        %v1813 = vpop.f32.mrf.mxu0
        %1814 = vdwg.mxu0
        %v1815 = vpack.c.bf16 %v1810, %v1810
        %v1817 = vunpack.c.l.b16 %v1815
        %v1818 = vpack.c.b16 %v1817, %v1817
        %v1820 = vshrl.u32 %v1818, 16
        %v1822 = vrot.slane %v1820, 7
        %v1823 = vshll.u32 %v1818, 16
        %v1825 = vor.u32 %v1822, %v1823
        %v1826 = vrot.slane %v1822, 4
        %vm1829 = vcmask 650240
        %vm1830 = vmand %vm1829, %vm1164
        %v1831 = vld [vmem:[#allocation3] sm:$0xf]
        %v1832 = vsel %vm1830, %v1825, %v1831
        %1833 = vst [vmem:[#allocation3] sm:$0xf] %v1832
        %vm1834 = vcmask 647168
        %vm1835 = vmand %vm1834, %vm1140
        %v1836 = vld [vmem:[#allocation3 + $0x4] sm:$0x1]
        %v1837 = vsel %vm1835, %v1826, %v1836
        %1838 = vst [vmem:[#allocation3 + $0x4] sm:$0x1] %v1837
        %v1839 = vld [vmem:[#allocation3] sm:$0xf]
        %v1840 = vld [vmem:[#allocation14] sm:$0xff]
        %v1841 = vld [vmem:[#allocation14 + $0x8] sm:$0xff]
        %v1842 = vld [vmem:[#allocation14 + $0x10] sm:$0xff]
        %v1843 = vld [vmem:[#allocation14 + $0x18] sm:$0xff]
        %v1844 = vld [vmem:[#allocation14 + $0x20] sm:$0xff]
        %v1845 = vld [vmem:[#allocation14 + $0x28] sm:$0xff]
        %v1846 = vld [vmem:[#allocation14 + $0x30] sm:$0xff]
        %v1847 = vld [vmem:[#allocation14 + $0x38] sm:$0xff]
        %v1848 = vld [vmem:[#allocation14 + $0x40] sm:$0xff]
        %v1849 = vld [vmem:[#allocation14 + $0x48] sm:$0xff]
        %v1850 = vld [vmem:[#allocation3 + $0x4] sm:$0x1]
        %s1851 = scalar_lea.vmem [#allocation14], 80
        %v1852 = vld [vmem:[%s1851] sm:$0xff]
        %v1853 = vld [vmem:[%s1851 + $0x8] sm:$0xff]
        %v1854 = vld [vmem:[%s1851 + $0x10] sm:$0xff]
        %v1855 = vld [vmem:[%s1851 + $0x18] sm:$0xff]
        %v1856 = vld [vmem:[%s1851 + $0x20] sm:$0xff]
        %v1857 = vld [vmem:[%s1851 + $0x28] sm:$0xff]
        %v1858 = vld [vmem:[%s1851 + $0x30] sm:$0xff]
        %v1859 = vld [vmem:[%s1851 + $0x38] sm:$0xff]
        %v1860 = vld [vmem:[%s1851 + $0x40] sm:$0xff]
        %v1861 = vld [vmem:[%s1851 + $0x48] sm:$0xff]
        %v1864 = vunpack.c.l.b16 %v1839
        %v1865 = vunpack.c.l.b16 %v1850
        %v1866 = vpack.c.b16 %v1865, %v1864
        %v1868 = vshrl.u32 %v1866, 16
        %v1870 = vshll.u32 %v1866, 16
        %v1872 = vrot.slane %v1870, 1
        %v1873 = vor.u32 %v1868, %v1872
        %v1884 = vunpack.c.l.b16 %v1852
        %v1885 = vunpack.c.h.b16 %v1852
        %v1886 = vunpack.c.l.b16 %v1853
        %v1887 = vunpack.c.h.b16 %v1853
        %v1888 = vunpack.c.l.b16 %v1854
        %v1889 = vunpack.c.h.b16 %v1854
        %v1890 = vunpack.c.l.b16 %v1855
        %v1891 = vunpack.c.h.b16 %v1855
        %v1892 = vunpack.c.l.b16 %v1856
        %v1893 = vunpack.c.h.b16 %v1856
        %v1894 = vunpack.c.l.b16 %v1857
        %v1895 = vunpack.c.h.b16 %v1857
        %v1896 = vunpack.c.l.b16 %v1858
        %v1897 = vunpack.c.h.b16 %v1858
        %v1898 = vunpack.c.l.b16 %v1859
        %v1899 = vunpack.c.h.b16 %v1859
        %v1900 = vunpack.c.l.b16 %v1860
        %v1901 = vunpack.c.h.b16 %v1860
        %v1902 = vunpack.c.l.b16 %v1861
        %v1903 = vunpack.c.h.b16 %v1861
        %v1904 = vpack.c.b16 %v1886, %v1884
        %v1905 = vpack.c.b16 %v1887, %v1885
        %v1906 = vpack.c.b16 %v1890, %v1888
        %v1907 = vpack.c.b16 %v1891, %v1889
        %v1908 = vpack.c.b16 %v1894, %v1892
        %v1909 = vpack.c.b16 %v1895, %v1893
        %v1910 = vpack.c.b16 %v1898, %v1896
        %v1911 = vpack.c.b16 %v1899, %v1897
        %v1912 = vpack.c.b16 %v1902, %v1900
        %v1913 = vpack.c.b16 %v1903, %v1901
        %vm1924 = vcmask 654336
        %v1926 = vsel %vm1924, %v1873, 0
        %1928 = vmatprep.subr.bf16.mxu0 0
        %1929 = vmatpush1.bf16.msra.mxu0 0
        %1930 = vmatprep.subr.bf16.mxu0 0
        %1931 = vmatpush1.bf16.msra.mxu0 0
        %1932 = vmatprep.subr.bf16.mxu0 0
        %1933 = vmatpush1.bf16.msra.mxu0 0
        %1934 = vmatprep.subr.bf16.mxu0 %v1913
        %1935 = vmatpush1.bf16.msra.mxu0 %v1912
        %1936 = vmatprep.subr.bf16.mxu0 %v1911
        %1937 = vmatpush1.bf16.msra.mxu0 %v1910
        %1938 = vmatprep.subr.bf16.mxu0 %v1909
        %1939 = vmatpush1.bf16.msra.mxu0 %v1908
        %1940 = vmatprep.subr.bf16.mxu0 %v1907
        %1941 = vmatpush1.bf16.msra.mxu0 %v1906
        %1942 = vmatprep.subr.bf16.mxu0 %v1905
        %1943 = vmatpush1.bf16.msra.mxu0 %v1904
        %1944 = vmatprep.subr.bf16.mxu0 0
        %1945 = vmatpush2.bf16.msra.mxu0 0
        %1946 = vmatprep.subr.bf16.mxu0 0
        %1947 = vmatpush2.bf16.msra.mxu0 0
        %1948 = vmatprep.subr.bf16.mxu0 0
        %1949 = vmatpush2.bf16.msra.mxu0 0
        %1950 = vmatprep.subr.bf16.mxu0 0
        %1951 = vmatpush2.bf16.msra.mxu0 0
        %1952 = vmatprep.subr.bf16.mxu0 0
        %1953 = vmatpush2.bf16.msra.mxu0 0
        %1954 = vmatprep.subr.bf16.mxu0 0
        %1955 = vmatpush2.bf16.msra.mxu0 0
        %1956 = vmatprep.subr.bf16.mxu0 0
        %1957 = vmatpush2.bf16.msra.mxu0 0
        %1958 = vmatprep.subr.bf16.mxu0 0
        %1959 = vmatpush2.bf16.msra.mxu0 0
        %1960 = vmatprep.mubr.bf16.mxu0 0
        %1961 = vmatmul.mubr.bf16.gmra.mxu0 %v1926
        %v1962 = vpop.f32.mrf.mxu0
        %v1963 = vadd.f32 0.0, %v1962
        %v1964 = vpop.f32.mrf.mxu0
        %v1965 = vadd.f32 0.0, %v1964
        %v1966 = vpop.f32.mrf.mxu0
        %v1967 = vpop.f32.mrf.mxu0
        %1968 = vdwg.mxu0
        %v1979 = vunpack.c.l.b16 %v1840
        %v1980 = vunpack.c.h.b16 %v1840
        %v1981 = vunpack.c.l.b16 %v1841
        %v1982 = vunpack.c.h.b16 %v1841
        %v1983 = vunpack.c.l.b16 %v1842
        %v1984 = vunpack.c.h.b16 %v1842
        %v1985 = vunpack.c.l.b16 %v1843
        %v1986 = vunpack.c.h.b16 %v1843
        %v1987 = vunpack.c.l.b16 %v1844
        %v1988 = vunpack.c.h.b16 %v1844
        %v1989 = vunpack.c.l.b16 %v1845
        %v1990 = vunpack.c.h.b16 %v1845
        %v1991 = vunpack.c.l.b16 %v1846
        %v1992 = vunpack.c.h.b16 %v1846
        %v1993 = vunpack.c.l.b16 %v1847
        %v1994 = vunpack.c.h.b16 %v1847
        %v1995 = vunpack.c.l.b16 %v1848
        %v1996 = vunpack.c.h.b16 %v1848
        %v1997 = vunpack.c.l.b16 %v1849
        %v1998 = vunpack.c.h.b16 %v1849
        %v1999 = vpack.c.b16 %v1981, %v1979
        %v2000 = vpack.c.b16 %v1982, %v1980
        %v2001 = vpack.c.b16 %v1985, %v1983
        %v2002 = vpack.c.b16 %v1986, %v1984
        %v2003 = vpack.c.b16 %v1989, %v1987
        %v2004 = vpack.c.b16 %v1990, %v1988
        %v2005 = vpack.c.b16 %v1993, %v1991
        %v2006 = vpack.c.b16 %v1994, %v1992
        %v2007 = vpack.c.b16 %v1997, %v1995
        %v2008 = vpack.c.b16 %v1998, %v1996
        %v2020 = vsel %vm1924, %v1839, 0
        %2022 = vmatprep.subr.bf16.mxu0 0
        %2023 = vmatpush1.bf16.msra.mxu0 0
        %2024 = vmatprep.subr.bf16.mxu0 0
        %2025 = vmatpush1.bf16.msra.mxu0 0
        %2026 = vmatprep.subr.bf16.mxu0 0
        %2027 = vmatpush1.bf16.msra.mxu0 0
        %2028 = vmatprep.subr.bf16.mxu0 %v2008
        %2029 = vmatpush1.bf16.msra.mxu0 %v2007
        %2030 = vmatprep.subr.bf16.mxu0 %v2006
        %2031 = vmatpush1.bf16.msra.mxu0 %v2005
        %2032 = vmatprep.subr.bf16.mxu0 %v2004
        %2033 = vmatpush1.bf16.msra.mxu0 %v2003
        %2034 = vmatprep.subr.bf16.mxu0 %v2002
        %2035 = vmatpush1.bf16.msra.mxu0 %v2001
        %2036 = vmatprep.subr.bf16.mxu0 %v2000
        %2037 = vmatpush1.bf16.msra.mxu0 %v1999
        %2038 = vmatprep.subr.bf16.mxu0 0
        %2039 = vmatpush2.bf16.msra.mxu0 0
        %2040 = vmatprep.subr.bf16.mxu0 0
        %2041 = vmatpush2.bf16.msra.mxu0 0
        %2042 = vmatprep.subr.bf16.mxu0 0
        %2043 = vmatpush2.bf16.msra.mxu0 0
        %2044 = vmatprep.subr.bf16.mxu0 0
        %2045 = vmatpush2.bf16.msra.mxu0 0
        %2046 = vmatprep.subr.bf16.mxu0 0
        %2047 = vmatpush2.bf16.msra.mxu0 0
        %2048 = vmatprep.subr.bf16.mxu0 0
        %2049 = vmatpush2.bf16.msra.mxu0 0
        %2050 = vmatprep.subr.bf16.mxu0 0
        %2051 = vmatpush2.bf16.msra.mxu0 0
        %2052 = vmatprep.subr.bf16.mxu0 0
        %2053 = vmatpush2.bf16.msra.mxu0 0
        %2054 = vmatprep.mubr.bf16.mxu0 0
        %2055 = vmatmul.mubr.bf16.gmra.mxu0 %v2020
        %v2056 = vpop.f32.mrf.mxu0
        %v2057 = vadd.f32 %v1963, %v2056
        %v2058 = vpop.f32.mrf.mxu0
        %v2059 = vadd.f32 %v1965, %v2058
        %v2060 = vpop.f32.mrf.mxu0
        %v2061 = vpop.f32.mrf.mxu0
        %2062 = vdwg.mxu0
        %v2063 = vld [vmem:[#allocation3] sm:$0xe]
        %s2064 = scalar_lea.vmem [#allocation14], 160
        %v2065 = vld [vmem:[%s2064] sm:$0xff]
        %v2066 = vld [vmem:[%s2064 + $0x8] sm:$0xff]
        %v2067 = vld [vmem:[%s2064 + $0x10] sm:$0xff]
        %v2068 = vld [vmem:[%s2064 + $0x18] sm:$0xff]
        %v2069 = vld [vmem:[%s2064 + $0x20] sm:$0xff]
        %v2070 = vld [vmem:[%s2064 + $0x28] sm:$0xff]
        %v2071 = vld [vmem:[%s2064 + $0x30] sm:$0xff]
        %v2072 = vld [vmem:[%s2064 + $0x38] sm:$0xff]
        %v2073 = vld [vmem:[%s2064 + $0x40] sm:$0xff]
        %v2074 = vld [vmem:[%s2064 + $0x48] sm:$0xff]
        %v2076 = vunpack.c.l.b16 %v2063
        %v2077 = vpack.c.b16 %v1865, %v2076
        %v2078 = vrot.slane %v2077, 1
        %v2089 = vunpack.c.l.b16 %v2065
        %v2090 = vunpack.c.h.b16 %v2065
        %v2091 = vunpack.c.l.b16 %v2066
        %v2092 = vunpack.c.h.b16 %v2066
        %v2093 = vunpack.c.l.b16 %v2067
        %v2094 = vunpack.c.h.b16 %v2067
        %v2095 = vunpack.c.l.b16 %v2068
        %v2096 = vunpack.c.h.b16 %v2068
        %v2097 = vunpack.c.l.b16 %v2069
        %v2098 = vunpack.c.h.b16 %v2069
        %v2099 = vunpack.c.l.b16 %v2070
        %v2100 = vunpack.c.h.b16 %v2070
        %v2101 = vunpack.c.l.b16 %v2071
        %v2102 = vunpack.c.h.b16 %v2071
        %v2103 = vunpack.c.l.b16 %v2072
        %v2104 = vunpack.c.h.b16 %v2072
        %v2105 = vunpack.c.l.b16 %v2073
        %v2106 = vunpack.c.h.b16 %v2073
        %v2107 = vunpack.c.l.b16 %v2074
        %v2108 = vunpack.c.h.b16 %v2074
        %v2109 = vpack.c.b16 %v2091, %v2089
        %v2110 = vpack.c.b16 %v2092, %v2090
        %v2111 = vpack.c.b16 %v2095, %v2093
        %v2112 = vpack.c.b16 %v2096, %v2094
        %v2113 = vpack.c.b16 %v2099, %v2097
        %v2114 = vpack.c.b16 %v2100, %v2098
        %v2115 = vpack.c.b16 %v2103, %v2101
        %v2116 = vpack.c.b16 %v2104, %v2102
        %v2117 = vpack.c.b16 %v2107, %v2105
        %v2118 = vpack.c.b16 %v2108, %v2106
        %v2130 = vsel %vm1924, %v2078, 0
        %2132 = vmatprep.subr.bf16.mxu0 0
        %2133 = vmatpush1.bf16.msra.mxu0 0
        %2134 = vmatprep.subr.bf16.mxu0 0
        %2135 = vmatpush1.bf16.msra.mxu0 0
        %2136 = vmatprep.subr.bf16.mxu0 0
        %2137 = vmatpush1.bf16.msra.mxu0 0
        %2138 = vmatprep.subr.bf16.mxu0 %v2118
        %2139 = vmatpush1.bf16.msra.mxu0 %v2117
        %2140 = vmatprep.subr.bf16.mxu0 %v2116
        %2141 = vmatpush1.bf16.msra.mxu0 %v2115
        %2142 = vmatprep.subr.bf16.mxu0 %v2114
        %2143 = vmatpush1.bf16.msra.mxu0 %v2113
        %2144 = vmatprep.subr.bf16.mxu0 %v2112
        %2145 = vmatpush1.bf16.msra.mxu0 %v2111
        %2146 = vmatprep.subr.bf16.mxu0 %v2110
        %2147 = vmatpush1.bf16.msra.mxu0 %v2109
        %2148 = vmatprep.subr.bf16.mxu0 0
        %2149 = vmatpush2.bf16.msra.mxu0 0
        %2150 = vmatprep.subr.bf16.mxu0 0
        %2151 = vmatpush2.bf16.msra.mxu0 0
        %2152 = vmatprep.subr.bf16.mxu0 0
        %2153 = vmatpush2.bf16.msra.mxu0 0
        %2154 = vmatprep.subr.bf16.mxu0 0
        %2155 = vmatpush2.bf16.msra.mxu0 0
        %2156 = vmatprep.subr.bf16.mxu0 0
        %2157 = vmatpush2.bf16.msra.mxu0 0
        %2158 = vmatprep.subr.bf16.mxu0 0
        %2159 = vmatpush2.bf16.msra.mxu0 0
        %2160 = vmatprep.subr.bf16.mxu0 0
        %2161 = vmatpush2.bf16.msra.mxu0 0
        %2162 = vmatprep.subr.bf16.mxu0 0
        %2163 = vmatpush2.bf16.msra.mxu0 0
        %2164 = vmatprep.mubr.bf16.mxu0 0
        %2165 = vmatmul.mubr.bf16.gmra.mxu0 %v2130
        %v2166 = vpop.f32.mrf.mxu0
        %v2167 = vadd.f32 0.0, %v2166
        %v2168 = vpop.f32.mrf.mxu0
        %v2169 = vadd.f32 0.0, %v2168
        %v2170 = vpop.f32.mrf.mxu0
        %v2171 = vpop.f32.mrf.mxu0
        %2172 = vdwg.mxu0
        %v2173 = vadd.f32 %v2057, %v2167
        %v2174 = vadd.f32 %v2059, %v2169
        %v2175 = vld [vmem:[%s11] sm:$0x3]
        %v2177 = vlaneseq
        %v2178 = vshrl.u32 %v2177, 7
        %v2179 = vsub.s32 0, %v2178
        %v2180 = vrot.slane %v2175, %v2179
        %v2181 = vlaneseq
        %v2182 = vshrl.u32 %v2181, 7
        %v2183 = vsub.s32 1, %v2182
        %v2184 = vrot.slane %v2175, %v2183
        %v2187 = vadd.f32 %v2173, %v2180
        %v2188 = vadd.f32 %v2174, %v2184
        %vm2189 = vcmp.ge.f32.partialorder %v2187, 0.0
        %vm2190 = vcmp.ge.f32.partialorder %v2188, 0.0
        %v2191 = vmul.f32 %v2187, 0.1
        %v2192 = vmul.f32 %v2188, 0.1
        %v2193 = vsel %vm2189, %v2187, %v2191
        %v2194 = vsel %vm2190, %v2188, %v2192
        %v2195 = vpack.c.bf16 %v2193, %v2193
        %v2196 = vpack.c.bf16 %v2194, %v2194
        %v2199 = vunpack.c.l.b16 %v2195
        %v2200 = vunpack.c.l.b16 %v2196
        %v2201 = vpack.c.b16 %v2200, %v2199
        %v2203 = vshrl.u32 %v2201, 16
        %v2205 = vrot.slane %v2203, 7
        %v2206 = vshll.u32 %v2201, 16
        %v2208 = vor.u32 %v2205, %v2206
        %v2209 = vrot.slane %v2205, 4
        %vm2212 = vcmask 261124
        %vm2213 = vmand %vm2212, %vm1167
        %vm2214 = vmor %vm2213, %vm1165
        %v2215 = vld [vmem:[#allocation4] sm:$0xff]
        %v2216 = vsel %vm2214, %v2208, %v2215
        %2217 = vst [vmem:[#allocation4] sm:$0xff] %v2216
        %vm2218 = vcmask 258052
        %vm2219 = vmand %vm2218, %vm1177
        %vm2220 = vmor %vm2219, %vm1175
        %v2221 = vld [vmem:[#allocation4 + $0x8] sm:$0x11]
        %v2222 = vsel %vm2220, %v2209, %v2221
        %2223 = vst [vmem:[#allocation4 + $0x8] sm:$0x11] %v2222
        %v2224 = vld [vmem:[#allocation4] sm:$0xff]
        %v2225 = vld [vmem:[%s4] sm:$0xff]
        %v2226 = vld [vmem:[%s4 + $0x8] sm:$0xff]
        %v2227 = vld [vmem:[%s4 + $0x10] sm:$0xff]
        %v2228 = vld [vmem:[%s4 + $0x18] sm:$0xff]
        %v2229 = vld [vmem:[%s4 + $0x20] sm:$0xff]
        %v2230 = vld [vmem:[%s4 + $0x28] sm:$0xff]
        %v2231 = vld [vmem:[%s4 + $0x30] sm:$0xff]
        %v2232 = vld [vmem:[%s4 + $0x38] sm:$0xff]
        %v2233 = vld [vmem:[%s4 + $0x40] sm:$0xff]
        %v2234 = vld [vmem:[%s4 + $0x48] sm:$0xff]
        %v2235 = vld [vmem:[%s4 + $0x50] sm:$0xff]
        %v2236 = vld [vmem:[%s4 + $0x58] sm:$0xff]
        %v2237 = vld [vmem:[%s4 + $0x60] sm:$0xff]
        %v2238 = vld [vmem:[%s4 + $0x68] sm:$0xff]
        %v2239 = vld [vmem:[%s4 + $0x70] sm:$0xff]
        %v2240 = vld [vmem:[%s4 + $0x78] sm:$0xff]
        %v2241 = vld [vmem:[%s4 + $0x80] sm:$0xff]
        %v2242 = vld [vmem:[%s4 + $0x88] sm:$0xff]
        %v2243 = vld [vmem:[%s4 + $0x90] sm:$0xff]
        %v2244 = vld [vmem:[%s4 + $0x98] sm:$0xff]
        %v2245 = vld [vmem:[#allocation4 + $0x8] sm:$0x11]
        %s2246 = scalar_lea.vmem %s4, 160
        %v2247 = vld [vmem:[%s2246] sm:$0xff]
        %v2248 = vld [vmem:[%s2246 + $0x8] sm:$0xff]
        %v2249 = vld [vmem:[%s2246 + $0x10] sm:$0xff]
        %v2250 = vld [vmem:[%s2246 + $0x18] sm:$0xff]
        %v2251 = vld [vmem:[%s2246 + $0x20] sm:$0xff]
        %v2252 = vld [vmem:[%s2246 + $0x28] sm:$0xff]
        %v2253 = vld [vmem:[%s2246 + $0x30] sm:$0xff]
        %v2254 = vld [vmem:[%s2246 + $0x38] sm:$0xff]
        %v2255 = vld [vmem:[%s2246 + $0x40] sm:$0xff]
        %v2256 = vld [vmem:[%s2246 + $0x48] sm:$0xff]
        %v2257 = vld [vmem:[%s2246 + $0x50] sm:$0xff]
        %v2258 = vld [vmem:[%s2246 + $0x58] sm:$0xff]
        %v2259 = vld [vmem:[%s2246 + $0x60] sm:$0xff]
        %v2260 = vld [vmem:[%s2246 + $0x68] sm:$0xff]
        %v2261 = vld [vmem:[%s2246 + $0x70] sm:$0xff]
        %v2262 = vld [vmem:[%s2246 + $0x78] sm:$0xff]
        %v2263 = vld [vmem:[%s2246 + $0x80] sm:$0xff]
        %v2264 = vld [vmem:[%s2246 + $0x88] sm:$0xff]
        %v2265 = vld [vmem:[%s2246 + $0x90] sm:$0xff]
        %v2266 = vld [vmem:[%s2246 + $0x98] sm:$0xff]
        %v2269 = vunpack.c.l.b16 %v2224
        %v2270 = vunpack.c.h.b16 %v2224
        %v2271 = vunpack.c.l.b16 %v2245
        %v2272 = vunpack.c.h.b16 %v2245
        %v2273 = vpack.c.b16 %v2271, %v2269
        %v2274 = vpack.c.b16 %v2272, %v2270
        %v2276 = vshrl.u32 %v2273, 16
        %v2278 = vshll.u32 %v2273, 16
        %v2280 = vrot.slane %v2278, 1
        %v2281 = vor.u32 %v2276, %v2280
        %v2283 = vshrl.u32 %v2274, 16
        %v2285 = vshll.u32 %v2274, 16
        %v2287 = vrot.slane %v2285, 1
        %v2288 = vor.u32 %v2283, %v2287
        %v2310 = vunpack.c.l.b16 %v2247
        %v2311 = vunpack.c.h.b16 %v2247
        %v2312 = vunpack.c.l.b16 %v2248
        %v2313 = vunpack.c.h.b16 %v2248
        %v2314 = vunpack.c.l.b16 %v2249
        %v2315 = vunpack.c.h.b16 %v2249
        %v2316 = vunpack.c.l.b16 %v2250
        %v2317 = vunpack.c.h.b16 %v2250
        %v2318 = vunpack.c.l.b16 %v2251
        %v2319 = vunpack.c.h.b16 %v2251
        %v2320 = vunpack.c.l.b16 %v2252
        %v2321 = vunpack.c.h.b16 %v2252
        %v2322 = vunpack.c.l.b16 %v2253
        %v2323 = vunpack.c.h.b16 %v2253
        %v2324 = vunpack.c.l.b16 %v2254
        %v2325 = vunpack.c.h.b16 %v2254
        %v2326 = vunpack.c.l.b16 %v2255
        %v2327 = vunpack.c.h.b16 %v2255
        %v2328 = vunpack.c.l.b16 %v2256
        %v2329 = vunpack.c.h.b16 %v2256
        %v2330 = vunpack.c.l.b16 %v2257
        %v2331 = vunpack.c.h.b16 %v2257
        %v2332 = vunpack.c.l.b16 %v2258
        %v2333 = vunpack.c.h.b16 %v2258
        %v2334 = vunpack.c.l.b16 %v2259
        %v2335 = vunpack.c.h.b16 %v2259
        %v2336 = vunpack.c.l.b16 %v2260
        %v2337 = vunpack.c.h.b16 %v2260
        %v2338 = vunpack.c.l.b16 %v2261
        %v2339 = vunpack.c.h.b16 %v2261
        %v2340 = vunpack.c.l.b16 %v2262
        %v2341 = vunpack.c.h.b16 %v2262
        %v2342 = vunpack.c.l.b16 %v2263
        %v2343 = vunpack.c.h.b16 %v2263
        %v2344 = vunpack.c.l.b16 %v2264
        %v2345 = vunpack.c.h.b16 %v2264
        %v2346 = vunpack.c.l.b16 %v2265
        %v2347 = vunpack.c.h.b16 %v2265
        %v2348 = vunpack.c.l.b16 %v2266
        %v2349 = vunpack.c.h.b16 %v2266
        %v2350 = vpack.c.b16 %v2312, %v2310
        %v2351 = vpack.c.b16 %v2313, %v2311
        %v2352 = vpack.c.b16 %v2316, %v2314
        %v2353 = vpack.c.b16 %v2317, %v2315
        %v2354 = vpack.c.b16 %v2320, %v2318
        %v2355 = vpack.c.b16 %v2321, %v2319
        %v2356 = vpack.c.b16 %v2324, %v2322
        %v2357 = vpack.c.b16 %v2325, %v2323
        %v2358 = vpack.c.b16 %v2328, %v2326
        %v2359 = vpack.c.b16 %v2329, %v2327
        %v2360 = vpack.c.b16 %v2332, %v2330
        %v2361 = vpack.c.b16 %v2333, %v2331
        %v2362 = vpack.c.b16 %v2336, %v2334
        %v2363 = vpack.c.b16 %v2337, %v2335
        %v2364 = vpack.c.b16 %v2340, %v2338
        %v2365 = vpack.c.b16 %v2341, %v2339
        %v2366 = vpack.c.b16 %v2344, %v2342
        %v2367 = vpack.c.b16 %v2345, %v2343
        %v2368 = vpack.c.b16 %v2348, %v2346
        %v2369 = vpack.c.b16 %v2349, %v2347
        %vm2390 = vcmask 261120
        %v2392 = vsel %vm2390, %v2288, 0
        %2394 = vmatprep.subr.bf16.mxu0 %v2365
        %2395 = vmatpush1.bf16.msra.mxu0 %v2364
        %2396 = vmatprep.subr.bf16.mxu0 %v2363
        %2397 = vmatpush1.bf16.msra.mxu0 %v2362
        %2398 = vmatprep.subr.bf16.mxu0 %v2361
        %2399 = vmatpush1.bf16.msra.mxu0 %v2360
        %2400 = vmatprep.subr.bf16.mxu0 %v2359
        %2401 = vmatpush1.bf16.msra.mxu0 %v2358
        %2402 = vmatprep.subr.bf16.mxu0 %v2357
        %2403 = vmatpush1.bf16.msra.mxu0 %v2356
        %2404 = vmatprep.subr.bf16.mxu0 %v2355
        %2405 = vmatpush1.bf16.msra.mxu0 %v2354
        %2406 = vmatprep.subr.bf16.mxu0 %v2353
        %2407 = vmatpush1.bf16.msra.mxu0 %v2352
        %2408 = vmatprep.subr.bf16.mxu0 %v2351
        %2409 = vmatpush1.bf16.msra.mxu0 %v2350
        %2410 = vmatprep.subr.bf16.mxu0 0
        %2411 = vmatpush2.bf16.msra.mxu0 0
        %2412 = vmatprep.subr.bf16.mxu0 0
        %2413 = vmatpush2.bf16.msra.mxu0 0
        %2414 = vmatprep.subr.bf16.mxu0 0
        %2415 = vmatpush2.bf16.msra.mxu0 0
        %2416 = vmatprep.subr.bf16.mxu0 0
        %2417 = vmatpush2.bf16.msra.mxu0 0
        %2418 = vmatprep.subr.bf16.mxu0 0
        %2419 = vmatpush2.bf16.msra.mxu0 0
        %2420 = vmatprep.subr.bf16.mxu0 0
        %2421 = vmatpush2.bf16.msra.mxu0 0
        %2422 = vmatprep.subr.bf16.mxu0 %v2369
        %2423 = vmatpush2.bf16.msra.mxu0 %v2368
        %2424 = vmatprep.subr.bf16.mxu0 %v2367
        %2425 = vmatpush2.bf16.msra.mxu0 %v2366
        %2426 = vmatprep.mubr.bf16.mxu0 %v2392
        %2427 = vmatmul.mubr.bf16.gmra.mxu0 %v2281
        %v2428 = vpop.f32.mrf.mxu0
        %v2429 = vadd.f32 0.0, %v2428
        %v2430 = vpop.f32.mrf.mxu0
        %v2431 = vadd.f32 0.0, %v2430
        %v2432 = vpop.f32.mrf.mxu0
        %v2433 = vpop.f32.mrf.mxu0
        %2434 = vdwg.mxu0
        %v2435 = vpack.c.b16 %v2269, %v2269
        %v2436 = vpack.c.b16 %v2270, %v2270
        %v2458 = vunpack.c.l.b16 %v2225
        %v2459 = vunpack.c.h.b16 %v2225
        %v2460 = vunpack.c.l.b16 %v2226
        %v2461 = vunpack.c.h.b16 %v2226
        %v2462 = vunpack.c.l.b16 %v2227
        %v2463 = vunpack.c.h.b16 %v2227
        %v2464 = vunpack.c.l.b16 %v2228
        %v2465 = vunpack.c.h.b16 %v2228
        %v2466 = vunpack.c.l.b16 %v2229
        %v2467 = vunpack.c.h.b16 %v2229
        %v2468 = vunpack.c.l.b16 %v2230
        %v2469 = vunpack.c.h.b16 %v2230
        %v2470 = vunpack.c.l.b16 %v2231
        %v2471 = vunpack.c.h.b16 %v2231
        %v2472 = vunpack.c.l.b16 %v2232
        %v2473 = vunpack.c.h.b16 %v2232
        %v2474 = vunpack.c.l.b16 %v2233
        %v2475 = vunpack.c.h.b16 %v2233
        %v2476 = vunpack.c.l.b16 %v2234
        %v2477 = vunpack.c.h.b16 %v2234
        %v2478 = vunpack.c.l.b16 %v2235
        %v2479 = vunpack.c.h.b16 %v2235
        %v2480 = vunpack.c.l.b16 %v2236
        %v2481 = vunpack.c.h.b16 %v2236
        %v2482 = vunpack.c.l.b16 %v2237
        %v2483 = vunpack.c.h.b16 %v2237
        %v2484 = vunpack.c.l.b16 %v2238
        %v2485 = vunpack.c.h.b16 %v2238
        %v2486 = vunpack.c.l.b16 %v2239
        %v2487 = vunpack.c.h.b16 %v2239
        %v2488 = vunpack.c.l.b16 %v2240
        %v2489 = vunpack.c.h.b16 %v2240
        %v2490 = vunpack.c.l.b16 %v2241
        %v2491 = vunpack.c.h.b16 %v2241
        %v2492 = vunpack.c.l.b16 %v2242
        %v2493 = vunpack.c.h.b16 %v2242
        %v2494 = vunpack.c.l.b16 %v2243
        %v2495 = vunpack.c.h.b16 %v2243
        %v2496 = vunpack.c.l.b16 %v2244
        %v2497 = vunpack.c.h.b16 %v2244
        %v2498 = vpack.c.b16 %v2460, %v2458
        %v2499 = vpack.c.b16 %v2461, %v2459
        %v2500 = vpack.c.b16 %v2464, %v2462
        %v2501 = vpack.c.b16 %v2465, %v2463
        %v2502 = vpack.c.b16 %v2468, %v2466
        %v2503 = vpack.c.b16 %v2469, %v2467
        %v2504 = vpack.c.b16 %v2472, %v2470
        %v2505 = vpack.c.b16 %v2473, %v2471
        %v2506 = vpack.c.b16 %v2476, %v2474
        %v2507 = vpack.c.b16 %v2477, %v2475
        %v2508 = vpack.c.b16 %v2480, %v2478
        %v2509 = vpack.c.b16 %v2481, %v2479
        %v2510 = vpack.c.b16 %v2484, %v2482
        %v2511 = vpack.c.b16 %v2485, %v2483
        %v2512 = vpack.c.b16 %v2488, %v2486
        %v2513 = vpack.c.b16 %v2489, %v2487
        %v2514 = vpack.c.b16 %v2492, %v2490
        %v2515 = vpack.c.b16 %v2493, %v2491
        %v2516 = vpack.c.b16 %v2496, %v2494
        %v2517 = vpack.c.b16 %v2497, %v2495
        %v2539 = vsel %vm2390, %v2436, 0
        %2541 = vmatprep.subr.bf16.mxu0 %v2513
        %2542 = vmatpush1.bf16.msra.mxu0 %v2512
        %2543 = vmatprep.subr.bf16.mxu0 %v2511
        %2544 = vmatpush1.bf16.msra.mxu0 %v2510
        %2545 = vmatprep.subr.bf16.mxu0 %v2509
        %2546 = vmatpush1.bf16.msra.mxu0 %v2508
        %2547 = vmatprep.subr.bf16.mxu0 %v2507
        %2548 = vmatpush1.bf16.msra.mxu0 %v2506
        %2549 = vmatprep.subr.bf16.mxu0 %v2505
        %2550 = vmatpush1.bf16.msra.mxu0 %v2504
        %2551 = vmatprep.subr.bf16.mxu0 %v2503
        %2552 = vmatpush1.bf16.msra.mxu0 %v2502
        %2553 = vmatprep.subr.bf16.mxu0 %v2501
        %2554 = vmatpush1.bf16.msra.mxu0 %v2500
        %2555 = vmatprep.subr.bf16.mxu0 %v2499
        %2556 = vmatpush1.bf16.msra.mxu0 %v2498
        %2557 = vmatprep.subr.bf16.mxu0 0
        %2558 = vmatpush2.bf16.msra.mxu0 0
        %2559 = vmatprep.subr.bf16.mxu0 0
        %2560 = vmatpush2.bf16.msra.mxu0 0
        %2561 = vmatprep.subr.bf16.mxu0 0
        %2562 = vmatpush2.bf16.msra.mxu0 0
        %2563 = vmatprep.subr.bf16.mxu0 0
        %2564 = vmatpush2.bf16.msra.mxu0 0
        %2565 = vmatprep.subr.bf16.mxu0 0
        %2566 = vmatpush2.bf16.msra.mxu0 0
        %2567 = vmatprep.subr.bf16.mxu0 0
        %2568 = vmatpush2.bf16.msra.mxu0 0
        %2569 = vmatprep.subr.bf16.mxu0 %v2517
        %2570 = vmatpush2.bf16.msra.mxu0 %v2516
        %2571 = vmatprep.subr.bf16.mxu0 %v2515
        %2572 = vmatpush2.bf16.msra.mxu0 %v2514
        %2573 = vmatprep.mubr.bf16.mxu0 %v2539
        %2574 = vmatmul.mubr.bf16.gmra.mxu0 %v2435
        %v2575 = vpop.f32.mrf.mxu0
        %v2576 = vadd.f32 %v2429, %v2575
        %v2577 = vpop.f32.mrf.mxu0
        %v2578 = vadd.f32 %v2431, %v2577
        %v2579 = vpop.f32.mrf.mxu0
        %v2580 = vpop.f32.mrf.mxu0
        %2581 = vdwg.mxu0
        %v2582 = vld [vmem:[#allocation4] sm:$0xee]
        %s2583 = scalar_lea.vmem %s4, 320
        %v2584 = vld [vmem:[%s2583] sm:$0xff]
        %v2585 = vld [vmem:[%s2583 + $0x8] sm:$0xff]
        %v2586 = vld [vmem:[%s2583 + $0x10] sm:$0xff]
        %v2587 = vld [vmem:[%s2583 + $0x18] sm:$0xff]
        %v2588 = vld [vmem:[%s2583 + $0x20] sm:$0xff]
        %v2589 = vld [vmem:[%s2583 + $0x28] sm:$0xff]
        %v2590 = vld [vmem:[%s2583 + $0x30] sm:$0xff]
        %v2591 = vld [vmem:[%s2583 + $0x38] sm:$0xff]
        %v2592 = vld [vmem:[%s2583 + $0x40] sm:$0xff]
        %v2593 = vld [vmem:[%s2583 + $0x48] sm:$0xff]
        %v2594 = vld [vmem:[%s2583 + $0x50] sm:$0xff]
        %v2595 = vld [vmem:[%s2583 + $0x58] sm:$0xff]
        %v2596 = vld [vmem:[%s2583 + $0x60] sm:$0xff]
        %v2597 = vld [vmem:[%s2583 + $0x68] sm:$0xff]
        %v2598 = vld [vmem:[%s2583 + $0x70] sm:$0xff]
        %v2599 = vld [vmem:[%s2583 + $0x78] sm:$0xff]
        %v2600 = vld [vmem:[%s2583 + $0x80] sm:$0xff]
        %v2601 = vld [vmem:[%s2583 + $0x88] sm:$0xff]
        %v2602 = vld [vmem:[%s2583 + $0x90] sm:$0xff]
        %v2603 = vld [vmem:[%s2583 + $0x98] sm:$0xff]
        %v2605 = vunpack.c.l.b16 %v2582
        %v2606 = vunpack.c.h.b16 %v2582
        %v2607 = vpack.c.b16 %v2271, %v2605
        %v2608 = vpack.c.b16 %v2272, %v2606
        %v2609 = vrot.slane %v2607, 1
        %v2610 = vrot.slane %v2608, 1
        %v2632 = vunpack.c.l.b16 %v2584
        %v2633 = vunpack.c.h.b16 %v2584
        %v2634 = vunpack.c.l.b16 %v2585
        %v2635 = vunpack.c.h.b16 %v2585
        %v2636 = vunpack.c.l.b16 %v2586
        %v2637 = vunpack.c.h.b16 %v2586
        %v2638 = vunpack.c.l.b16 %v2587
        %v2639 = vunpack.c.h.b16 %v2587
        %v2640 = vunpack.c.l.b16 %v2588
        %v2641 = vunpack.c.h.b16 %v2588
        %v2642 = vunpack.c.l.b16 %v2589
        %v2643 = vunpack.c.h.b16 %v2589
        %v2644 = vunpack.c.l.b16 %v2590
        %v2645 = vunpack.c.h.b16 %v2590
        %v2646 = vunpack.c.l.b16 %v2591
        %v2647 = vunpack.c.h.b16 %v2591
        %v2648 = vunpack.c.l.b16 %v2592
        %v2649 = vunpack.c.h.b16 %v2592
        %v2650 = vunpack.c.l.b16 %v2593
        %v2651 = vunpack.c.h.b16 %v2593
        %v2652 = vunpack.c.l.b16 %v2594
        %v2653 = vunpack.c.h.b16 %v2594
        %v2654 = vunpack.c.l.b16 %v2595
        %v2655 = vunpack.c.h.b16 %v2595
        %v2656 = vunpack.c.l.b16 %v2596
        %v2657 = vunpack.c.h.b16 %v2596
        %v2658 = vunpack.c.l.b16 %v2597
        %v2659 = vunpack.c.h.b16 %v2597
        %v2660 = vunpack.c.l.b16 %v2598
        %v2661 = vunpack.c.h.b16 %v2598
        %v2662 = vunpack.c.l.b16 %v2599
        %v2663 = vunpack.c.h.b16 %v2599
        %v2664 = vunpack.c.l.b16 %v2600
        %v2665 = vunpack.c.h.b16 %v2600
        %v2666 = vunpack.c.l.b16 %v2601
        %v2667 = vunpack.c.h.b16 %v2601
        %v2668 = vunpack.c.l.b16 %v2602
        %v2669 = vunpack.c.h.b16 %v2602
        %v2670 = vunpack.c.l.b16 %v2603
        %v2671 = vunpack.c.h.b16 %v2603
        %v2672 = vpack.c.b16 %v2634, %v2632
        %v2673 = vpack.c.b16 %v2635, %v2633
        %v2674 = vpack.c.b16 %v2638, %v2636
        %v2675 = vpack.c.b16 %v2639, %v2637
        %v2676 = vpack.c.b16 %v2642, %v2640
        %v2677 = vpack.c.b16 %v2643, %v2641
        %v2678 = vpack.c.b16 %v2646, %v2644
        %v2679 = vpack.c.b16 %v2647, %v2645
        %v2680 = vpack.c.b16 %v2650, %v2648
        %v2681 = vpack.c.b16 %v2651, %v2649
        %v2682 = vpack.c.b16 %v2654, %v2652
        %v2683 = vpack.c.b16 %v2655, %v2653
        %v2684 = vpack.c.b16 %v2658, %v2656
        %v2685 = vpack.c.b16 %v2659, %v2657
        %v2686 = vpack.c.b16 %v2662, %v2660
        %v2687 = vpack.c.b16 %v2663, %v2661
        %v2688 = vpack.c.b16 %v2666, %v2664
        %v2689 = vpack.c.b16 %v2667, %v2665
        %v2690 = vpack.c.b16 %v2670, %v2668
        %v2691 = vpack.c.b16 %v2671, %v2669
        %v2713 = vsel %vm2390, %v2610, 0
        %2715 = vmatprep.subr.bf16.mxu0 %v2687
        %2716 = vmatpush1.bf16.msra.mxu0 %v2686
        %2717 = vmatprep.subr.bf16.mxu0 %v2685
        %2718 = vmatpush1.bf16.msra.mxu0 %v2684
        %2719 = vmatprep.subr.bf16.mxu0 %v2683
        %2720 = vmatpush1.bf16.msra.mxu0 %v2682
        %2721 = vmatprep.subr.bf16.mxu0 %v2681
        %2722 = vmatpush1.bf16.msra.mxu0 %v2680
        %2723 = vmatprep.subr.bf16.mxu0 %v2679
        %2724 = vmatpush1.bf16.msra.mxu0 %v2678
        %2725 = vmatprep.subr.bf16.mxu0 %v2677
        %2726 = vmatpush1.bf16.msra.mxu0 %v2676
        %2727 = vmatprep.subr.bf16.mxu0 %v2675
        %2728 = vmatpush1.bf16.msra.mxu0 %v2674
        %2729 = vmatprep.subr.bf16.mxu0 %v2673
        %2730 = vmatpush1.bf16.msra.mxu0 %v2672
        %2731 = vmatprep.subr.bf16.mxu0 0
        %2732 = vmatpush2.bf16.msra.mxu0 0
        %2733 = vmatprep.subr.bf16.mxu0 0
        %2734 = vmatpush2.bf16.msra.mxu0 0
        %2735 = vmatprep.subr.bf16.mxu0 0
        %2736 = vmatpush2.bf16.msra.mxu0 0
        %2737 = vmatprep.subr.bf16.mxu0 0
        %2738 = vmatpush2.bf16.msra.mxu0 0
        %2739 = vmatprep.subr.bf16.mxu0 0
        %2740 = vmatpush2.bf16.msra.mxu0 0
        %2741 = vmatprep.subr.bf16.mxu0 0
        %2742 = vmatpush2.bf16.msra.mxu0 0
        %2743 = vmatprep.subr.bf16.mxu0 %v2691
        %2744 = vmatpush2.bf16.msra.mxu0 %v2690
        %2745 = vmatprep.subr.bf16.mxu0 %v2689
        %2746 = vmatpush2.bf16.msra.mxu0 %v2688
        %2747 = vmatprep.mubr.bf16.mxu0 %v2713
        %2748 = vmatmul.mubr.bf16.gmra.mxu0 %v2609
        %v2749 = vpop.f32.mrf.mxu0
        %v2750 = vadd.f32 0.0, %v2749
        %v2751 = vpop.f32.mrf.mxu0
        %v2752 = vadd.f32 0.0, %v2751
        %v2753 = vpop.f32.mrf.mxu0
        %v2754 = vpop.f32.mrf.mxu0
        %2755 = vdwg.mxu0
        %v2756 = vadd.f32 %v2576, %v2750
        %v2757 = vadd.f32 %v2578, %v2752
        %v2758 = vld [vmem:[%s12] sm:$0x3]
        %v2760 = vlaneseq
        %v2761 = vshrl.u32 %v2760, 7
        %v2762 = vsub.s32 0, %v2761
        %v2763 = vrot.slane %v2758, %v2762
        %v2764 = vlaneseq
        %v2765 = vshrl.u32 %v2764, 7
        %v2766 = vsub.s32 1, %v2765
        %v2767 = vrot.slane %v2758, %v2766
        %v2770 = vadd.f32 %v2756, %v2763
        %v2771 = vadd.f32 %v2757, %v2767
        %vm2772 = vcmp.ge.f32.partialorder %v2770, 0.0
        %vm2773 = vcmp.ge.f32.partialorder %v2771, 0.0
        %v2774 = vmul.f32 %v2770, 0.1
        %v2775 = vmul.f32 %v2771, 0.1
        %v2776 = vsel %vm2772, %v2770, %v2774
        %v2777 = vsel %vm2773, %v2771, %v2775
        %v2778 = vpack.c.bf16 %v2776, %v2776
        %v2779 = vpack.c.bf16 %v2777, %v2777
        %v2782 = vunpack.c.l.b16 %v2778
        %v2783 = vunpack.c.l.b16 %v2779
        %v2784 = vpack.c.b16 %v2783, %v2782
        %v2786 = vshrl.u32 %v2784, 16
        %v2788 = vrot.slane %v2786, 7
        %v2789 = vshll.u32 %v2784, 16
        %v2791 = vor.u32 %v2788, %v2789
        %v2792 = vrot.slane %v2788, 4
        %v2795 = vld [vmem:[#allocation5] sm:$0xff]
        %v2796 = vsel %vm2214, %v2791, %v2795
        %2797 = vst [vmem:[#allocation5] sm:$0xff] %v2796
        %v2798 = vld [vmem:[#allocation5 + $0x8] sm:$0x11]
        %v2799 = vsel %vm2220, %v2792, %v2798
        %2800 = vst [vmem:[#allocation5 + $0x8] sm:$0x11] %v2799
        %v2801 = vld [vmem:[#allocation5] sm:$0xff]
        %v2802 = vld [vmem:[#allocation15] sm:$0xf]
        %v2803 = vld [vmem:[#allocation15 + $0x4] sm:$0xf]
        %v2804 = vld [vmem:[#allocation15 + $0x8] sm:$0xf]
        %v2805 = vld [vmem:[#allocation15 + $0xc] sm:$0xf]
        %v2806 = vld [vmem:[#allocation15 + $0x10] sm:$0xf]
        %v2807 = vld [vmem:[#allocation15 + $0x14] sm:$0xf]
        %v2808 = vld [vmem:[#allocation15 + $0x18] sm:$0xf]
        %v2809 = vld [vmem:[#allocation15 + $0x1c] sm:$0xf]
        %v2810 = vld [vmem:[#allocation15 + $0x20] sm:$0xf]
        %v2811 = vld [vmem:[#allocation15 + $0x24] sm:$0xf]
        %v2812 = vld [vmem:[#allocation15 + $0x28] sm:$0xf]
        %v2813 = vld [vmem:[#allocation15 + $0x2c] sm:$0xf]
        %v2814 = vld [vmem:[#allocation15 + $0x30] sm:$0xf]
        %v2815 = vld [vmem:[#allocation15 + $0x34] sm:$0xf]
        %v2816 = vld [vmem:[#allocation15 + $0x38] sm:$0xf]
        %v2817 = vld [vmem:[#allocation15 + $0x3c] sm:$0xf]
        %v2818 = vld [vmem:[#allocation15 + $0x40] sm:$0xf]
        %v2819 = vld [vmem:[#allocation15 + $0x44] sm:$0xf]
        %v2820 = vld [vmem:[#allocation15 + $0x48] sm:$0xf]
        %v2821 = vld [vmem:[#allocation15 + $0x4c] sm:$0xf]
        %s2822 = scalar_lea.vmem [#allocation15], 80
        %v2823 = vld [vmem:[%s2822] sm:$0xf]
        %v2824 = vld [vmem:[%s2822 + $0x4] sm:$0xf]
        %v2825 = vld [vmem:[%s2822 + $0x8] sm:$0xf]
        %v2826 = vld [vmem:[%s2822 + $0xc] sm:$0xf]
        %v2827 = vld [vmem:[%s2822 + $0x10] sm:$0xf]
        %v2828 = vld [vmem:[%s2822 + $0x14] sm:$0xf]
        %v2829 = vld [vmem:[%s2822 + $0x18] sm:$0xf]
        %v2830 = vld [vmem:[%s2822 + $0x1c] sm:$0xf]
        %v2831 = vld [vmem:[%s2822 + $0x20] sm:$0xf]
        %v2832 = vld [vmem:[%s2822 + $0x24] sm:$0xf]
        %v2833 = vld [vmem:[%s2822 + $0x28] sm:$0xf]
        %v2834 = vld [vmem:[%s2822 + $0x2c] sm:$0xf]
        %v2835 = vld [vmem:[%s2822 + $0x30] sm:$0xf]
        %v2836 = vld [vmem:[%s2822 + $0x34] sm:$0xf]
        %v2837 = vld [vmem:[%s2822 + $0x38] sm:$0xf]
        %v2838 = vld [vmem:[%s2822 + $0x3c] sm:$0xf]
        %v2839 = vld [vmem:[%s2822 + $0x40] sm:$0xf]
        %v2840 = vld [vmem:[%s2822 + $0x44] sm:$0xf]
        %v2841 = vld [vmem:[%s2822 + $0x48] sm:$0xf]
        %v2842 = vld [vmem:[%s2822 + $0x4c] sm:$0xf]
        %v2844 = vunpack.c.l.b16 %v2801
        %v2845 = vunpack.c.h.b16 %v2801
        %v2846 = vpack.c.b16 %v2844, %v2844
        %v2847 = vpack.c.b16 %v2845, %v2845
        %v2849 = vshrl.u32 %v2846, 16
        %v2851 = vshll.u32 %v2846, 16
        %v2853 = vrot.slane %v2851, 1
        %v2854 = vor.u32 %v2849, %v2853
        %v2856 = vshrl.u32 %v2847, 16
        %v2858 = vshll.u32 %v2847, 16
        %v2860 = vrot.slane %v2858, 1
        %v2861 = vor.u32 %v2856, %v2860
        %v2883 = vunpack.c.l.b16 %v2823
        %v2884 = vunpack.c.l.b16 %v2824
        %v2885 = vunpack.c.l.b16 %v2825
        %v2886 = vunpack.c.l.b16 %v2826
        %v2887 = vunpack.c.l.b16 %v2827
        %v2888 = vunpack.c.l.b16 %v2828
        %v2889 = vunpack.c.l.b16 %v2829
        %v2890 = vunpack.c.l.b16 %v2830
        %v2891 = vunpack.c.l.b16 %v2831
        %v2892 = vunpack.c.l.b16 %v2832
        %v2893 = vunpack.c.l.b16 %v2833
        %v2894 = vunpack.c.l.b16 %v2834
        %v2895 = vunpack.c.l.b16 %v2835
        %v2896 = vunpack.c.l.b16 %v2836
        %v2897 = vunpack.c.l.b16 %v2837
        %v2898 = vunpack.c.l.b16 %v2838
        %v2899 = vunpack.c.l.b16 %v2839
        %v2900 = vunpack.c.l.b16 %v2840
        %v2901 = vunpack.c.l.b16 %v2841
        %v2902 = vunpack.c.l.b16 %v2842
        %v2903 = vpack.c.b16 %v2884, %v2883
        %v2904 = vpack.c.b16 %v2886, %v2885
        %v2905 = vpack.c.b16 %v2888, %v2887
        %v2906 = vpack.c.b16 %v2890, %v2889
        %v2907 = vpack.c.b16 %v2892, %v2891
        %v2908 = vpack.c.b16 %v2894, %v2893
        %v2909 = vpack.c.b16 %v2896, %v2895
        %v2910 = vpack.c.b16 %v2898, %v2897
        %v2911 = vpack.c.b16 %v2900, %v2899
        %v2912 = vpack.c.b16 %v2902, %v2901
        %v2924 = vsel %vm2390, %v2861, 0
        %2926 = vmatprep.subr.bf16.mxu0 0
        %2927 = vmatpush1.bf16.msra.mxu0 %v2910
        %2928 = vmatprep.subr.bf16.mxu0 0
        %2929 = vmatpush1.bf16.msra.mxu0 %v2909
        %2930 = vmatprep.subr.bf16.mxu0 0
        %2931 = vmatpush1.bf16.msra.mxu0 %v2908
        %2932 = vmatprep.subr.bf16.mxu0 0
        %2933 = vmatpush1.bf16.msra.mxu0 %v2907
        %2934 = vmatprep.subr.bf16.mxu0 0
        %2935 = vmatpush1.bf16.msra.mxu0 %v2906
        %2936 = vmatprep.subr.bf16.mxu0 0
        %2937 = vmatpush1.bf16.msra.mxu0 %v2905
        %2938 = vmatprep.subr.bf16.mxu0 0
        %2939 = vmatpush1.bf16.msra.mxu0 %v2904
        %2940 = vmatprep.subr.bf16.mxu0 0
        %2941 = vmatpush1.bf16.msra.mxu0 %v2903
        %2942 = vmatprep.subr.bf16.mxu0 0
        %2943 = vmatpush2.bf16.msra.mxu0 0
        %2944 = vmatprep.subr.bf16.mxu0 0
        %2945 = vmatpush2.bf16.msra.mxu0 0
        %2946 = vmatprep.subr.bf16.mxu0 0
        %2947 = vmatpush2.bf16.msra.mxu0 0
        %2948 = vmatprep.subr.bf16.mxu0 0
        %2949 = vmatpush2.bf16.msra.mxu0 0
        %2950 = vmatprep.subr.bf16.mxu0 0
        %2951 = vmatpush2.bf16.msra.mxu0 0
        %2952 = vmatprep.subr.bf16.mxu0 0
        %2953 = vmatpush2.bf16.msra.mxu0 0
        %2954 = vmatprep.subr.bf16.mxu0 0
        %2955 = vmatpush2.bf16.msra.mxu0 %v2912
        %2956 = vmatprep.subr.bf16.mxu0 0
        %2957 = vmatpush2.bf16.msra.mxu0 %v2911
        %2958 = vmatprep.mubr.bf16.mxu0 %v2924
        %2959 = vmatmul.mubr.bf16.gmra.mxu0 %v2854
        %v2960 = vpop.f32.mrf.mxu0
        %v2961 = vadd.f32 0.0, %v2960
        %v2962 = vpop.f32.mrf.mxu0
        %v2963 = vpop.f32.mrf.mxu0
        %v2964 = vpop.f32.mrf.mxu0
        %2965 = vdwg.mxu0
        %v2987 = vunpack.c.l.b16 %v2802
        %v2988 = vunpack.c.l.b16 %v2803
        %v2989 = vunpack.c.l.b16 %v2804
        %v2990 = vunpack.c.l.b16 %v2805
        %v2991 = vunpack.c.l.b16 %v2806
        %v2992 = vunpack.c.l.b16 %v2807
        %v2993 = vunpack.c.l.b16 %v2808
        %v2994 = vunpack.c.l.b16 %v2809
        %v2995 = vunpack.c.l.b16 %v2810
        %v2996 = vunpack.c.l.b16 %v2811
        %v2997 = vunpack.c.l.b16 %v2812
        %v2998 = vunpack.c.l.b16 %v2813
        %v2999 = vunpack.c.l.b16 %v2814
        %v3000 = vunpack.c.l.b16 %v2815
        %v3001 = vunpack.c.l.b16 %v2816
        %v3002 = vunpack.c.l.b16 %v2817
        %v3003 = vunpack.c.l.b16 %v2818
        %v3004 = vunpack.c.l.b16 %v2819
        %v3005 = vunpack.c.l.b16 %v2820
        %v3006 = vunpack.c.l.b16 %v2821
        %v3007 = vpack.c.b16 %v2988, %v2987
        %v3008 = vpack.c.b16 %v2990, %v2989
        %v3009 = vpack.c.b16 %v2992, %v2991
        %v3010 = vpack.c.b16 %v2994, %v2993
        %v3011 = vpack.c.b16 %v2996, %v2995
        %v3012 = vpack.c.b16 %v2998, %v2997
        %v3013 = vpack.c.b16 %v3000, %v2999
        %v3014 = vpack.c.b16 %v3002, %v3001
        %v3015 = vpack.c.b16 %v3004, %v3003
        %v3016 = vpack.c.b16 %v3006, %v3005
        %v3027 = vsel %vm2390, %v2847, 0
        %3029 = vmatprep.subr.bf16.mxu0 0
        %3030 = vmatpush1.bf16.msra.mxu0 %v3014
        %3031 = vmatprep.subr.bf16.mxu0 0
        %3032 = vmatpush1.bf16.msra.mxu0 %v3013
        %3033 = vmatprep.subr.bf16.mxu0 0
        %3034 = vmatpush1.bf16.msra.mxu0 %v3012
        %3035 = vmatprep.subr.bf16.mxu0 0
        %3036 = vmatpush1.bf16.msra.mxu0 %v3011
        %3037 = vmatprep.subr.bf16.mxu0 0
        %3038 = vmatpush1.bf16.msra.mxu0 %v3010
        %3039 = vmatprep.subr.bf16.mxu0 0
        %3040 = vmatpush1.bf16.msra.mxu0 %v3009
        %3041 = vmatprep.subr.bf16.mxu0 0
        %3042 = vmatpush1.bf16.msra.mxu0 %v3008
        %3043 = vmatprep.subr.bf16.mxu0 0
        %3044 = vmatpush1.bf16.msra.mxu0 %v3007
        %3045 = vmatprep.subr.bf16.mxu0 0
        %3046 = vmatpush2.bf16.msra.mxu0 0
        %3047 = vmatprep.subr.bf16.mxu0 0
        %3048 = vmatpush2.bf16.msra.mxu0 0
        %3049 = vmatprep.subr.bf16.mxu0 0
        %3050 = vmatpush2.bf16.msra.mxu0 0
        %3051 = vmatprep.subr.bf16.mxu0 0
        %3052 = vmatpush2.bf16.msra.mxu0 0
        %3053 = vmatprep.subr.bf16.mxu0 0
        %3054 = vmatpush2.bf16.msra.mxu0 0
        %3055 = vmatprep.subr.bf16.mxu0 0
        %3056 = vmatpush2.bf16.msra.mxu0 0
        %3057 = vmatprep.subr.bf16.mxu0 0
        %3058 = vmatpush2.bf16.msra.mxu0 %v3016
        %3059 = vmatprep.subr.bf16.mxu0 0
        %3060 = vmatpush2.bf16.msra.mxu0 %v3015
        %3061 = vmatprep.mubr.bf16.mxu0 %v3027
        %3062 = vmatmul.mubr.bf16.gmra.mxu0 %v2846
        %v3063 = vpop.f32.mrf.mxu0
        %v3064 = vadd.f32 %v2961, %v3063
        %v3065 = vpop.f32.mrf.mxu0
        %v3066 = vpop.f32.mrf.mxu0
        %v3067 = vpop.f32.mrf.mxu0
        %3068 = vdwg.mxu0
        %v3069 = vld [vmem:[#allocation5] sm:$0xee]
        %v3070 = vld [vmem:[#allocation5 + $0x8] sm:$0x11]
        %s3071 = scalar_lea.vmem [#allocation15], 160
        %v3072 = vld [vmem:[%s3071] sm:$0xf]
        %v3073 = vld [vmem:[%s3071 + $0x4] sm:$0xf]
        %v3074 = vld [vmem:[%s3071 + $0x8] sm:$0xf]
        %v3075 = vld [vmem:[%s3071 + $0xc] sm:$0xf]
        %v3076 = vld [vmem:[%s3071 + $0x10] sm:$0xf]
        %v3077 = vld [vmem:[%s3071 + $0x14] sm:$0xf]
        %v3078 = vld [vmem:[%s3071 + $0x18] sm:$0xf]
        %v3079 = vld [vmem:[%s3071 + $0x1c] sm:$0xf]
        %v3080 = vld [vmem:[%s3071 + $0x20] sm:$0xf]
        %v3081 = vld [vmem:[%s3071 + $0x24] sm:$0xf]
        %v3082 = vld [vmem:[%s3071 + $0x28] sm:$0xf]
        %v3083 = vld [vmem:[%s3071 + $0x2c] sm:$0xf]
        %v3084 = vld [vmem:[%s3071 + $0x30] sm:$0xf]
        %v3085 = vld [vmem:[%s3071 + $0x34] sm:$0xf]
        %v3086 = vld [vmem:[%s3071 + $0x38] sm:$0xf]
        %v3087 = vld [vmem:[%s3071 + $0x3c] sm:$0xf]
        %v3088 = vld [vmem:[%s3071 + $0x40] sm:$0xf]
        %v3089 = vld [vmem:[%s3071 + $0x44] sm:$0xf]
        %v3090 = vld [vmem:[%s3071 + $0x48] sm:$0xf]
        %v3091 = vld [vmem:[%s3071 + $0x4c] sm:$0xf]
        %v3094 = vunpack.c.l.b16 %v3069
        %v3095 = vunpack.c.h.b16 %v3069
        %v3096 = vunpack.c.l.b16 %v3070
        %v3097 = vunpack.c.h.b16 %v3070
        %v3098 = vpack.c.b16 %v3096, %v3094
        %v3099 = vpack.c.b16 %v3097, %v3095
        %v3100 = vrot.slane %v3098, 1
        %v3101 = vrot.slane %v3099, 1
        %v3123 = vunpack.c.l.b16 %v3072
        %v3124 = vunpack.c.l.b16 %v3073
        %v3125 = vunpack.c.l.b16 %v3074
        %v3126 = vunpack.c.l.b16 %v3075
        %v3127 = vunpack.c.l.b16 %v3076
        %v3128 = vunpack.c.l.b16 %v3077
        %v3129 = vunpack.c.l.b16 %v3078
        %v3130 = vunpack.c.l.b16 %v3079
        %v3131 = vunpack.c.l.b16 %v3080
        %v3132 = vunpack.c.l.b16 %v3081
        %v3133 = vunpack.c.l.b16 %v3082
        %v3134 = vunpack.c.l.b16 %v3083
        %v3135 = vunpack.c.l.b16 %v3084
        %v3136 = vunpack.c.l.b16 %v3085
        %v3137 = vunpack.c.l.b16 %v3086
        %v3138 = vunpack.c.l.b16 %v3087
        %v3139 = vunpack.c.l.b16 %v3088
        %v3140 = vunpack.c.l.b16 %v3089
        %v3141 = vunpack.c.l.b16 %v3090
        %v3142 = vunpack.c.l.b16 %v3091
        %v3143 = vpack.c.b16 %v3124, %v3123
        %v3144 = vpack.c.b16 %v3126, %v3125
        %v3145 = vpack.c.b16 %v3128, %v3127
        %v3146 = vpack.c.b16 %v3130, %v3129
        %v3147 = vpack.c.b16 %v3132, %v3131
        %v3148 = vpack.c.b16 %v3134, %v3133
        %v3149 = vpack.c.b16 %v3136, %v3135
        %v3150 = vpack.c.b16 %v3138, %v3137
        %v3151 = vpack.c.b16 %v3140, %v3139
        %v3152 = vpack.c.b16 %v3142, %v3141
        %v3164 = vsel %vm2390, %v3101, 0
        %3166 = vmatprep.subr.bf16.mxu0 0
        %3167 = vmatpush1.bf16.msra.mxu0 %v3150
        %3168 = vmatprep.subr.bf16.mxu0 0
        %3169 = vmatpush1.bf16.msra.mxu0 %v3149
        %3170 = vmatprep.subr.bf16.mxu0 0
        %3171 = vmatpush1.bf16.msra.mxu0 %v3148
        %3172 = vmatprep.subr.bf16.mxu0 0
        %3173 = vmatpush1.bf16.msra.mxu0 %v3147
        %3174 = vmatprep.subr.bf16.mxu0 0
        %3175 = vmatpush1.bf16.msra.mxu0 %v3146
        %3176 = vmatprep.subr.bf16.mxu0 0
        %3177 = vmatpush1.bf16.msra.mxu0 %v3145
        %3178 = vmatprep.subr.bf16.mxu0 0
        %3179 = vmatpush1.bf16.msra.mxu0 %v3144
        %3180 = vmatprep.subr.bf16.mxu0 0
        %3181 = vmatpush1.bf16.msra.mxu0 %v3143
        %3182 = vmatprep.subr.bf16.mxu0 0
        %3183 = vmatpush2.bf16.msra.mxu0 0
        %3184 = vmatprep.subr.bf16.mxu0 0
        %3185 = vmatpush2.bf16.msra.mxu0 0
        %3186 = vmatprep.subr.bf16.mxu0 0
        %3187 = vmatpush2.bf16.msra.mxu0 0
        %3188 = vmatprep.subr.bf16.mxu0 0
        %3189 = vmatpush2.bf16.msra.mxu0 0
        %3190 = vmatprep.subr.bf16.mxu0 0
        %3191 = vmatpush2.bf16.msra.mxu0 0
        %3192 = vmatprep.subr.bf16.mxu0 0
        %3193 = vmatpush2.bf16.msra.mxu0 0
        %3194 = vmatprep.subr.bf16.mxu0 0
        %3195 = vmatpush2.bf16.msra.mxu0 %v3152
        %3196 = vmatprep.subr.bf16.mxu0 0
        %3197 = vmatpush2.bf16.msra.mxu0 %v3151
        %3198 = vmatprep.mubr.bf16.mxu0 %v3164
        %3199 = vmatmul.mubr.bf16.gmra.mxu0 %v3100
        %v3200 = vpop.f32.mrf.mxu0
        %v3201 = vadd.f32 0.0, %v3200
        %v3202 = vpop.f32.mrf.mxu0
        %v3203 = vpop.f32.mrf.mxu0
        %v3204 = vpop.f32.mrf.mxu0
        %3205 = vdwg.mxu0
        %v3206 = vadd.f32 %v3064, %v3201
        %s3207 = scalar_lea.vmem [#allocation15], 240
        %v3208 = vld [vmem:[%s3207] sm:$0xf]
        %v3209 = vld [vmem:[%s3207 + $0x4] sm:$0xf]
        %v3210 = vld [vmem:[%s3207 + $0x8] sm:$0xf]
        %v3211 = vld [vmem:[%s3207 + $0xc] sm:$0xf]
        %v3212 = vld [vmem:[%s3207 + $0x10] sm:$0xf]
        %v3213 = vld [vmem:[%s3207 + $0x14] sm:$0xf]
        %v3214 = vld [vmem:[%s3207 + $0x18] sm:$0xf]
        %v3215 = vld [vmem:[%s3207 + $0x1c] sm:$0xf]
        %v3216 = vld [vmem:[%s3207 + $0x20] sm:$0xf]
        %v3217 = vld [vmem:[%s3207 + $0x24] sm:$0xf]
        %v3218 = vld [vmem:[%s3207 + $0x28] sm:$0xf]
        %v3219 = vld [vmem:[%s3207 + $0x2c] sm:$0xf]
        %v3220 = vld [vmem:[%s3207 + $0x30] sm:$0xf]
        %v3221 = vld [vmem:[%s3207 + $0x34] sm:$0xf]
        %v3222 = vld [vmem:[%s3207 + $0x38] sm:$0xf]
        %v3223 = vld [vmem:[%s3207 + $0x3c] sm:$0xf]
        %v3224 = vld [vmem:[%s3207 + $0x40] sm:$0xf]
        %v3225 = vld [vmem:[%s3207 + $0x44] sm:$0xf]
        %v3226 = vld [vmem:[%s3207 + $0x48] sm:$0xf]
        %v3227 = vld [vmem:[%s3207 + $0x4c] sm:$0xf]
        %v3229 = vshrl.u32 %v3098, 16
        %v3231 = vrot.slane %v3229, 1
        %v3232 = vshll.u32 %v3098, 16
        %v3234 = vrot.slane %v3232, 2
        %v3235 = vor.u32 %v3231, %v3234
        %v3237 = vshrl.u32 %v3099, 16
        %v3239 = vrot.slane %v3237, 1
        %v3240 = vshll.u32 %v3099, 16
        %v3242 = vrot.slane %v3240, 2
        %v3243 = vor.u32 %v3239, %v3242
        %v3265 = vunpack.c.l.b16 %v3208
        %v3266 = vunpack.c.l.b16 %v3209
        %v3267 = vunpack.c.l.b16 %v3210
        %v3268 = vunpack.c.l.b16 %v3211
        %v3269 = vunpack.c.l.b16 %v3212
        %v3270 = vunpack.c.l.b16 %v3213
        %v3271 = vunpack.c.l.b16 %v3214
        %v3272 = vunpack.c.l.b16 %v3215
        %v3273 = vunpack.c.l.b16 %v3216
        %v3274 = vunpack.c.l.b16 %v3217
        %v3275 = vunpack.c.l.b16 %v3218
        %v3276 = vunpack.c.l.b16 %v3219
        %v3277 = vunpack.c.l.b16 %v3220
        %v3278 = vunpack.c.l.b16 %v3221
        %v3279 = vunpack.c.l.b16 %v3222
        %v3280 = vunpack.c.l.b16 %v3223
        %v3281 = vunpack.c.l.b16 %v3224
        %v3282 = vunpack.c.l.b16 %v3225
        %v3283 = vunpack.c.l.b16 %v3226
        %v3284 = vunpack.c.l.b16 %v3227
        %v3285 = vpack.c.b16 %v3266, %v3265
        %v3286 = vpack.c.b16 %v3268, %v3267
        %v3287 = vpack.c.b16 %v3270, %v3269
        %v3288 = vpack.c.b16 %v3272, %v3271
        %v3289 = vpack.c.b16 %v3274, %v3273
        %v3290 = vpack.c.b16 %v3276, %v3275
        %v3291 = vpack.c.b16 %v3278, %v3277
        %v3292 = vpack.c.b16 %v3280, %v3279
        %v3293 = vpack.c.b16 %v3282, %v3281
        %v3294 = vpack.c.b16 %v3284, %v3283
        %v3306 = vsel %vm2390, %v3243, 0
        %3308 = vmatprep.subr.bf16.mxu0 0
        %3309 = vmatpush1.bf16.msra.mxu0 %v3292
        %3310 = vmatprep.subr.bf16.mxu0 0
        %3311 = vmatpush1.bf16.msra.mxu0 %v3291
        %3312 = vmatprep.subr.bf16.mxu0 0
        %3313 = vmatpush1.bf16.msra.mxu0 %v3290
        %3314 = vmatprep.subr.bf16.mxu0 0
        %3315 = vmatpush1.bf16.msra.mxu0 %v3289
        %3316 = vmatprep.subr.bf16.mxu0 0
        %3317 = vmatpush1.bf16.msra.mxu0 %v3288
        %3318 = vmatprep.subr.bf16.mxu0 0
        %3319 = vmatpush1.bf16.msra.mxu0 %v3287
        %3320 = vmatprep.subr.bf16.mxu0 0
        %3321 = vmatpush1.bf16.msra.mxu0 %v3286
        %3322 = vmatprep.subr.bf16.mxu0 0
        %3323 = vmatpush1.bf16.msra.mxu0 %v3285
        %3324 = vmatprep.subr.bf16.mxu0 0
        %3325 = vmatpush2.bf16.msra.mxu0 0
        %3326 = vmatprep.subr.bf16.mxu0 0
        %3327 = vmatpush2.bf16.msra.mxu0 0
        %3328 = vmatprep.subr.bf16.mxu0 0
        %3329 = vmatpush2.bf16.msra.mxu0 0
        %3330 = vmatprep.subr.bf16.mxu0 0
        %3331 = vmatpush2.bf16.msra.mxu0 0
        %3332 = vmatprep.subr.bf16.mxu0 0
        %3333 = vmatpush2.bf16.msra.mxu0 0
        %3334 = vmatprep.subr.bf16.mxu0 0
        %3335 = vmatpush2.bf16.msra.mxu0 0
        %3336 = vmatprep.subr.bf16.mxu0 0
        %3337 = vmatpush2.bf16.msra.mxu0 %v3294
        %3338 = vmatprep.subr.bf16.mxu0 0
        %3339 = vmatpush2.bf16.msra.mxu0 %v3293
        %3340 = vmatprep.mubr.bf16.mxu0 %v3306
        %3341 = vmatmul.mubr.bf16.gmra.mxu0 %v3235
        %v3342 = vpop.f32.mrf.mxu0
        %v3343 = vadd.f32 0.0, %v3342
        %v3344 = vpop.f32.mrf.mxu0
        %v3345 = vpop.f32.mrf.mxu0
        %v3346 = vpop.f32.mrf.mxu0
        %3347 = vdwg.mxu0
        %v3348 = vadd.f32 %v3206, %v3343
        %v3349 = vld [vmem:[%s13] sm:$0x1]
        %v3351 = vlaneseq
        %v3352 = vshrl.u32 %v3351, 7
        %v3353 = vsub.s32 0, %v3352
        %v3354 = vrot.slane %v3349, %v3353
        %v3356 = vadd.f32 %v3348, %v3354
        %vm3357 = vcmp.ge.f32.partialorder %v3356, 0.0
        %v3358 = vmul.f32 %v3356, 0.1
        %v3359 = vsel %vm3357, %v3356, %v3358
        %v3360 = vpack.c.bf16 %v3359, %v3359
        %vm3361 = vcmask 56320
        %v3362 = vsel %vm3361, %v1763, 0
        %v3364 = vsel %vm741, 4294967295, 65535
        %v3365 = vsel %vm718, %v3364, 0
        %v3367 = vand.u32 %v3360, %v3365
        %3369 = vmatprep.subr.bf16.mxu0 0
        %3370 = vmatpush1.bf16.msra.mxu0 0
        %3371 = vmatprep.subr.bf16.mxu0 0
        %3372 = vmatpush1.bf16.msra.mxu0 0
        %3373 = vmatprep.subr.bf16.mxu0 0
        %3374 = vmatpush1.bf16.msra.mxu0 0
        %3375 = vmatprep.subr.bf16.mxu0 0
        %3376 = vmatpush1.bf16.msra.mxu0 0
        %3377 = vmatprep.subr.bf16.mxu0 0
        %3378 = vmatpush1.bf16.msra.mxu0 0
        %3379 = vmatprep.subr.bf16.mxu0 0
        %3380 = vmatpush1.bf16.msra.mxu0 0
        %3381 = vmatprep.subr.bf16.mxu0 0
        %3382 = vmatpush1.bf16.msra.mxu0 0
        %3383 = vmatprep.subr.bf16.mxu0 0
        %3384 = vmatpush1.bf16.msra.mxu0 %v3367
        %3385 = vmatprep.subr.bf16.mxu0 0
        %3386 = vmatpush2.bf16.msra.mxu0 0
        %3387 = vmatprep.subr.bf16.mxu0 0
        %3388 = vmatpush2.bf16.msra.mxu0 0
        %3389 = vmatprep.subr.bf16.mxu0 0
        %3390 = vmatpush2.bf16.msra.mxu0 0
        %3391 = vmatprep.subr.bf16.mxu0 0
        %3392 = vmatpush2.bf16.msra.mxu0 0
        %3393 = vmatprep.subr.bf16.mxu0 0
        %3394 = vmatpush2.bf16.msra.mxu0 0
        %3395 = vmatprep.subr.bf16.mxu0 0
        %3396 = vmatpush2.bf16.msra.mxu0 0
        %3397 = vmatprep.subr.bf16.mxu0 0
        %3398 = vmatpush2.bf16.msra.mxu0 0
        %3399 = vmatprep.subr.bf16.mxu0 0
        %3400 = vmatpush2.bf16.msra.mxu0 0
        %3401 = vmatprep.mubr.bf16.mxu0 0
        %3402 = vmatmul.mubr.bf16.gmra.mxu0 %v3362
        %v3403 = vpop.f32.mrf.mxu0
        %v3404 = vadd.f32 0.0, %v3403
        %v3405 = vpop.f32.mrf.mxu0
        %v3406 = vpop.f32.mrf.mxu0
        %v3407 = vpop.f32.mrf.mxu0
        %3408 = vdwg.mxu0
        %v3409 = vpack.c.bf16 %v3404, %v3404
        %v3411 = vunpack.c.l.b16 %v3409
        %v3412 = vpack.c.b16 %v3411, %v3411
        %v3414 = vshrl.u32 %v3412, 16
        %v3416 = vrot.slane %v3414, 7
        %v3417 = vshll.u32 %v3412, 16
        %v3419 = vor.u32 %v3416, %v3417
        %vm3421 = vcmask 780288
        %vm3422 = vsmask.f32 2306
        %vm3423 = vmand %vm3421, %vm3422
        %v3424 = vld [vmem:[#allocation6] sm:$0x7]
        %v3425 = vsel %vm3423, %v3419, %v3424
        %3426 = vst [vmem:[#allocation6] sm:$0x7] %v3425
        %v3427 = vld [vmem:[#allocation6] sm:$0x3]
        %v3428 = vld [vmem:[#allocation17] sm:$0xff]
        %v3429 = vld [vmem:[#allocation17 + $0x8] sm:$0xff]
        %v3430 = vld [vmem:[#allocation17 + $0x10] sm:$0xff]
        %v3431 = vld [vmem:[#allocation17 + $0x18] sm:$0xff]
        %v3432 = vld [vmem:[#allocation17 + $0x20] sm:$0xff]
        %v3433 = vld [vmem:[#allocation17 + $0x28] sm:$0xff]
        %v3434 = vld [vmem:[#allocation17 + $0x30] sm:$0xff]
        %v3435 = vld [vmem:[#allocation17 + $0x38] sm:$0xff]
        %v3436 = vld [vmem:[#allocation17 + $0x40] sm:$0xff]
        %v3437 = vld [vmem:[#allocation17 + $0x48] sm:$0xff]
        %v3438 = vld [vmem:[#allocation17 + $0x50] sm:$0xff]
        %v3439 = vld [vmem:[#allocation17 + $0x58] sm:$0xff]
        %v3440 = vld [vmem:[#allocation6] sm:$0x7]
        %s3441 = scalar_lea.vmem [#allocation17], 96
        %v3442 = vld [vmem:[%s3441] sm:$0xff]
        %v3443 = vld [vmem:[%s3441 + $0x8] sm:$0xff]
        %v3444 = vld [vmem:[%s3441 + $0x10] sm:$0xff]
        %v3445 = vld [vmem:[%s3441 + $0x18] sm:$0xff]
        %v3446 = vld [vmem:[%s3441 + $0x20] sm:$0xff]
        %v3447 = vld [vmem:[%s3441 + $0x28] sm:$0xff]
        %v3448 = vld [vmem:[%s3441 + $0x30] sm:$0xff]
        %v3449 = vld [vmem:[%s3441 + $0x38] sm:$0xff]
        %v3450 = vld [vmem:[%s3441 + $0x40] sm:$0xff]
        %v3451 = vld [vmem:[%s3441 + $0x48] sm:$0xff]
        %v3452 = vld [vmem:[%s3441 + $0x50] sm:$0xff]
        %v3453 = vld [vmem:[%s3441 + $0x58] sm:$0xff]
        %v3455 = vunpack.c.l.b16 %v3440
        %v3456 = vpack.c.b16 %v3455, %v3455
        %v3458 = vshrl.u32 %v3456, 16
        %v3460 = vshll.u32 %v3456, 16
        %v3462 = vrot.slane %v3460, 1
        %v3463 = vor.u32 %v3458, %v3462
        %v3476 = vunpack.c.l.b16 %v3442
        %v3477 = vunpack.c.h.b16 %v3442
        %v3478 = vunpack.c.l.b16 %v3443
        %v3479 = vunpack.c.h.b16 %v3443
        %v3480 = vunpack.c.l.b16 %v3444
        %v3481 = vunpack.c.h.b16 %v3444
        %v3482 = vunpack.c.l.b16 %v3445
        %v3483 = vunpack.c.h.b16 %v3445
        %v3484 = vunpack.c.l.b16 %v3446
        %v3485 = vunpack.c.h.b16 %v3446
        %v3486 = vunpack.c.l.b16 %v3447
        %v3487 = vunpack.c.h.b16 %v3447
        %v3488 = vunpack.c.l.b16 %v3448
        %v3489 = vunpack.c.h.b16 %v3448
        %v3490 = vunpack.c.l.b16 %v3449
        %v3491 = vunpack.c.h.b16 %v3449
        %v3492 = vunpack.c.l.b16 %v3450
        %v3493 = vunpack.c.h.b16 %v3450
        %v3494 = vunpack.c.l.b16 %v3451
        %v3495 = vunpack.c.h.b16 %v3451
        %v3496 = vunpack.c.l.b16 %v3452
        %v3497 = vunpack.c.h.b16 %v3452
        %v3498 = vunpack.c.l.b16 %v3453
        %v3499 = vunpack.c.h.b16 %v3453
        %v3500 = vpack.c.b16 %v3478, %v3476
        %v3501 = vpack.c.b16 %v3479, %v3477
        %v3502 = vpack.c.b16 %v3482, %v3480
        %v3503 = vpack.c.b16 %v3483, %v3481
        %v3504 = vpack.c.b16 %v3486, %v3484
        %v3505 = vpack.c.b16 %v3487, %v3485
        %v3506 = vpack.c.b16 %v3490, %v3488
        %v3507 = vpack.c.b16 %v3491, %v3489
        %v3508 = vpack.c.b16 %v3494, %v3492
        %v3509 = vpack.c.b16 %v3495, %v3493
        %v3510 = vpack.c.b16 %v3498, %v3496
        %v3511 = vpack.c.b16 %v3499, %v3497
        %vm3524 = vcmask 785408
        %v3526 = vsel %vm3524, %v3463, 0
        %3528 = vmatprep.subr.bf16.mxu0 0
        %3529 = vmatpush1.bf16.msra.mxu0 0
        %3530 = vmatprep.subr.bf16.mxu0 0
        %3531 = vmatpush1.bf16.msra.mxu0 0
        %3532 = vmatprep.subr.bf16.mxu0 %v3511
        %3533 = vmatpush1.bf16.msra.mxu0 %v3510
        %3534 = vmatprep.subr.bf16.mxu0 %v3509
        %3535 = vmatpush1.bf16.msra.mxu0 %v3508
        %3536 = vmatprep.subr.bf16.mxu0 %v3507
        %3537 = vmatpush1.bf16.msra.mxu0 %v3506
        %3538 = vmatprep.subr.bf16.mxu0 %v3505
        %3539 = vmatpush1.bf16.msra.mxu0 %v3504
        %3540 = vmatprep.subr.bf16.mxu0 %v3503
        %3541 = vmatpush1.bf16.msra.mxu0 %v3502
        %3542 = vmatprep.subr.bf16.mxu0 %v3501
        %3543 = vmatpush1.bf16.msra.mxu0 %v3500
        %3544 = vmatprep.subr.bf16.mxu0 0
        %3545 = vmatpush2.bf16.msra.mxu0 0
        %3546 = vmatprep.subr.bf16.mxu0 0
        %3547 = vmatpush2.bf16.msra.mxu0 0
        %3548 = vmatprep.subr.bf16.mxu0 0
        %3549 = vmatpush2.bf16.msra.mxu0 0
        %3550 = vmatprep.subr.bf16.mxu0 0
        %3551 = vmatpush2.bf16.msra.mxu0 0
        %3552 = vmatprep.subr.bf16.mxu0 0
        %3553 = vmatpush2.bf16.msra.mxu0 0
        %3554 = vmatprep.subr.bf16.mxu0 0
        %3555 = vmatpush2.bf16.msra.mxu0 0
        %3556 = vmatprep.subr.bf16.mxu0 0
        %3557 = vmatpush2.bf16.msra.mxu0 0
        %3558 = vmatprep.subr.bf16.mxu0 0
        %3559 = vmatpush2.bf16.msra.mxu0 0
        %3560 = vmatprep.mubr.bf16.mxu0 0
        %3561 = vmatmul.mubr.bf16.gmra.mxu0 %v3526
        %v3562 = vpop.f32.mrf.mxu0
        %v3563 = vadd.f32 0.0, %v3562
        %v3564 = vpop.f32.mrf.mxu0
        %v3565 = vadd.f32 0.0, %v3564
        %v3566 = vpop.f32.mrf.mxu0
        %v3567 = vpop.f32.mrf.mxu0
        %3568 = vdwg.mxu0
        %v3581 = vunpack.c.l.b16 %v3428
        %v3582 = vunpack.c.h.b16 %v3428
        %v3583 = vunpack.c.l.b16 %v3429
        %v3584 = vunpack.c.h.b16 %v3429
        %v3585 = vunpack.c.l.b16 %v3430
        %v3586 = vunpack.c.h.b16 %v3430
        %v3587 = vunpack.c.l.b16 %v3431
        %v3588 = vunpack.c.h.b16 %v3431
        %v3589 = vunpack.c.l.b16 %v3432
        %v3590 = vunpack.c.h.b16 %v3432
        %v3591 = vunpack.c.l.b16 %v3433
        %v3592 = vunpack.c.h.b16 %v3433
        %v3593 = vunpack.c.l.b16 %v3434
        %v3594 = vunpack.c.h.b16 %v3434
        %v3595 = vunpack.c.l.b16 %v3435
        %v3596 = vunpack.c.h.b16 %v3435
        %v3597 = vunpack.c.l.b16 %v3436
        %v3598 = vunpack.c.h.b16 %v3436
        %v3599 = vunpack.c.l.b16 %v3437
        %v3600 = vunpack.c.h.b16 %v3437
        %v3601 = vunpack.c.l.b16 %v3438
        %v3602 = vunpack.c.h.b16 %v3438
        %v3603 = vunpack.c.l.b16 %v3439
        %v3604 = vunpack.c.h.b16 %v3439
        %v3605 = vpack.c.b16 %v3583, %v3581
        %v3606 = vpack.c.b16 %v3584, %v3582
        %v3607 = vpack.c.b16 %v3587, %v3585
        %v3608 = vpack.c.b16 %v3588, %v3586
        %v3609 = vpack.c.b16 %v3591, %v3589
        %v3610 = vpack.c.b16 %v3592, %v3590
        %v3611 = vpack.c.b16 %v3595, %v3593
        %v3612 = vpack.c.b16 %v3596, %v3594
        %v3613 = vpack.c.b16 %v3599, %v3597
        %v3614 = vpack.c.b16 %v3600, %v3598
        %v3615 = vpack.c.b16 %v3603, %v3601
        %v3616 = vpack.c.b16 %v3604, %v3602
        %v3630 = vsel %vm3524, %v3427, 0
        %3632 = vmatprep.subr.bf16.mxu0 0
        %3633 = vmatpush1.bf16.msra.mxu0 0
        %3634 = vmatprep.subr.bf16.mxu0 0
        %3635 = vmatpush1.bf16.msra.mxu0 0
        %3636 = vmatprep.subr.bf16.mxu0 %v3616
        %3637 = vmatpush1.bf16.msra.mxu0 %v3615
        %3638 = vmatprep.subr.bf16.mxu0 %v3614
        %3639 = vmatpush1.bf16.msra.mxu0 %v3613
        %3640 = vmatprep.subr.bf16.mxu0 %v3612
        %3641 = vmatpush1.bf16.msra.mxu0 %v3611
        %3642 = vmatprep.subr.bf16.mxu0 %v3610
        %3643 = vmatpush1.bf16.msra.mxu0 %v3609
        %3644 = vmatprep.subr.bf16.mxu0 %v3608
        %3645 = vmatpush1.bf16.msra.mxu0 %v3607
        %3646 = vmatprep.subr.bf16.mxu0 %v3606
        %3647 = vmatpush1.bf16.msra.mxu0 %v3605
        %3648 = vmatprep.subr.bf16.mxu0 0
        %3649 = vmatpush2.bf16.msra.mxu0 0
        %3650 = vmatprep.subr.bf16.mxu0 0
        %3651 = vmatpush2.bf16.msra.mxu0 0
        %3652 = vmatprep.subr.bf16.mxu0 0
        %3653 = vmatpush2.bf16.msra.mxu0 0
        %3654 = vmatprep.subr.bf16.mxu0 0
        %3655 = vmatpush2.bf16.msra.mxu0 0
        %3656 = vmatprep.subr.bf16.mxu0 0
        %3657 = vmatpush2.bf16.msra.mxu0 0
        %3658 = vmatprep.subr.bf16.mxu0 0
        %3659 = vmatpush2.bf16.msra.mxu0 0
        %3660 = vmatprep.subr.bf16.mxu0 0
        %3661 = vmatpush2.bf16.msra.mxu0 0
        %3662 = vmatprep.subr.bf16.mxu0 0
        %3663 = vmatpush2.bf16.msra.mxu0 0
        %3664 = vmatprep.mubr.bf16.mxu0 0
        %3665 = vmatmul.mubr.bf16.gmra.mxu0 %v3630
        %v3666 = vpop.f32.mrf.mxu0
        %v3667 = vadd.f32 %v3563, %v3666
        %v3668 = vpop.f32.mrf.mxu0
        %v3669 = vadd.f32 %v3565, %v3668
        %v3670 = vpop.f32.mrf.mxu0
        %v3671 = vpop.f32.mrf.mxu0
        %3672 = vdwg.mxu0
        %v3673 = vld [vmem:[#allocation6] sm:$0x6]
        %s3674 = scalar_lea.vmem [#allocation17], 192
        %v3675 = vld [vmem:[%s3674] sm:$0xff]
        %v3676 = vld [vmem:[%s3674 + $0x8] sm:$0xff]
        %v3677 = vld [vmem:[%s3674 + $0x10] sm:$0xff]
        %v3678 = vld [vmem:[%s3674 + $0x18] sm:$0xff]
        %v3679 = vld [vmem:[%s3674 + $0x20] sm:$0xff]
        %v3680 = vld [vmem:[%s3674 + $0x28] sm:$0xff]
        %v3681 = vld [vmem:[%s3674 + $0x30] sm:$0xff]
        %v3682 = vld [vmem:[%s3674 + $0x38] sm:$0xff]
        %v3683 = vld [vmem:[%s3674 + $0x40] sm:$0xff]
        %v3684 = vld [vmem:[%s3674 + $0x48] sm:$0xff]
        %v3685 = vld [vmem:[%s3674 + $0x50] sm:$0xff]
        %v3686 = vld [vmem:[%s3674 + $0x58] sm:$0xff]
        %v3688 = vunpack.c.l.b16 %v3673
        %v3689 = vpack.c.b16 %v3688, %v3688
        %v3690 = vrot.slane %v3689, 1
        %v3703 = vunpack.c.l.b16 %v3675
        %v3704 = vunpack.c.h.b16 %v3675
        %v3705 = vunpack.c.l.b16 %v3676
        %v3706 = vunpack.c.h.b16 %v3676
        %v3707 = vunpack.c.l.b16 %v3677
        %v3708 = vunpack.c.h.b16 %v3677
        %v3709 = vunpack.c.l.b16 %v3678
        %v3710 = vunpack.c.h.b16 %v3678
        %v3711 = vunpack.c.l.b16 %v3679
        %v3712 = vunpack.c.h.b16 %v3679
        %v3713 = vunpack.c.l.b16 %v3680
        %v3714 = vunpack.c.h.b16 %v3680
        %v3715 = vunpack.c.l.b16 %v3681
        %v3716 = vunpack.c.h.b16 %v3681
        %v3717 = vunpack.c.l.b16 %v3682
        %v3718 = vunpack.c.h.b16 %v3682
        %v3719 = vunpack.c.l.b16 %v3683
        %v3720 = vunpack.c.h.b16 %v3683
        %v3721 = vunpack.c.l.b16 %v3684
        %v3722 = vunpack.c.h.b16 %v3684
        %v3723 = vunpack.c.l.b16 %v3685
        %v3724 = vunpack.c.h.b16 %v3685
        %v3725 = vunpack.c.l.b16 %v3686
        %v3726 = vunpack.c.h.b16 %v3686
        %v3727 = vpack.c.b16 %v3705, %v3703
        %v3728 = vpack.c.b16 %v3706, %v3704
        %v3729 = vpack.c.b16 %v3709, %v3707
        %v3730 = vpack.c.b16 %v3710, %v3708
        %v3731 = vpack.c.b16 %v3713, %v3711
        %v3732 = vpack.c.b16 %v3714, %v3712
        %v3733 = vpack.c.b16 %v3717, %v3715
        %v3734 = vpack.c.b16 %v3718, %v3716
        %v3735 = vpack.c.b16 %v3721, %v3719
        %v3736 = vpack.c.b16 %v3722, %v3720
        %v3737 = vpack.c.b16 %v3725, %v3723
        %v3738 = vpack.c.b16 %v3726, %v3724
        %v3752 = vsel %vm3524, %v3690, 0
        %3754 = vmatprep.subr.bf16.mxu0 0
        %3755 = vmatpush1.bf16.msra.mxu0 0
        %3756 = vmatprep.subr.bf16.mxu0 0
        %3757 = vmatpush1.bf16.msra.mxu0 0
        %3758 = vmatprep.subr.bf16.mxu0 %v3738
        %3759 = vmatpush1.bf16.msra.mxu0 %v3737
        %3760 = vmatprep.subr.bf16.mxu0 %v3736
        %3761 = vmatpush1.bf16.msra.mxu0 %v3735
        %3762 = vmatprep.subr.bf16.mxu0 %v3734
        %3763 = vmatpush1.bf16.msra.mxu0 %v3733
        %3764 = vmatprep.subr.bf16.mxu0 %v3732
        %3765 = vmatpush1.bf16.msra.mxu0 %v3731
        %3766 = vmatprep.subr.bf16.mxu0 %v3730
        %3767 = vmatpush1.bf16.msra.mxu0 %v3729
        %3768 = vmatprep.subr.bf16.mxu0 %v3728
        %3769 = vmatpush1.bf16.msra.mxu0 %v3727
        %3770 = vmatprep.subr.bf16.mxu0 0
        %3771 = vmatpush2.bf16.msra.mxu0 0
        %3772 = vmatprep.subr.bf16.mxu0 0
        %3773 = vmatpush2.bf16.msra.mxu0 0
        %3774 = vmatprep.subr.bf16.mxu0 0
        %3775 = vmatpush2.bf16.msra.mxu0 0
        %3776 = vmatprep.subr.bf16.mxu0 0
        %3777 = vmatpush2.bf16.msra.mxu0 0
        %3778 = vmatprep.subr.bf16.mxu0 0
        %3779 = vmatpush2.bf16.msra.mxu0 0
        %3780 = vmatprep.subr.bf16.mxu0 0
        %3781 = vmatpush2.bf16.msra.mxu0 0
        %3782 = vmatprep.subr.bf16.mxu0 0
        %3783 = vmatpush2.bf16.msra.mxu0 0
        %3784 = vmatprep.subr.bf16.mxu0 0
        %3785 = vmatpush2.bf16.msra.mxu0 0
        %3786 = vmatprep.mubr.bf16.mxu0 0
        %3787 = vmatmul.mubr.bf16.gmra.mxu0 %v3752
        %v3788 = vpop.f32.mrf.mxu0
        %v3789 = vadd.f32 0.0, %v3788
        %v3790 = vpop.f32.mrf.mxu0
        %v3791 = vadd.f32 0.0, %v3790
        %v3792 = vpop.f32.mrf.mxu0
        %v3793 = vpop.f32.mrf.mxu0
        %3794 = vdwg.mxu0
        %v3795 = vadd.f32 %v3667, %v3789
        %v3796 = vadd.f32 %v3669, %v3791
        %v3797 = vld [vmem:[%s14] sm:$0x3]
        %v3799 = vlaneseq
        %v3800 = vshrl.u32 %v3799, 7
        %v3801 = vsub.s32 0, %v3800
        %v3802 = vrot.slane %v3797, %v3801
        %v3803 = vlaneseq
        %v3804 = vshrl.u32 %v3803, 7
        %v3805 = vsub.s32 1, %v3804
        %v3806 = vrot.slane %v3797, %v3805
        %v3809 = vadd.f32 %v3795, %v3802
        %v3810 = vadd.f32 %v3796, %v3806
        %vm3811 = vcmp.ge.f32.partialorder %v3809, 0.0
        %vm3812 = vcmp.ge.f32.partialorder %v3810, 0.0
        %v3813 = vmul.f32 %v3809, 0.1
        %v3814 = vmul.f32 %v3810, 0.1
        %v3815 = vsel %vm3811, %v3809, %v3813
        %v3816 = vsel %vm3812, %v3810, %v3814
        %v3817 = vpack.c.bf16 %v3815, %v3815
        %v3818 = vpack.c.bf16 %v3816, %v3816
        %v3821 = vunpack.c.l.b16 %v3817
        %v3822 = vunpack.c.l.b16 %v3818
        %v3823 = vpack.c.b16 %v3822, %v3821
        %v3825 = vshrl.u32 %v3823, 16
        %v3827 = vrot.slane %v3825, 7
        %v3828 = vshll.u32 %v3823, 16
        %v3830 = vor.u32 %v3827, %v3828
        %vm3832 = vcmask 1042432
        %vm3833 = vmand %vm3832, %vm3422
        %vm3834 = vcmask 522244
        %vm3835 = vsmask.f32 6418
        %vm3836 = vmand %vm3834, %vm3835
        %vm3837 = vmor %vm3836, %vm3833
        %v3838 = vld [vmem:[#allocation7] sm:$0x77]
        %v3839 = vsel %vm3837, %v3830, %v3838
        %3840 = vst [vmem:[#allocation7] sm:$0x77] %v3839
        %v3841 = vld [vmem:[#allocation7] sm:$0x33]
        %v3842 = vld [vmem:[#allocation18] sm:$0xf]
        %v3843 = vld [vmem:[#allocation18 + $0x4] sm:$0xf]
        %v3844 = vld [vmem:[#allocation18 + $0x8] sm:$0xf]
        %v3845 = vld [vmem:[#allocation18 + $0xc] sm:$0xf]
        %v3846 = vld [vmem:[#allocation18 + $0x10] sm:$0xf]
        %v3847 = vld [vmem:[#allocation18 + $0x14] sm:$0xf]
        %v3848 = vld [vmem:[#allocation18 + $0x18] sm:$0xf]
        %v3849 = vld [vmem:[#allocation18 + $0x1c] sm:$0xf]
        %v3850 = vld [vmem:[#allocation18 + $0x20] sm:$0xf]
        %v3851 = vld [vmem:[#allocation18 + $0x24] sm:$0xf]
        %v3852 = vld [vmem:[#allocation18 + $0x28] sm:$0xf]
        %v3853 = vld [vmem:[#allocation18 + $0x2c] sm:$0xf]
        %v3854 = vld [vmem:[#allocation18 + $0x30] sm:$0xf]
        %v3855 = vld [vmem:[#allocation18 + $0x34] sm:$0xf]
        %v3856 = vld [vmem:[#allocation18 + $0x38] sm:$0xf]
        %v3857 = vld [vmem:[#allocation18 + $0x3c] sm:$0xf]
        %v3858 = vld [vmem:[#allocation18 + $0x40] sm:$0xf]
        %v3859 = vld [vmem:[#allocation18 + $0x44] sm:$0xf]
        %v3860 = vld [vmem:[#allocation18 + $0x48] sm:$0xf]
        %v3861 = vld [vmem:[#allocation18 + $0x4c] sm:$0xf]
        %v3862 = vld [vmem:[#allocation18 + $0x50] sm:$0xf]
        %v3863 = vld [vmem:[#allocation18 + $0x54] sm:$0xf]
        %v3864 = vld [vmem:[#allocation18 + $0x58] sm:$0xf]
        %v3865 = vld [vmem:[#allocation18 + $0x5c] sm:$0xf]
        %s3866 = scalar_lea.vmem [#allocation18], 96
        %v3867 = vld [vmem:[%s3866] sm:$0xf]
        %v3868 = vld [vmem:[%s3866 + $0x4] sm:$0xf]
        %v3869 = vld [vmem:[%s3866 + $0x8] sm:$0xf]
        %v3870 = vld [vmem:[%s3866 + $0xc] sm:$0xf]
        %v3871 = vld [vmem:[%s3866 + $0x10] sm:$0xf]
        %v3872 = vld [vmem:[%s3866 + $0x14] sm:$0xf]
        %v3873 = vld [vmem:[%s3866 + $0x18] sm:$0xf]
        %v3874 = vld [vmem:[%s3866 + $0x1c] sm:$0xf]
        %v3875 = vld [vmem:[%s3866 + $0x20] sm:$0xf]
        %v3876 = vld [vmem:[%s3866 + $0x24] sm:$0xf]
        %v3877 = vld [vmem:[%s3866 + $0x28] sm:$0xf]
        %v3878 = vld [vmem:[%s3866 + $0x2c] sm:$0xf]
        %v3879 = vld [vmem:[%s3866 + $0x30] sm:$0xf]
        %v3880 = vld [vmem:[%s3866 + $0x34] sm:$0xf]
        %v3881 = vld [vmem:[%s3866 + $0x38] sm:$0xf]
        %v3882 = vld [vmem:[%s3866 + $0x3c] sm:$0xf]
        %v3883 = vld [vmem:[%s3866 + $0x40] sm:$0xf]
        %v3884 = vld [vmem:[%s3866 + $0x44] sm:$0xf]
        %v3885 = vld [vmem:[%s3866 + $0x48] sm:$0xf]
        %v3886 = vld [vmem:[%s3866 + $0x4c] sm:$0xf]
        %v3887 = vld [vmem:[%s3866 + $0x50] sm:$0xf]
        %v3888 = vld [vmem:[%s3866 + $0x54] sm:$0xf]
        %v3889 = vld [vmem:[%s3866 + $0x58] sm:$0xf]
        %v3890 = vld [vmem:[%s3866 + $0x5c] sm:$0xf]
        %v3892 = vunpack.c.l.b16 %v3841
        %v3893 = vunpack.c.h.b16 %v3841
        %v3894 = vpack.c.b16 %v3892, %v3892
        %v3895 = vpack.c.b16 %v3893, %v3893
        %v3897 = vshrl.u32 %v3894, 16
        %v3899 = vshll.u32 %v3894, 16
        %v3901 = vrot.slane %v3899, 1
        %v3902 = vor.u32 %v3897, %v3901
        %v3904 = vshrl.u32 %v3895, 16
        %v3906 = vshll.u32 %v3895, 16
        %v3908 = vrot.slane %v3906, 1
        %v3909 = vor.u32 %v3904, %v3908
        %v3935 = vunpack.c.l.b16 %v3867
        %v3936 = vunpack.c.l.b16 %v3868
        %v3937 = vunpack.c.l.b16 %v3869
        %v3938 = vunpack.c.l.b16 %v3870
        %v3939 = vunpack.c.l.b16 %v3871
        %v3940 = vunpack.c.l.b16 %v3872
        %v3941 = vunpack.c.l.b16 %v3873
        %v3942 = vunpack.c.l.b16 %v3874
        %v3943 = vunpack.c.l.b16 %v3875
        %v3944 = vunpack.c.l.b16 %v3876
        %v3945 = vunpack.c.l.b16 %v3877
        %v3946 = vunpack.c.l.b16 %v3878
        %v3947 = vunpack.c.l.b16 %v3879
        %v3948 = vunpack.c.l.b16 %v3880
        %v3949 = vunpack.c.l.b16 %v3881
        %v3950 = vunpack.c.l.b16 %v3882
        %v3951 = vunpack.c.l.b16 %v3883
        %v3952 = vunpack.c.l.b16 %v3884
        %v3953 = vunpack.c.l.b16 %v3885
        %v3954 = vunpack.c.l.b16 %v3886
        %v3955 = vunpack.c.l.b16 %v3887
        %v3956 = vunpack.c.l.b16 %v3888
        %v3957 = vunpack.c.l.b16 %v3889
        %v3958 = vunpack.c.l.b16 %v3890
        %v3959 = vpack.c.b16 %v3936, %v3935
        %v3960 = vpack.c.b16 %v3938, %v3937
        %v3961 = vpack.c.b16 %v3940, %v3939
        %v3962 = vpack.c.b16 %v3942, %v3941
        %v3963 = vpack.c.b16 %v3944, %v3943
        %v3964 = vpack.c.b16 %v3946, %v3945
        %v3965 = vpack.c.b16 %v3948, %v3947
        %v3966 = vpack.c.b16 %v3950, %v3949
        %v3967 = vpack.c.b16 %v3952, %v3951
        %v3968 = vpack.c.b16 %v3954, %v3953
        %v3969 = vpack.c.b16 %v3956, %v3955
        %v3970 = vpack.c.b16 %v3958, %v3957
        %vm3983 = vcmask 523264
        %v3985 = vsel %vm3983, %v3909, 0
        %3987 = vmatprep.subr.bf16.mxu0 0
        %3988 = vmatpush1.bf16.msra.mxu0 %v3966
        %3989 = vmatprep.subr.bf16.mxu0 0
        %3990 = vmatpush1.bf16.msra.mxu0 %v3965
        %3991 = vmatprep.subr.bf16.mxu0 0
        %3992 = vmatpush1.bf16.msra.mxu0 %v3964
        %3993 = vmatprep.subr.bf16.mxu0 0
        %3994 = vmatpush1.bf16.msra.mxu0 %v3963
        %3995 = vmatprep.subr.bf16.mxu0 0
        %3996 = vmatpush1.bf16.msra.mxu0 %v3962
        %3997 = vmatprep.subr.bf16.mxu0 0
        %3998 = vmatpush1.bf16.msra.mxu0 %v3961
        %3999 = vmatprep.subr.bf16.mxu0 0
        %4000 = vmatpush1.bf16.msra.mxu0 %v3960
        %4001 = vmatprep.subr.bf16.mxu0 0
        %4002 = vmatpush1.bf16.msra.mxu0 %v3959
        %4003 = vmatprep.subr.bf16.mxu0 0
        %4004 = vmatpush2.bf16.msra.mxu0 0
        %4005 = vmatprep.subr.bf16.mxu0 0
        %4006 = vmatpush2.bf16.msra.mxu0 0
        %4007 = vmatprep.subr.bf16.mxu0 0
        %4008 = vmatpush2.bf16.msra.mxu0 0
        %4009 = vmatprep.subr.bf16.mxu0 0
        %4010 = vmatpush2.bf16.msra.mxu0 0
        %4011 = vmatprep.subr.bf16.mxu0 0
        %4012 = vmatpush2.bf16.msra.mxu0 %v3970
        %4013 = vmatprep.subr.bf16.mxu0 0
        %4014 = vmatpush2.bf16.msra.mxu0 %v3969
        %4015 = vmatprep.subr.bf16.mxu0 0
        %4016 = vmatpush2.bf16.msra.mxu0 %v3968
        %4017 = vmatprep.subr.bf16.mxu0 0
        %4018 = vmatpush2.bf16.msra.mxu0 %v3967
        %4019 = vmatprep.mubr.bf16.mxu0 %v3985
        %4020 = vmatmul.mubr.bf16.gmra.mxu0 %v3902
        %v4021 = vpop.f32.mrf.mxu0
        %v4022 = vadd.f32 0.0, %v4021
        %v4023 = vpop.f32.mrf.mxu0
        %v4024 = vpop.f32.mrf.mxu0
        %v4025 = vpop.f32.mrf.mxu0
        %4026 = vdwg.mxu0
        %v4052 = vunpack.c.l.b16 %v3842
        %v4053 = vunpack.c.l.b16 %v3843
        %v4054 = vunpack.c.l.b16 %v3844
        %v4055 = vunpack.c.l.b16 %v3845
        %v4056 = vunpack.c.l.b16 %v3846
        %v4057 = vunpack.c.l.b16 %v3847
        %v4058 = vunpack.c.l.b16 %v3848
        %v4059 = vunpack.c.l.b16 %v3849
        %v4060 = vunpack.c.l.b16 %v3850
        %v4061 = vunpack.c.l.b16 %v3851
        %v4062 = vunpack.c.l.b16 %v3852
        %v4063 = vunpack.c.l.b16 %v3853
        %v4064 = vunpack.c.l.b16 %v3854
        %v4065 = vunpack.c.l.b16 %v3855
        %v4066 = vunpack.c.l.b16 %v3856
        %v4067 = vunpack.c.l.b16 %v3857
        %v4068 = vunpack.c.l.b16 %v3858
        %v4069 = vunpack.c.l.b16 %v3859
        %v4070 = vunpack.c.l.b16 %v3860
        %v4071 = vunpack.c.l.b16 %v3861
        %v4072 = vunpack.c.l.b16 %v3862
        %v4073 = vunpack.c.l.b16 %v3863
        %v4074 = vunpack.c.l.b16 %v3864
        %v4075 = vunpack.c.l.b16 %v3865
        %v4076 = vpack.c.b16 %v4053, %v4052
        %v4077 = vpack.c.b16 %v4055, %v4054
        %v4078 = vpack.c.b16 %v4057, %v4056
        %v4079 = vpack.c.b16 %v4059, %v4058
        %v4080 = vpack.c.b16 %v4061, %v4060
        %v4081 = vpack.c.b16 %v4063, %v4062
        %v4082 = vpack.c.b16 %v4065, %v4064
        %v4083 = vpack.c.b16 %v4067, %v4066
        %v4084 = vpack.c.b16 %v4069, %v4068
        %v4085 = vpack.c.b16 %v4071, %v4070
        %v4086 = vpack.c.b16 %v4073, %v4072
        %v4087 = vpack.c.b16 %v4075, %v4074
        %v4100 = vsel %vm3983, %v3895, 0
        %4102 = vmatprep.subr.bf16.mxu0 0
        %4103 = vmatpush1.bf16.msra.mxu0 %v4083
        %4104 = vmatprep.subr.bf16.mxu0 0
        %4105 = vmatpush1.bf16.msra.mxu0 %v4082
        %4106 = vmatprep.subr.bf16.mxu0 0
        %4107 = vmatpush1.bf16.msra.mxu0 %v4081
        %4108 = vmatprep.subr.bf16.mxu0 0
        %4109 = vmatpush1.bf16.msra.mxu0 %v4080
        %4110 = vmatprep.subr.bf16.mxu0 0
        %4111 = vmatpush1.bf16.msra.mxu0 %v4079
        %4112 = vmatprep.subr.bf16.mxu0 0
        %4113 = vmatpush1.bf16.msra.mxu0 %v4078
        %4114 = vmatprep.subr.bf16.mxu0 0
        %4115 = vmatpush1.bf16.msra.mxu0 %v4077
        %4116 = vmatprep.subr.bf16.mxu0 0
        %4117 = vmatpush1.bf16.msra.mxu0 %v4076
        %4118 = vmatprep.subr.bf16.mxu0 0
        %4119 = vmatpush2.bf16.msra.mxu0 0
        %4120 = vmatprep.subr.bf16.mxu0 0
        %4121 = vmatpush2.bf16.msra.mxu0 0
        %4122 = vmatprep.subr.bf16.mxu0 0
        %4123 = vmatpush2.bf16.msra.mxu0 0
        %4124 = vmatprep.subr.bf16.mxu0 0
        %4125 = vmatpush2.bf16.msra.mxu0 0
        %4126 = vmatprep.subr.bf16.mxu0 0
        %4127 = vmatpush2.bf16.msra.mxu0 %v4087
        %4128 = vmatprep.subr.bf16.mxu0 0
        %4129 = vmatpush2.bf16.msra.mxu0 %v4086
        %4130 = vmatprep.subr.bf16.mxu0 0
        %4131 = vmatpush2.bf16.msra.mxu0 %v4085
        %4132 = vmatprep.subr.bf16.mxu0 0
        %4133 = vmatpush2.bf16.msra.mxu0 %v4084
        %4134 = vmatprep.mubr.bf16.mxu0 %v4100
        %4135 = vmatmul.mubr.bf16.gmra.mxu0 %v3894
        %v4136 = vpop.f32.mrf.mxu0
        %v4137 = vadd.f32 %v4022, %v4136
        %v4138 = vpop.f32.mrf.mxu0
        %v4139 = vpop.f32.mrf.mxu0
        %v4140 = vpop.f32.mrf.mxu0
        %4141 = vdwg.mxu0
        %v4142 = vld [vmem:[#allocation7] sm:$0x66]
        %s4143 = scalar_lea.vmem [#allocation18], 192
        %v4144 = vld [vmem:[%s4143] sm:$0xf]
        %v4145 = vld [vmem:[%s4143 + $0x4] sm:$0xf]
        %v4146 = vld [vmem:[%s4143 + $0x8] sm:$0xf]
        %v4147 = vld [vmem:[%s4143 + $0xc] sm:$0xf]
        %v4148 = vld [vmem:[%s4143 + $0x10] sm:$0xf]
        %v4149 = vld [vmem:[%s4143 + $0x14] sm:$0xf]
        %v4150 = vld [vmem:[%s4143 + $0x18] sm:$0xf]
        %v4151 = vld [vmem:[%s4143 + $0x1c] sm:$0xf]
        %v4152 = vld [vmem:[%s4143 + $0x20] sm:$0xf]
        %v4153 = vld [vmem:[%s4143 + $0x24] sm:$0xf]
        %v4154 = vld [vmem:[%s4143 + $0x28] sm:$0xf]
        %v4155 = vld [vmem:[%s4143 + $0x2c] sm:$0xf]
        %v4156 = vld [vmem:[%s4143 + $0x30] sm:$0xf]
        %v4157 = vld [vmem:[%s4143 + $0x34] sm:$0xf]
        %v4158 = vld [vmem:[%s4143 + $0x38] sm:$0xf]
        %v4159 = vld [vmem:[%s4143 + $0x3c] sm:$0xf]
        %v4160 = vld [vmem:[%s4143 + $0x40] sm:$0xf]
        %v4161 = vld [vmem:[%s4143 + $0x44] sm:$0xf]
        %v4162 = vld [vmem:[%s4143 + $0x48] sm:$0xf]
        %v4163 = vld [vmem:[%s4143 + $0x4c] sm:$0xf]
        %v4164 = vld [vmem:[%s4143 + $0x50] sm:$0xf]
        %v4165 = vld [vmem:[%s4143 + $0x54] sm:$0xf]
        %v4166 = vld [vmem:[%s4143 + $0x58] sm:$0xf]
        %v4167 = vld [vmem:[%s4143 + $0x5c] sm:$0xf]
        %v4169 = vunpack.c.l.b16 %v4142
        %v4170 = vunpack.c.h.b16 %v4142
        %v4171 = vpack.c.b16 %v4169, %v4169
        %v4172 = vpack.c.b16 %v4170, %v4170
        %v4173 = vrot.slane %v4171, 1
        %v4174 = vrot.slane %v4172, 1
        %v4200 = vunpack.c.l.b16 %v4144
        %v4201 = vunpack.c.l.b16 %v4145
        %v4202 = vunpack.c.l.b16 %v4146
        %v4203 = vunpack.c.l.b16 %v4147
        %v4204 = vunpack.c.l.b16 %v4148
        %v4205 = vunpack.c.l.b16 %v4149
        %v4206 = vunpack.c.l.b16 %v4150
        %v4207 = vunpack.c.l.b16 %v4151
        %v4208 = vunpack.c.l.b16 %v4152
        %v4209 = vunpack.c.l.b16 %v4153
        %v4210 = vunpack.c.l.b16 %v4154
        %v4211 = vunpack.c.l.b16 %v4155
        %v4212 = vunpack.c.l.b16 %v4156
        %v4213 = vunpack.c.l.b16 %v4157
        %v4214 = vunpack.c.l.b16 %v4158
        %v4215 = vunpack.c.l.b16 %v4159
        %v4216 = vunpack.c.l.b16 %v4160
        %v4217 = vunpack.c.l.b16 %v4161
        %v4218 = vunpack.c.l.b16 %v4162
        %v4219 = vunpack.c.l.b16 %v4163
        %v4220 = vunpack.c.l.b16 %v4164
        %v4221 = vunpack.c.l.b16 %v4165
        %v4222 = vunpack.c.l.b16 %v4166
        %v4223 = vunpack.c.l.b16 %v4167
        %v4224 = vpack.c.b16 %v4201, %v4200
        %v4225 = vpack.c.b16 %v4203, %v4202
        %v4226 = vpack.c.b16 %v4205, %v4204
        %v4227 = vpack.c.b16 %v4207, %v4206
        %v4228 = vpack.c.b16 %v4209, %v4208
        %v4229 = vpack.c.b16 %v4211, %v4210
        %v4230 = vpack.c.b16 %v4213, %v4212
        %v4231 = vpack.c.b16 %v4215, %v4214
        %v4232 = vpack.c.b16 %v4217, %v4216
        %v4233 = vpack.c.b16 %v4219, %v4218
        %v4234 = vpack.c.b16 %v4221, %v4220
        %v4235 = vpack.c.b16 %v4223, %v4222
        %v4249 = vsel %vm3983, %v4174, 0
        %4251 = vmatprep.subr.bf16.mxu0 0
        %4252 = vmatpush1.bf16.msra.mxu0 %v4231
        %4253 = vmatprep.subr.bf16.mxu0 0
        %4254 = vmatpush1.bf16.msra.mxu0 %v4230
        %4255 = vmatprep.subr.bf16.mxu0 0
        %4256 = vmatpush1.bf16.msra.mxu0 %v4229
        %4257 = vmatprep.subr.bf16.mxu0 0
        %4258 = vmatpush1.bf16.msra.mxu0 %v4228
        %4259 = vmatprep.subr.bf16.mxu0 0
        %4260 = vmatpush1.bf16.msra.mxu0 %v4227
        %4261 = vmatprep.subr.bf16.mxu0 0
        %4262 = vmatpush1.bf16.msra.mxu0 %v4226
        %4263 = vmatprep.subr.bf16.mxu0 0
        %4264 = vmatpush1.bf16.msra.mxu0 %v4225
        %4265 = vmatprep.subr.bf16.mxu0 0
        %4266 = vmatpush1.bf16.msra.mxu0 %v4224
        %4267 = vmatprep.subr.bf16.mxu0 0
        %4268 = vmatpush2.bf16.msra.mxu0 0
        %4269 = vmatprep.subr.bf16.mxu0 0
        %4270 = vmatpush2.bf16.msra.mxu0 0
        %4271 = vmatprep.subr.bf16.mxu0 0
        %4272 = vmatpush2.bf16.msra.mxu0 0
        %4273 = vmatprep.subr.bf16.mxu0 0
        %4274 = vmatpush2.bf16.msra.mxu0 0
        %4275 = vmatprep.subr.bf16.mxu0 0
        %4276 = vmatpush2.bf16.msra.mxu0 %v4235
        %4277 = vmatprep.subr.bf16.mxu0 0
        %4278 = vmatpush2.bf16.msra.mxu0 %v4234
        %4279 = vmatprep.subr.bf16.mxu0 0
        %4280 = vmatpush2.bf16.msra.mxu0 %v4233
        %4281 = vmatprep.subr.bf16.mxu0 0
        %4282 = vmatpush2.bf16.msra.mxu0 %v4232
        %4283 = vmatprep.mubr.bf16.mxu0 %v4249
        %4284 = vmatmul.mubr.bf16.gmra.mxu0 %v4173
        %v4285 = vpop.f32.mrf.mxu0
        %v4286 = vadd.f32 0.0, %v4285
        %v4287 = vpop.f32.mrf.mxu0
        %v4288 = vpop.f32.mrf.mxu0
        %v4289 = vpop.f32.mrf.mxu0
        %4290 = vdwg.mxu0
        %v4291 = vadd.f32 %v4137, %v4286
        %s4292 = scalar_lea.vmem [#allocation18], 288
        %v4293 = vld [vmem:[%s4292] sm:$0xf]
        %v4294 = vld [vmem:[%s4292 + $0x4] sm:$0xf]
        %v4295 = vld [vmem:[%s4292 + $0x8] sm:$0xf]
        %v4296 = vld [vmem:[%s4292 + $0xc] sm:$0xf]
        %v4297 = vld [vmem:[%s4292 + $0x10] sm:$0xf]
        %v4298 = vld [vmem:[%s4292 + $0x14] sm:$0xf]
        %v4299 = vld [vmem:[%s4292 + $0x18] sm:$0xf]
        %v4300 = vld [vmem:[%s4292 + $0x1c] sm:$0xf]
        %v4301 = vld [vmem:[%s4292 + $0x20] sm:$0xf]
        %v4302 = vld [vmem:[%s4292 + $0x24] sm:$0xf]
        %v4303 = vld [vmem:[%s4292 + $0x28] sm:$0xf]
        %v4304 = vld [vmem:[%s4292 + $0x2c] sm:$0xf]
        %v4305 = vld [vmem:[%s4292 + $0x30] sm:$0xf]
        %v4306 = vld [vmem:[%s4292 + $0x34] sm:$0xf]
        %v4307 = vld [vmem:[%s4292 + $0x38] sm:$0xf]
        %v4308 = vld [vmem:[%s4292 + $0x3c] sm:$0xf]
        %v4309 = vld [vmem:[%s4292 + $0x40] sm:$0xf]
        %v4310 = vld [vmem:[%s4292 + $0x44] sm:$0xf]
        %v4311 = vld [vmem:[%s4292 + $0x48] sm:$0xf]
        %v4312 = vld [vmem:[%s4292 + $0x4c] sm:$0xf]
        %v4313 = vld [vmem:[%s4292 + $0x50] sm:$0xf]
        %v4314 = vld [vmem:[%s4292 + $0x54] sm:$0xf]
        %v4315 = vld [vmem:[%s4292 + $0x58] sm:$0xf]
        %v4316 = vld [vmem:[%s4292 + $0x5c] sm:$0xf]
        %v4318 = vshrl.u32 %v4171, 16
        %v4320 = vrot.slane %v4318, 1
        %v4321 = vshll.u32 %v4171, 16
        %v4323 = vrot.slane %v4321, 2
        %v4324 = vor.u32 %v4320, %v4323
        %v4326 = vshrl.u32 %v4172, 16
        %v4328 = vrot.slane %v4326, 1
        %v4329 = vshll.u32 %v4172, 16
        %v4331 = vrot.slane %v4329, 2
        %v4332 = vor.u32 %v4328, %v4331
        %v4358 = vunpack.c.l.b16 %v4293
        %v4359 = vunpack.c.l.b16 %v4294
        %v4360 = vunpack.c.l.b16 %v4295
        %v4361 = vunpack.c.l.b16 %v4296
        %v4362 = vunpack.c.l.b16 %v4297
        %v4363 = vunpack.c.l.b16 %v4298
        %v4364 = vunpack.c.l.b16 %v4299
        %v4365 = vunpack.c.l.b16 %v4300
        %v4366 = vunpack.c.l.b16 %v4301
        %v4367 = vunpack.c.l.b16 %v4302
        %v4368 = vunpack.c.l.b16 %v4303
        %v4369 = vunpack.c.l.b16 %v4304
        %v4370 = vunpack.c.l.b16 %v4305
        %v4371 = vunpack.c.l.b16 %v4306
        %v4372 = vunpack.c.l.b16 %v4307
        %v4373 = vunpack.c.l.b16 %v4308
        %v4374 = vunpack.c.l.b16 %v4309
        %v4375 = vunpack.c.l.b16 %v4310
        %v4376 = vunpack.c.l.b16 %v4311
        %v4377 = vunpack.c.l.b16 %v4312
        %v4378 = vunpack.c.l.b16 %v4313
        %v4379 = vunpack.c.l.b16 %v4314
        %v4380 = vunpack.c.l.b16 %v4315
        %v4381 = vunpack.c.l.b16 %v4316
        %v4382 = vpack.c.b16 %v4359, %v4358
        %v4383 = vpack.c.b16 %v4361, %v4360
        %v4384 = vpack.c.b16 %v4363, %v4362
        %v4385 = vpack.c.b16 %v4365, %v4364
        %v4386 = vpack.c.b16 %v4367, %v4366
        %v4387 = vpack.c.b16 %v4369, %v4368
        %v4388 = vpack.c.b16 %v4371, %v4370
        %v4389 = vpack.c.b16 %v4373, %v4372
        %v4390 = vpack.c.b16 %v4375, %v4374
        %v4391 = vpack.c.b16 %v4377, %v4376
        %v4392 = vpack.c.b16 %v4379, %v4378
        %v4393 = vpack.c.b16 %v4381, %v4380
        %v4407 = vsel %vm3983, %v4332, 0
        %4409 = vmatprep.subr.bf16.mxu0 0
        %4410 = vmatpush1.bf16.msra.mxu0 %v4389
        %4411 = vmatprep.subr.bf16.mxu0 0
        %4412 = vmatpush1.bf16.msra.mxu0 %v4388
        %4413 = vmatprep.subr.bf16.mxu0 0
        %4414 = vmatpush1.bf16.msra.mxu0 %v4387
        %4415 = vmatprep.subr.bf16.mxu0 0
        %4416 = vmatpush1.bf16.msra.mxu0 %v4386
        %4417 = vmatprep.subr.bf16.mxu0 0
        %4418 = vmatpush1.bf16.msra.mxu0 %v4385
        %4419 = vmatprep.subr.bf16.mxu0 0
        %4420 = vmatpush1.bf16.msra.mxu0 %v4384
        %4421 = vmatprep.subr.bf16.mxu0 0
        %4422 = vmatpush1.bf16.msra.mxu0 %v4383
        %4423 = vmatprep.subr.bf16.mxu0 0
        %4424 = vmatpush1.bf16.msra.mxu0 %v4382
        %4425 = vmatprep.subr.bf16.mxu0 0
        %4426 = vmatpush2.bf16.msra.mxu0 0
        %4427 = vmatprep.subr.bf16.mxu0 0
        %4428 = vmatpush2.bf16.msra.mxu0 0
        %4429 = vmatprep.subr.bf16.mxu0 0
        %4430 = vmatpush2.bf16.msra.mxu0 0
        %4431 = vmatprep.subr.bf16.mxu0 0
        %4432 = vmatpush2.bf16.msra.mxu0 0
        %4433 = vmatprep.subr.bf16.mxu0 0
        %4434 = vmatpush2.bf16.msra.mxu0 %v4393
        %4435 = vmatprep.subr.bf16.mxu0 0
        %4436 = vmatpush2.bf16.msra.mxu0 %v4392
        %4437 = vmatprep.subr.bf16.mxu0 0
        %4438 = vmatpush2.bf16.msra.mxu0 %v4391
        %4439 = vmatprep.subr.bf16.mxu0 0
        %4440 = vmatpush2.bf16.msra.mxu0 %v4390
        %4441 = vmatprep.mubr.bf16.mxu0 %v4407
        %4442 = vmatmul.mubr.bf16.gmra.mxu0 %v4324
        %v4443 = vpop.f32.mrf.mxu0
        %v4444 = vadd.f32 0.0, %v4443
        %v4445 = vpop.f32.mrf.mxu0
        %v4446 = vpop.f32.mrf.mxu0
        %v4447 = vpop.f32.mrf.mxu0
        %4448 = vdwg.mxu0
        %v4449 = vadd.f32 %v4291, %v4444
        %v4450 = vld [vmem:[%s15] sm:$0x1]
        %v4452 = vlaneseq
        %v4453 = vshrl.u32 %v4452, 7
        %v4454 = vsub.s32 0, %v4453
        %v4455 = vrot.slane %v4450, %v4454
        %v4457 = vadd.f32 %v4449, %v4455
        %vm4458 = vcmp.ge.f32.partialorder %v4457, 0.0
        %v4459 = vmul.f32 %v4457, 0.1
        %v4460 = vsel %vm4458, %v4457, %v4459
        %v4461 = vpack.c.bf16 %v4460, %v4460
        %vm4462 = vcmask 23552
        %v4463 = vsel %vm4462, %v1763, 0
        %vm4465 = vcmask 1041408
        %v4466 = vsel %vm723, 4294967295, 65535
        %v4467 = vsel %vm4465, %v4466, 0
        %v4469 = vand.u32 %v4461, %v4467
        %4471 = vmatprep.subr.bf16.mxu0 0
        %4472 = vmatpush1.bf16.msra.mxu0 0
        %4473 = vmatprep.subr.bf16.mxu0 0
        %4474 = vmatpush1.bf16.msra.mxu0 0
        %4475 = vmatprep.subr.bf16.mxu0 0
        %4476 = vmatpush1.bf16.msra.mxu0 0
        %4477 = vmatprep.subr.bf16.mxu0 0
        %4478 = vmatpush1.bf16.msra.mxu0 0
        %4479 = vmatprep.subr.bf16.mxu0 0
        %4480 = vmatpush1.bf16.msra.mxu0 0
        %4481 = vmatprep.subr.bf16.mxu0 0
        %4482 = vmatpush1.bf16.msra.mxu0 0
        %4483 = vmatprep.subr.bf16.mxu0 0
        %4484 = vmatpush1.bf16.msra.mxu0 0
        %4485 = vmatprep.subr.bf16.mxu0 0
        %4486 = vmatpush1.bf16.msra.mxu0 %v4469
        %4487 = vmatprep.subr.bf16.mxu0 0
        %4488 = vmatpush2.bf16.msra.mxu0 0
        %4489 = vmatprep.subr.bf16.mxu0 0
        %4490 = vmatpush2.bf16.msra.mxu0 0
        %4491 = vmatprep.subr.bf16.mxu0 0
        %4492 = vmatpush2.bf16.msra.mxu0 0
        %4493 = vmatprep.subr.bf16.mxu0 0
        %4494 = vmatpush2.bf16.msra.mxu0 0
        %4495 = vmatprep.subr.bf16.mxu0 0
        %4496 = vmatpush2.bf16.msra.mxu0 0
        %4497 = vmatprep.subr.bf16.mxu0 0
        %4498 = vmatpush2.bf16.msra.mxu0 0
        %4499 = vmatprep.subr.bf16.mxu0 0
        %4500 = vmatpush2.bf16.msra.mxu0 0
        %4501 = vmatprep.subr.bf16.mxu0 0
        %4502 = vmatpush2.bf16.msra.mxu0 0
        %4503 = vmatprep.mubr.bf16.mxu0 0
        %4504 = vmatmul.mubr.bf16.gmra.mxu0 %v4463
        %v4505 = vpop.f32.mrf.mxu0
        %v4506 = vadd.f32 0.0, %v4505
        %v4507 = vpop.f32.mrf.mxu0
        %v4508 = vpop.f32.mrf.mxu0
        %v4509 = vpop.f32.mrf.mxu0
        %4510 = vdwg.mxu0
        %v4511 = vpack.c.bf16 %v4506, %v4506
        %v4514 = vunpack.c.l.s4 1983009808
        %v4515 = vunpack.c.0.s8 %v4514
        %v4516 = vlaneseq
        %v4517 = vshrl.u32 %v4516, 7
        %v4518 = vsub.s32 %v4515, %v4517
        %v4519 = vrot.slane %v4511, %v4518
        %v4521 = vshrl.u32 %v4519, 16
        %v4523 = vrot.slane %v4521, 7
        %v4524 = vshll.u32 %v4519, 16
        %v4526 = vor.u32 %v4523, %v4524
        %vm4528 = vcmask 1041408
        %vm4529 = vsmask.f32 1282
        %vm4530 = vmand %vm4528, %vm4529
        %v4531 = vld [vmem:[#allocation8] sm:$0x3]
        %v4532 = vsel %vm4530, %v4526, %v4531
        %4533 = vst [vmem:[#allocation8] sm:$0x3] %v4532
        %v4534 = vld [vmem:[#allocation8] sm:$0x1]
        %v4535 = vld [vmem:[#allocation20] sm:$0xf]
        %v4536 = vld [vmem:[#allocation20 + $0x4] sm:$0xf]
        %v4537 = vld [vmem:[#allocation20 + $0x8] sm:$0xf]
        %v4538 = vld [vmem:[#allocation20 + $0xc] sm:$0xf]
        %v4539 = vld [vmem:[#allocation20 + $0x10] sm:$0xf]
        %v4540 = vld [vmem:[#allocation20 + $0x14] sm:$0xf]
        %v4541 = vld [vmem:[#allocation20 + $0x18] sm:$0xf]
        %v4542 = vld [vmem:[#allocation20 + $0x1c] sm:$0xf]
        %v4543 = vld [vmem:[#allocation20 + $0x20] sm:$0xf]
        %v4544 = vld [vmem:[#allocation20 + $0x24] sm:$0xf]
        %v4545 = vld [vmem:[#allocation20 + $0x28] sm:$0xf]
        %v4546 = vld [vmem:[#allocation20 + $0x2c] sm:$0xf]
        %v4547 = vld [vmem:[#allocation20 + $0x30] sm:$0xf]
        %v4548 = vld [vmem:[#allocation20 + $0x34] sm:$0xf]
        %v4549 = vld [vmem:[#allocation20 + $0x38] sm:$0xf]
        %v4550 = vld [vmem:[#allocation20 + $0x3c] sm:$0xf]
        %v4551 = vld [vmem:[#allocation8] sm:$0x3]
        %s4552 = scalar_lea.vmem [#allocation20], 64
        %v4553 = vld [vmem:[%s4552] sm:$0xf]
        %v4554 = vld [vmem:[%s4552 + $0x4] sm:$0xf]
        %v4555 = vld [vmem:[%s4552 + $0x8] sm:$0xf]
        %v4556 = vld [vmem:[%s4552 + $0xc] sm:$0xf]
        %v4557 = vld [vmem:[%s4552 + $0x10] sm:$0xf]
        %v4558 = vld [vmem:[%s4552 + $0x14] sm:$0xf]
        %v4559 = vld [vmem:[%s4552 + $0x18] sm:$0xf]
        %v4560 = vld [vmem:[%s4552 + $0x1c] sm:$0xf]
        %v4561 = vld [vmem:[%s4552 + $0x20] sm:$0xf]
        %v4562 = vld [vmem:[%s4552 + $0x24] sm:$0xf]
        %v4563 = vld [vmem:[%s4552 + $0x28] sm:$0xf]
        %v4564 = vld [vmem:[%s4552 + $0x2c] sm:$0xf]
        %v4565 = vld [vmem:[%s4552 + $0x30] sm:$0xf]
        %v4566 = vld [vmem:[%s4552 + $0x34] sm:$0xf]
        %v4567 = vld [vmem:[%s4552 + $0x38] sm:$0xf]
        %v4568 = vld [vmem:[%s4552 + $0x3c] sm:$0xf]
        %v4571 = vunpack.c.l.s4 1983009808
        %v4572 = vunpack.c.0.s8 %v4571
        %v4573 = vlaneseq
        %v4574 = vshrl.u32 %v4573, 7
        %v4575 = vsub.s32 %v4572, %v4574
        %v4576 = vrot.slane %v4551, %v4575
        %v4578 = vshrl.u32 %v4576, 16
        %v4580 = vshll.u32 %v4576, 16
        %v4582 = vrot.slane %v4580, 1
        %v4583 = vor.u32 %v4578, %v4582
        %v4601 = vunpack.c.l.b16 %v4553
        %v4602 = vunpack.c.l.b16 %v4554
        %v4603 = vunpack.c.l.b16 %v4555
        %v4604 = vunpack.c.l.b16 %v4556
        %v4605 = vunpack.c.l.b16 %v4557
        %v4606 = vunpack.c.l.b16 %v4558
        %v4607 = vunpack.c.l.b16 %v4559
        %v4608 = vunpack.c.l.b16 %v4560
        %v4609 = vunpack.c.l.b16 %v4561
        %v4610 = vunpack.c.l.b16 %v4562
        %v4611 = vunpack.c.l.b16 %v4563
        %v4612 = vunpack.c.l.b16 %v4564
        %v4613 = vunpack.c.l.b16 %v4565
        %v4614 = vunpack.c.l.b16 %v4566
        %v4615 = vunpack.c.l.b16 %v4567
        %v4616 = vunpack.c.l.b16 %v4568
        %v4617 = vpack.c.b16 %v4602, %v4601
        %v4618 = vpack.c.b16 %v4604, %v4603
        %v4619 = vpack.c.b16 %v4606, %v4605
        %v4620 = vpack.c.b16 %v4608, %v4607
        %v4621 = vpack.c.b16 %v4610, %v4609
        %v4622 = vpack.c.b16 %v4612, %v4611
        %v4623 = vpack.c.b16 %v4614, %v4613
        %v4624 = vpack.c.b16 %v4616, %v4615
        %4633 = vmatprep.subr.bf16.mxu0 0
        %4634 = vmatpush1.bf16.msra.mxu0 %v4624
        %4635 = vmatprep.subr.bf16.mxu0 0
        %4636 = vmatpush1.bf16.msra.mxu0 %v4623
        %4637 = vmatprep.subr.bf16.mxu0 0
        %4638 = vmatpush1.bf16.msra.mxu0 %v4622
        %4639 = vmatprep.subr.bf16.mxu0 0
        %4640 = vmatpush1.bf16.msra.mxu0 %v4621
        %4641 = vmatprep.subr.bf16.mxu0 0
        %4642 = vmatpush1.bf16.msra.mxu0 %v4620
        %4643 = vmatprep.subr.bf16.mxu0 0
        %4644 = vmatpush1.bf16.msra.mxu0 %v4619
        %4645 = vmatprep.subr.bf16.mxu0 0
        %4646 = vmatpush1.bf16.msra.mxu0 %v4618
        %4647 = vmatprep.subr.bf16.mxu0 0
        %4648 = vmatpush1.bf16.msra.mxu0 %v4617
        %4649 = vmatprep.subr.bf16.mxu0 0
        %4650 = vmatpush2.bf16.msra.mxu0 0
        %4651 = vmatprep.subr.bf16.mxu0 0
        %4652 = vmatpush2.bf16.msra.mxu0 0
        %4653 = vmatprep.subr.bf16.mxu0 0
        %4654 = vmatpush2.bf16.msra.mxu0 0
        %4655 = vmatprep.subr.bf16.mxu0 0
        %4656 = vmatpush2.bf16.msra.mxu0 0
        %4657 = vmatprep.subr.bf16.mxu0 0
        %4658 = vmatpush2.bf16.msra.mxu0 0
        %4659 = vmatprep.subr.bf16.mxu0 0
        %4660 = vmatpush2.bf16.msra.mxu0 0
        %4661 = vmatprep.subr.bf16.mxu0 0
        %4662 = vmatpush2.bf16.msra.mxu0 0
        %4663 = vmatprep.subr.bf16.mxu0 0
        %4664 = vmatpush2.bf16.msra.mxu0 0
        %4665 = vmatprep.mubr.bf16.mxu0 0
        %4666 = vmatmul.mubr.bf16.gmra.mxu0 %v4583
        %v4667 = vpop.f32.mrf.mxu0
        %v4668 = vadd.f32 0.0, %v4667
        %v4669 = vpop.f32.mrf.mxu0
        %v4670 = vpop.f32.mrf.mxu0
        %v4671 = vpop.f32.mrf.mxu0
        %4672 = vdwg.mxu0
        %v4689 = vunpack.c.l.b16 %v4535
        %v4690 = vunpack.c.l.b16 %v4536
        %v4691 = vunpack.c.l.b16 %v4537
        %v4692 = vunpack.c.l.b16 %v4538
        %v4693 = vunpack.c.l.b16 %v4539
        %v4694 = vunpack.c.l.b16 %v4540
        %v4695 = vunpack.c.l.b16 %v4541
        %v4696 = vunpack.c.l.b16 %v4542
        %v4697 = vunpack.c.l.b16 %v4543
        %v4698 = vunpack.c.l.b16 %v4544
        %v4699 = vunpack.c.l.b16 %v4545
        %v4700 = vunpack.c.l.b16 %v4546
        %v4701 = vunpack.c.l.b16 %v4547
        %v4702 = vunpack.c.l.b16 %v4548
        %v4703 = vunpack.c.l.b16 %v4549
        %v4704 = vunpack.c.l.b16 %v4550
        %v4705 = vpack.c.b16 %v4690, %v4689
        %v4706 = vpack.c.b16 %v4692, %v4691
        %v4707 = vpack.c.b16 %v4694, %v4693
        %v4708 = vpack.c.b16 %v4696, %v4695
        %v4709 = vpack.c.b16 %v4698, %v4697
        %v4710 = vpack.c.b16 %v4700, %v4699
        %v4711 = vpack.c.b16 %v4702, %v4701
        %v4712 = vpack.c.b16 %v4704, %v4703
        %4721 = vmatprep.subr.bf16.mxu0 0
        %4722 = vmatpush1.bf16.msra.mxu0 %v4712
        %4723 = vmatprep.subr.bf16.mxu0 0
        %4724 = vmatpush1.bf16.msra.mxu0 %v4711
        %4725 = vmatprep.subr.bf16.mxu0 0
        %4726 = vmatpush1.bf16.msra.mxu0 %v4710
        %4727 = vmatprep.subr.bf16.mxu0 0
        %4728 = vmatpush1.bf16.msra.mxu0 %v4709
        %4729 = vmatprep.subr.bf16.mxu0 0
        %4730 = vmatpush1.bf16.msra.mxu0 %v4708
        %4731 = vmatprep.subr.bf16.mxu0 0
        %4732 = vmatpush1.bf16.msra.mxu0 %v4707
        %4733 = vmatprep.subr.bf16.mxu0 0
        %4734 = vmatpush1.bf16.msra.mxu0 %v4706
        %4735 = vmatprep.subr.bf16.mxu0 0
        %4736 = vmatpush1.bf16.msra.mxu0 %v4705
        %4737 = vmatprep.subr.bf16.mxu0 0
        %4738 = vmatpush2.bf16.msra.mxu0 0
        %4739 = vmatprep.subr.bf16.mxu0 0
        %4740 = vmatpush2.bf16.msra.mxu0 0
        %4741 = vmatprep.subr.bf16.mxu0 0
        %4742 = vmatpush2.bf16.msra.mxu0 0
        %4743 = vmatprep.subr.bf16.mxu0 0
        %4744 = vmatpush2.bf16.msra.mxu0 0
        %4745 = vmatprep.subr.bf16.mxu0 0
        %4746 = vmatpush2.bf16.msra.mxu0 0
        %4747 = vmatprep.subr.bf16.mxu0 0
        %4748 = vmatpush2.bf16.msra.mxu0 0
        %4749 = vmatprep.subr.bf16.mxu0 0
        %4750 = vmatpush2.bf16.msra.mxu0 0
        %4751 = vmatprep.subr.bf16.mxu0 0
        %4752 = vmatpush2.bf16.msra.mxu0 0
        %4753 = vmatprep.mubr.bf16.mxu0 0
        %4754 = vmatmul.mubr.bf16.gmra.mxu0 %v4534
        %v4755 = vpop.f32.mrf.mxu0
        %v4756 = vadd.f32 %v4668, %v4755
        %v4757 = vpop.f32.mrf.mxu0
        %v4758 = vpop.f32.mrf.mxu0
        %v4759 = vpop.f32.mrf.mxu0
        %4760 = vdwg.mxu0
        %v4761 = vld [vmem:[#allocation8] sm:$0x2]
        %s4762 = scalar_lea.vmem [#allocation20], 128
        %v4763 = vld [vmem:[%s4762] sm:$0xf]
        %v4764 = vld [vmem:[%s4762 + $0x4] sm:$0xf]
        %v4765 = vld [vmem:[%s4762 + $0x8] sm:$0xf]
        %v4766 = vld [vmem:[%s4762 + $0xc] sm:$0xf]
        %v4767 = vld [vmem:[%s4762 + $0x10] sm:$0xf]
        %v4768 = vld [vmem:[%s4762 + $0x14] sm:$0xf]
        %v4769 = vld [vmem:[%s4762 + $0x18] sm:$0xf]
        %v4770 = vld [vmem:[%s4762 + $0x1c] sm:$0xf]
        %v4771 = vld [vmem:[%s4762 + $0x20] sm:$0xf]
        %v4772 = vld [vmem:[%s4762 + $0x24] sm:$0xf]
        %v4773 = vld [vmem:[%s4762 + $0x28] sm:$0xf]
        %v4774 = vld [vmem:[%s4762 + $0x2c] sm:$0xf]
        %v4775 = vld [vmem:[%s4762 + $0x30] sm:$0xf]
        %v4776 = vld [vmem:[%s4762 + $0x34] sm:$0xf]
        %v4777 = vld [vmem:[%s4762 + $0x38] sm:$0xf]
        %v4778 = vld [vmem:[%s4762 + $0x3c] sm:$0xf]
        %v4781 = vunpack.c.l.s4 1983009808
        %v4782 = vunpack.c.0.s8 %v4781
        %v4783 = vlaneseq
        %v4784 = vshrl.u32 %v4783, 7
        %v4785 = vsub.s32 %v4782, %v4784
        %v4786 = vrot.slane %v4761, %v4785
        %v4787 = vrot.slane %v4786, 1
        %v4805 = vunpack.c.l.b16 %v4763
        %v4806 = vunpack.c.l.b16 %v4764
        %v4807 = vunpack.c.l.b16 %v4765
        %v4808 = vunpack.c.l.b16 %v4766
        %v4809 = vunpack.c.l.b16 %v4767
        %v4810 = vunpack.c.l.b16 %v4768
        %v4811 = vunpack.c.l.b16 %v4769
        %v4812 = vunpack.c.l.b16 %v4770
        %v4813 = vunpack.c.l.b16 %v4771
        %v4814 = vunpack.c.l.b16 %v4772
        %v4815 = vunpack.c.l.b16 %v4773
        %v4816 = vunpack.c.l.b16 %v4774
        %v4817 = vunpack.c.l.b16 %v4775
        %v4818 = vunpack.c.l.b16 %v4776
        %v4819 = vunpack.c.l.b16 %v4777
        %v4820 = vunpack.c.l.b16 %v4778
        %v4821 = vpack.c.b16 %v4806, %v4805
        %v4822 = vpack.c.b16 %v4808, %v4807
        %v4823 = vpack.c.b16 %v4810, %v4809
        %v4824 = vpack.c.b16 %v4812, %v4811
        %v4825 = vpack.c.b16 %v4814, %v4813
        %v4826 = vpack.c.b16 %v4816, %v4815
        %v4827 = vpack.c.b16 %v4818, %v4817
        %v4828 = vpack.c.b16 %v4820, %v4819
        %4837 = vmatprep.subr.bf16.mxu0 0
        %4838 = vmatpush1.bf16.msra.mxu0 %v4828
        %4839 = vmatprep.subr.bf16.mxu0 0
        %4840 = vmatpush1.bf16.msra.mxu0 %v4827
        %4841 = vmatprep.subr.bf16.mxu0 0
        %4842 = vmatpush1.bf16.msra.mxu0 %v4826
        %4843 = vmatprep.subr.bf16.mxu0 0
        %4844 = vmatpush1.bf16.msra.mxu0 %v4825
        %4845 = vmatprep.subr.bf16.mxu0 0
        %4846 = vmatpush1.bf16.msra.mxu0 %v4824
        %4847 = vmatprep.subr.bf16.mxu0 0
        %4848 = vmatpush1.bf16.msra.mxu0 %v4823
        %4849 = vmatprep.subr.bf16.mxu0 0
        %4850 = vmatpush1.bf16.msra.mxu0 %v4822
        %4851 = vmatprep.subr.bf16.mxu0 0
        %4852 = vmatpush1.bf16.msra.mxu0 %v4821
        %4853 = vmatprep.subr.bf16.mxu0 0
        %4854 = vmatpush2.bf16.msra.mxu0 0
        %4855 = vmatprep.subr.bf16.mxu0 0
        %4856 = vmatpush2.bf16.msra.mxu0 0
        %4857 = vmatprep.subr.bf16.mxu0 0
        %4858 = vmatpush2.bf16.msra.mxu0 0
        %4859 = vmatprep.subr.bf16.mxu0 0
        %4860 = vmatpush2.bf16.msra.mxu0 0
        %4861 = vmatprep.subr.bf16.mxu0 0
        %4862 = vmatpush2.bf16.msra.mxu0 0
        %4863 = vmatprep.subr.bf16.mxu0 0
        %4864 = vmatpush2.bf16.msra.mxu0 0
        %4865 = vmatprep.subr.bf16.mxu0 0
        %4866 = vmatpush2.bf16.msra.mxu0 0
        %4867 = vmatprep.subr.bf16.mxu0 0
        %4868 = vmatpush2.bf16.msra.mxu0 0
        %4869 = vmatprep.mubr.bf16.mxu0 0
        %4870 = vmatmul.mubr.bf16.gmra.mxu0 %v4787
        %v4871 = vpop.f32.mrf.mxu0
        %v4872 = vadd.f32 0.0, %v4871
        %v4873 = vpop.f32.mrf.mxu0
        %v4874 = vpop.f32.mrf.mxu0
        %v4875 = vpop.f32.mrf.mxu0
        %4876 = vdwg.mxu0
        %v4877 = vadd.f32 %v4756, %v4872
        %v4878 = vld [vmem:[%s16] sm:$0x1]
        %v4880 = vlaneseq
        %v4881 = vshrl.u32 %v4880, 7
        %v4882 = vsub.s32 0, %v4881
        %v4883 = vrot.slane %v4878, %v4882
        %v4885 = vadd.f32 %v4877, %v4883
        %vm4886 = vcmp.ge.f32.partialorder %v4885, 0.0
        %v4887 = vmul.f32 %v4885, 0.1
        %v4888 = vsel %vm4886, %v4885, %v4887
        %v4889 = vpack.c.bf16 %v4888, %v4888
        %v4890 = vld [vmem:[#allocation21] sm:$0xf]
        %v4891 = vld [vmem:[#allocation21 + $0x4] sm:$0xf]
        %v4892 = vld [vmem:[#allocation21 + $0x8] sm:$0xf]
        %v4893 = vld [vmem:[#allocation21 + $0xc] sm:$0xf]
        %v4894 = vld [vmem:[#allocation21 + $0x10] sm:$0xf]
        %v4895 = vld [vmem:[#allocation21 + $0x14] sm:$0xf]
        %v4896 = vld [vmem:[#allocation21 + $0x18] sm:$0xf]
        %v4897 = vld [vmem:[#allocation21 + $0x1c] sm:$0xf]
        %v4898 = vld [vmem:[#allocation21 + $0x20] sm:$0xf]
        %v4899 = vld [vmem:[#allocation21 + $0x24] sm:$0xf]
        %v4900 = vld [vmem:[#allocation21 + $0x28] sm:$0xf]
        %v4901 = vld [vmem:[#allocation21 + $0x2c] sm:$0xf]
        %v4902 = vld [vmem:[#allocation21 + $0x30] sm:$0xf]
        %v4903 = vld [vmem:[#allocation21 + $0x34] sm:$0xf]
        %v4904 = vld [vmem:[#allocation21 + $0x38] sm:$0xf]
        %v4905 = vld [vmem:[#allocation21 + $0x3c] sm:$0xf]
        %s4906 = scalar_lea.vmem [#allocation21], 64
        %v4907 = vld [vmem:[%s4906] sm:$0xf]
        %v4908 = vld [vmem:[%s4906 + $0x4] sm:$0xf]
        %v4909 = vld [vmem:[%s4906 + $0x8] sm:$0xf]
        %v4910 = vld [vmem:[%s4906 + $0xc] sm:$0xf]
        %v4911 = vld [vmem:[%s4906 + $0x10] sm:$0xf]
        %v4912 = vld [vmem:[%s4906 + $0x14] sm:$0xf]
        %v4913 = vld [vmem:[%s4906 + $0x18] sm:$0xf]
        %v4914 = vld [vmem:[%s4906 + $0x1c] sm:$0xf]
        %v4915 = vld [vmem:[%s4906 + $0x20] sm:$0xf]
        %v4916 = vld [vmem:[%s4906 + $0x24] sm:$0xf]
        %v4917 = vld [vmem:[%s4906 + $0x28] sm:$0xf]
        %v4918 = vld [vmem:[%s4906 + $0x2c] sm:$0xf]
        %v4919 = vld [vmem:[%s4906 + $0x30] sm:$0xf]
        %v4920 = vld [vmem:[%s4906 + $0x34] sm:$0xf]
        %v4921 = vld [vmem:[%s4906 + $0x38] sm:$0xf]
        %v4922 = vld [vmem:[%s4906 + $0x3c] sm:$0xf]
        %v4924 = vshrl.u32 %v4889, 16
        %v4943 = vunpack.c.l.b16 %v4907
        %v4944 = vunpack.c.l.b16 %v4908
        %v4945 = vunpack.c.l.b16 %v4909
        %v4946 = vunpack.c.l.b16 %v4910
        %v4947 = vunpack.c.l.b16 %v4911
        %v4948 = vunpack.c.l.b16 %v4912
        %v4949 = vunpack.c.l.b16 %v4913
        %v4950 = vunpack.c.l.b16 %v4914
        %v4951 = vunpack.c.l.b16 %v4915
        %v4952 = vunpack.c.l.b16 %v4916
        %v4953 = vunpack.c.l.b16 %v4917
        %v4954 = vunpack.c.l.b16 %v4918
        %v4955 = vunpack.c.l.b16 %v4919
        %v4956 = vunpack.c.l.b16 %v4920
        %v4957 = vunpack.c.l.b16 %v4921
        %v4958 = vunpack.c.l.b16 %v4922
        %v4959 = vpack.c.b16 %v4944, %v4943
        %v4960 = vpack.c.b16 %v4946, %v4945
        %v4961 = vpack.c.b16 %v4948, %v4947
        %v4962 = vpack.c.b16 %v4950, %v4949
        %v4963 = vpack.c.b16 %v4952, %v4951
        %v4964 = vpack.c.b16 %v4954, %v4953
        %v4965 = vpack.c.b16 %v4956, %v4955
        %v4966 = vpack.c.b16 %v4958, %v4957
        %4975 = vmatprep.subr.bf16.mxu0 0
        %4976 = vmatpush1.bf16.msra.mxu0 %v4966
        %4977 = vmatprep.subr.bf16.mxu0 0
        %4978 = vmatpush1.bf16.msra.mxu0 %v4965
        %4979 = vmatprep.subr.bf16.mxu0 0
        %4980 = vmatpush1.bf16.msra.mxu0 %v4964
        %4981 = vmatprep.subr.bf16.mxu0 0
        %4982 = vmatpush1.bf16.msra.mxu0 %v4963
        %4983 = vmatprep.subr.bf16.mxu0 0
        %4984 = vmatpush1.bf16.msra.mxu0 %v4962
        %4985 = vmatprep.subr.bf16.mxu0 0
        %4986 = vmatpush1.bf16.msra.mxu0 %v4961
        %4987 = vmatprep.subr.bf16.mxu0 0
        %4988 = vmatpush1.bf16.msra.mxu0 %v4960
        %4989 = vmatprep.subr.bf16.mxu0 0
        %4990 = vmatpush1.bf16.msra.mxu0 %v4959
        %4991 = vmatprep.subr.bf16.mxu0 0
        %4992 = vmatpush2.bf16.msra.mxu0 0
        %4993 = vmatprep.subr.bf16.mxu0 0
        %4994 = vmatpush2.bf16.msra.mxu0 0
        %4995 = vmatprep.subr.bf16.mxu0 0
        %4996 = vmatpush2.bf16.msra.mxu0 0
        %4997 = vmatprep.subr.bf16.mxu0 0
        %4998 = vmatpush2.bf16.msra.mxu0 0
        %4999 = vmatprep.subr.bf16.mxu0 0
        %5000 = vmatpush2.bf16.msra.mxu0 0
        %5001 = vmatprep.subr.bf16.mxu0 0
        %5002 = vmatpush2.bf16.msra.mxu0 0
        %5003 = vmatprep.subr.bf16.mxu0 0
        %5004 = vmatpush2.bf16.msra.mxu0 0
        %5005 = vmatprep.subr.bf16.mxu0 0
        %5006 = vmatpush2.bf16.msra.mxu0 0
        %5007 = vmatprep.mubr.bf16.mxu0 0
        %5008 = vmatmul.mubr.bf16.gmra.mxu0 %v4924
        %v5009 = vpop.f32.mrf.mxu0
        %v5010 = vadd.f32 0.0, %v5009
        %v5011 = vpop.f32.mrf.mxu0
        %v5012 = vpop.f32.mrf.mxu0
        %v5013 = vpop.f32.mrf.mxu0
        %5014 = vdwg.mxu0
        %v5031 = vunpack.c.l.b16 %v4890
        %v5032 = vunpack.c.l.b16 %v4891
        %v5033 = vunpack.c.l.b16 %v4892
        %v5034 = vunpack.c.l.b16 %v4893
        %v5035 = vunpack.c.l.b16 %v4894
        %v5036 = vunpack.c.l.b16 %v4895
        %v5037 = vunpack.c.l.b16 %v4896
        %v5038 = vunpack.c.l.b16 %v4897
        %v5039 = vunpack.c.l.b16 %v4898
        %v5040 = vunpack.c.l.b16 %v4899
        %v5041 = vunpack.c.l.b16 %v4900
        %v5042 = vunpack.c.l.b16 %v4901
        %v5043 = vunpack.c.l.b16 %v4902
        %v5044 = vunpack.c.l.b16 %v4903
        %v5045 = vunpack.c.l.b16 %v4904
        %v5046 = vunpack.c.l.b16 %v4905
        %v5047 = vpack.c.b16 %v5032, %v5031
        %v5048 = vpack.c.b16 %v5034, %v5033
        %v5049 = vpack.c.b16 %v5036, %v5035
        %v5050 = vpack.c.b16 %v5038, %v5037
        %v5051 = vpack.c.b16 %v5040, %v5039
        %v5052 = vpack.c.b16 %v5042, %v5041
        %v5053 = vpack.c.b16 %v5044, %v5043
        %v5054 = vpack.c.b16 %v5046, %v5045
        %5063 = vmatprep.subr.bf16.mxu0 0
        %5064 = vmatpush1.bf16.msra.mxu0 %v5054
        %5065 = vmatprep.subr.bf16.mxu0 0
        %5066 = vmatpush1.bf16.msra.mxu0 %v5053
        %5067 = vmatprep.subr.bf16.mxu0 0
        %5068 = vmatpush1.bf16.msra.mxu0 %v5052
        %5069 = vmatprep.subr.bf16.mxu0 0
        %5070 = vmatpush1.bf16.msra.mxu0 %v5051
        %5071 = vmatprep.subr.bf16.mxu0 0
        %5072 = vmatpush1.bf16.msra.mxu0 %v5050
        %5073 = vmatprep.subr.bf16.mxu0 0
        %5074 = vmatpush1.bf16.msra.mxu0 %v5049
        %5075 = vmatprep.subr.bf16.mxu0 0
        %5076 = vmatpush1.bf16.msra.mxu0 %v5048
        %5077 = vmatprep.subr.bf16.mxu0 0
        %5078 = vmatpush1.bf16.msra.mxu0 %v5047
        %5079 = vmatprep.subr.bf16.mxu0 0
        %5080 = vmatpush2.bf16.msra.mxu0 0
        %5081 = vmatprep.subr.bf16.mxu0 0
        %5082 = vmatpush2.bf16.msra.mxu0 0
        %5083 = vmatprep.subr.bf16.mxu0 0
        %5084 = vmatpush2.bf16.msra.mxu0 0
        %5085 = vmatprep.subr.bf16.mxu0 0
        %5086 = vmatpush2.bf16.msra.mxu0 0
        %5087 = vmatprep.subr.bf16.mxu0 0
        %5088 = vmatpush2.bf16.msra.mxu0 0
        %5089 = vmatprep.subr.bf16.mxu0 0
        %5090 = vmatpush2.bf16.msra.mxu0 0
        %5091 = vmatprep.subr.bf16.mxu0 0
        %5092 = vmatpush2.bf16.msra.mxu0 0
        %5093 = vmatprep.subr.bf16.mxu0 0
        %5094 = vmatpush2.bf16.msra.mxu0 0
        %5095 = vmatprep.mubr.bf16.mxu0 0
        %5096 = vmatmul.mubr.bf16.gmra.mxu0 %v4889
        %v5097 = vpop.f32.mrf.mxu0
        %v5098 = vadd.f32 %v5010, %v5097
        %v5099 = vpop.f32.mrf.mxu0
        %v5100 = vpop.f32.mrf.mxu0
        %v5101 = vpop.f32.mrf.mxu0
        %5102 = vdwg.mxu0
        %v5103 = vld [vmem:[%s18] sm:$0x1]
        %v5104 = vadd.f32 %v5098, %v5103
        %5105 = vst [vmem:[%s711] sm:$0x1] %v5104
        %s5106 = sand.u32 %s450, 1
        %s5107 = scalar_lea.sflag [#allocation11], %s5106
        %s5108 = sand.u32 %s450, 1
        %s5109 = scalar_lea.vmem [#allocation23], %s5108
        // Predicated region
        $region129: #{forward.1} parent=95 // pred_check
          %p5110 = pneg %p460
        $region130: #{forward.1} parent=95 // pred_check_branch
          %5112 = sbr.rel (%p5110) target = $region132
        $region131: #{forward.1} parent=95 // pred_region
          %s5114 = ssub.s32 16, 16
          %5115 = vsyncadd %s5107, %s5114
          %s5116 = smul.addr %s38, 16
          %s5117 = scalar_lea.hbm %s19, %s5116
          %s5119 = sshll.u32 %s5109, 4
          %s5120 = int_to_ptr.vmem [resolvable:$true] %s5119
          %5122 = dma.vmem_to_hbm [thread:$0]  %s5120, 16, %s5117, %s5107
        $region132: #{forward.1} parent=95 // pred_fallthru
          _
      $region96: #{forward.1} parent=5 // pred_fallthru
        _
      %p5123 = scmp.le.s32.totalorder 2, %s33
      // Predicated region
      $region133: #{forward.1} parent=5 // pred_check
        %p5124 = pneg %p5123
      $region134: #{forward.1} parent=5 // pred_check_branch
        %5126 = sbr.rel (%p5124) target = $region136
      $region135: #{forward.1} parent=5 // pred_region
        %s5127 = ssub.s32 %s33, 2
        // Predicated region
        $region137: #{forward.1} parent=135 // pred_check
          %p5128 = pneg %p466
        $region138: #{forward.1} parent=135 // pred_check_branch
          %5130 = sbr.rel (%p5128) target = $region140
        $region139: #{forward.1} parent=135 // pred_region
          %s5131 = sand.u32 %s451, 1
          %s5132 = scalar_lea.sflag [#allocation11], %s5131
          %s5133 = sand.u32 %s451, 1
          %s5134 = scalar_lea.vmem [#allocation23], %s5133
          %5135 = dma.done %s5132, 16
        $region140: #{forward.1} parent=135 // pred_fallthru
          _
      $region136: #{forward.1} parent=5 // pred_fallthru
        _
    $region6: #{forward.1} parent=1 // loop_footer
      %s37 = sadd.s32 1, %s33
    $region7: #{forward.1} parent=1 // loop_footer_branch
      %32 = sbr.rel target = $region3
    $region8: #{forward.1} parent=1 // loop_exit
      _
    %5136 = vsyncpa [#allocation10], 1
    %s5137 = scalar_lea.sflag [#allocation10], 1
    %5138 = vsyncpa %s5137, 1
    %5139 = vsyncpa [#allocation13], 1
    %5140 = vsyncpa [#allocation16], 1
    %5141 = vsyncpa [#allocation19], 1
    %5142 = vsyncpa [#allocation22], 1
    %5143 = vsyncpa [#allocation11], 1
    %s5144 = scalar_lea.sflag [#allocation11], 1
    %5145 = vsyncpa %s5144, 1

</llo_original>
